<compile_context>
chip_gen: v6e
topology: v6e:2x2x1
jax: 0.10.0
libtpu: 0.0.40
codegen_flags: <defaults>
</compile_context>

<pallas_src>
import math

import jax
import jax.numpy as jnp
from jax.experimental import pallas as pl
from jax.experimental.pallas import tpu as pltpu


def fourier_features_kernel(x_ref, wt_ref, o_ref):
    # x_ref: (tm, in_features)   wt_ref: (in_features, half)   o_ref: (tm, 2*half)
    half = wt_ref.shape[1]
    # MXU matmul with f32 accumulation; operands stay in their storage dtype.
    f = jnp.dot(x_ref[...], wt_ref[...], preferred_element_type=jnp.float32)
    f = f * jnp.float32(2.0 * math.pi)
    # Direct stores of the two halves — no concatenate, no extra VMEM copy.
    o_ref[:, :half] = jnp.cos(f).astype(o_ref.dtype)
    o_ref[:, half:] = jnp.sin(f).astype(o_ref.dtype)


def _pick_tm(n, in_features, out_features, itemsize, vmem_tile_budget=8 << 20):
    """Row tile: as large as the VMEM budget allows (double-buffered x + out
    tiles), sublane-aligned, but small enough that the grid keeps >= 2 steps
    when possible (v7x shards the parallel grid axis across its 2 TensorCores).
    The 8 MiB budget already includes double-buffering, so it fits the scoped
    VMEM default on every generation (16 MiB v5e / 32 MiB v6e,v7x)."""
    per_row = 2 * (in_features + out_features) * itemsize  # x + out, double-buffered
    tm = vmem_tile_budget // max(per_row, 1)
    tm = int(max(16, min(tm, 1024)))
    tm = (tm // 16) * 16                       # sublane-aligned for f32 and bf16
    if tm >= n:
        if n >= 32:
            tm = ((n // 2 + 15) // 16) * 16    # split into ~2 tiles for megacore
        else:
            tm = n                             # tiny problem: one full-extent tile
    return tm


def fourier_features(x, weight, *, tm=None):
    """x: [N, in_features], weight: [out_features//2, in_features] -> [N, out_features]."""
    n, in_features = x.shape
    half, in_features_w = weight.shape
    assert in_features == in_features_w
    out_features = 2 * half
    out_dtype = x.dtype

    if tm is None:
        tm = _pick_tm(n, in_features, out_features, jnp.dtype(out_dtype).itemsize)

    # Pre-transpose once: [in_features, half] is the MXU-native RHS layout
    # (lane-dense along `half`); removes the per-step transpose from the kernel.
    w_t = jnp.transpose(weight)

    # Pad rows to a multiple of tm; padded rows are computed then discarded.
    n_pad = pl.cdiv(n, tm) * tm
    x_in = jnp.pad(x, ((0, n_pad - n), (0, 0))) if n_pad != n else x

    cost = pl.CostEstimate(
        flops=2 * n_pad * in_features * half,
        transcendentals=n_pad * out_features,
        bytes_accessed=(n_pad * in_features + half * in_features) * x.dtype.itemsize
        + n_pad * out_features * jnp.dtype(out_dtype).itemsize,
    )

    out = pl.pallas_call(
        fourier_features_kernel,
        out_shape=jax.ShapeDtypeStruct((n_pad, out_features), out_dtype),
        grid_spec=pltpu.PrefetchScalarGridSpec(
            num_scalar_prefetch=0,
            grid=(n_pad // tm,),
            in_specs=[
                # tile over rows, full (small) feature dim
                pl.BlockSpec((tm, in_features), lambda i: (i, 0)),
                # weight is tiny; same block every step — stays resident in VMEM
                pl.BlockSpec((in_features, half), lambda i: (0, 0)),
            ],
            out_specs=pl.BlockSpec((tm, out_features), lambda i: (i, 0)),
        ),
        compiler_params=pltpu.CompilerParams(
            dimension_semantics=("parallel",),
        ),
        cost_estimate=cost,
    )(x_in, w_t)

    return out[:n] if n_pad != n else out


def fourier_features_ref(x, weight):
    f = 2.0 * math.pi * (x.astype(jnp.float32) @ weight.astype(jnp.float32).T)
    return jnp.concatenate([jnp.cos(f), jnp.sin(f)], axis=-1).astype(x.dtype)


if __name__ == "__main__":
    key = jax.random.PRNGKey(0)
    k_x, k_w, k_x2, k_w2 = jax.random.split(key, 4)

    # Primary case: half = 128 -> lane-dense, fully aligned unmasked stores.
    N, IN_FEATURES, OUT_FEATURES, STD = 256, 4, 256, 1.0
    x = jax.random.normal(k_x, (N, IN_FEATURES), dtype=jnp.float32)
    weight = jax.random.normal(k_w, (OUT_FEATURES // 2, IN_FEATURES), dtype=jnp.float32) * STD

    out = jax.block_until_ready(fourier_features(x, weight))
    ref = fourier_features_ref(x, weight)
    assert out.shape == (N, OUT_FEATURES), out.shape
    assert jnp.allclose(out, ref, atol=2e-5, rtol=2e-5), float(jnp.abs(out - ref).max())

    # Secondary case: ragged N + narrow output (exercises padding + masked-store path).
    N2, IN2, OUT2 = 100, 4, 64
    x2 = jax.random.normal(k_x2, (N2, IN2), dtype=jnp.float32)
    w2 = jax.random.normal(k_w2, (OUT2 // 2, IN2), dtype=jnp.float32)
    out2 = jax.block_until_ready(fourier_features(x2, w2))
    ref2 = fourier_features_ref(x2, w2)
    assert out2.shape == (N2, OUT2), out2.shape
    assert jnp.allclose(out2, ref2, atol=2e-5, rtol=2e-5), float(jnp.abs(out2 - ref2).max())

    print("KERNEL_OK")
</pallas_src>

<mosaic_0001>
module attributes {stable_mosaic.version = 11 : i64} {
  func.func @fourier_features_kernel(%arg0: i32, %arg1: memref<128x4xf32, #tpu.memory_space<vmem>>, %arg2: memref<4x128xf32, #tpu.memory_space<vmem>>, %arg3: memref<128x256xf32, #tpu.memory_space<vmem>>) attributes {dimension_semantics = [#tpu.dimension_semantics<parallel>], iteration_bounds = array<i64: 2>, scalar_prefetch = 0 : i64, scratch_operands = 0 : i64, tpu.core_type = #tpu.core_type<tc>, window_params = [{transform_indices = @transform_0, window_bounds = array<i64: 128, 4>}, {pipeline_mode = #tpu.pipeline_mode<synchronous>, transform_indices = @transform_1, window_bounds = array<i64: 4, 128>}, {transform_indices = @transform_2, window_bounds = array<i64: 128, 256>}]} {
    %c0 = arith.constant 0 : index
    %c0_0 = arith.constant 0 : index
    %0 = vector.load %arg1[%c0, %c0_0] : memref<128x4xf32, #tpu.memory_space<vmem>>, vector<128x4xf32>
    %c0_1 = arith.constant 0 : index
    %c0_2 = arith.constant 0 : index
    %1 = vector.load %arg2[%c0_1, %c0_2] : memref<4x128xf32, #tpu.memory_space<vmem>>, vector<4x128xf32>
    %cst = arith.constant dense<0.000000e+00> : vector<128x128xf32>
    %2 = tpu.matmul %0, %1, %cst {dimension_numbers = #tpu.dot_dimension_numbers<[1], [0], [0], [1], [0, 0, 1, 1], [], []>} : vector<128x4xf32>, vector<4x128xf32>, vector<128x128xf32> -> vector<128x128xf32>
    %cst_3 = arith.constant 6.28318548 : f32
    %3 = vector.broadcast %cst_3 : f32 to vector<128x128xf32>
    %4 = arith.mulf %2, %3 : vector<128x128xf32>
    %5 = math.cos %4 : vector<128x128xf32>
    %c0_4 = arith.constant 0 : index
    %c0_5 = arith.constant 0 : index
    %6 = vector.load %arg3[%c0_4, %c0_5] : memref<128x256xf32, #tpu.memory_space<vmem>>, vector<128x128xf32>
    tpu.vector_store %arg3[%c0_4, %c0_5], %5 {strides = array<i32>} : memref<128x256xf32, #tpu.memory_space<vmem>>, vector<128x128xf32>,
    %7 = math.sin %4 : vector<128x128xf32>
    %c0_6 = arith.constant 0 : index
    %c128 = arith.constant 128 : index
    %8 = vector.load %arg3[%c0_6, %c128] : memref<128x256xf32, #tpu.memory_space<vmem>>, vector<128x128xf32>
    tpu.vector_store %arg3[%c0_6, %c128], %7 {strides = array<i32>} : memref<128x256xf32, #tpu.memory_space<vmem>>, vector<128x128xf32>,
    return
  }
  func.func @transform_0(%arg0: i32) -> (i32, i32) {
    %c0_i32 = arith.constant 0 : i32
    %c0_i32_0 = arith.constant 0 : i32
    return %arg0, %c0_i32 : i32, i32
  }
  func.func @transform_1(%arg0: i32) -> (i32, i32) {
    %c0_i32 = arith.constant 0 : i32
    %c0_i32_0 = arith.constant 0 : i32
    %c0_i32_1 = arith.constant 0 : i32
    return %c0_i32, %c0_i32_0 : i32, i32
  }
  func.func @transform_2(%arg0: i32) -> (i32, i32) {
    %c0_i32 = arith.constant 0 : i32
    %c0_i32_0 = arith.constant 0 : i32
    return %arg0, %c0_i32 : i32, i32
  }
}

</mosaic_0001>

<llo_original>
// kernel: tpu_custom_call.1
$region0: #{tpu_custom_call.1}
  #allocation0 [shape = 'u32[]', space=smem, size = 0x4, offset = 0x4, fixed_abs, tag = 'smem constant byte address 0x4 - core index']
  #allocation1 [shape = 'u32[144,128]{1,0:T(1,128)}', space=vmem, size = 0x12000, scoped, tag = 'internal scratch']
  %s0 = inlined_call_operand.vmem [shape: f32[256,4], index: 0, kind: input, shape index: {}]
  %s1 = inlined_call_operand.vmem [shape: f32[4,128], index: 1, kind: input, shape index: {}]
  %s2 = inlined_call_operand.hbm [shape: f32[256,256], index: 2, kind: output, shape index: {}]
  %s3 = sld [smem:[#allocation0]]
  $region41: #{tpu_custom_call.1} parent=0
    _
  %s5 = ssub.s32 1, %s3
  %s6 = scalar_select 0, %s5, %s3
  $region1: #{tpu_custom_call.1} parent=0
    #allocation2 [shape = 'u8[262144]{0}', space=vmem, size = 0x40000, scoped, tag = 'output window, operand 0']
    #allocation3 [shape = 's32[2]{0}', space=sflag, size = 0x8, scoped, tag = 'scoped memory for tpu_custom_call.1']
    %7 = vsyncpa [#allocation3], 0
    %s8 = scalar_lea.sflag [#allocation3], 1
    %9 = vsyncpa %s8, 0
    loop: start=0, step=1, limit=4
    $region2: #{tpu_custom_call.1} parent=1 // loop_pre_header
      _
    $region3: #{tpu_custom_call.1} parent=1 // loop_header
      %s11 = sphi 0, %s15
      %p12 = scmp.ge.s32.totalorder %s11, 4
      %s21 = sphi 0, %s23
      %s24 = sphi 0, %s21
      %s25 = sphi 0, %s24
      %s41 = sphi 0, %s25
      %s45 = sphi 0, %s45
      %s47 = sphi 0, %s45
      %s48 = sphi 0, %s47
      %s62 = sphi 0, %s48
      %s68 = sphi 0, %s70
      %s71 = sphi 0, %s68
      %s72 = sphi 0, %s71
      %s88 = sphi 0, %s72
    $region4: #{tpu_custom_call.1} parent=1 // loop_header_branch
      %14 = sbr.rel (%p12) target = $region8
    $region5: #{tpu_custom_call.1} parent=1 // loop_body
      %s16 = ssub.s32 %s11, 1
      %s17 = ssub.s32 %s11, 2
      %s18 = sadd.s32 %s11, 1
      %s19 = ssub.s32 %s11, %s18
      %p20 = scmp.eq.s32.totalorder %s19, 0
      %s22 = sadd.s32 %s21, 1
      %s23 = scalar_select %p20, %s21, %s22
      %p26 = pneg %p20
      %p27 = scmp.eq.s32.totalorder %s11, 1
      %p28 = por %p26, %p27
      %p29 = scmp.ne.s32.totalorder %s21, %s24
      %p30 = scmp.eq.s32.totalorder %s11, 0
      %p31 = por %p29, %p30
      %p32 = scmp.ne.s32.totalorder %s21, %s24
      %p33 = scmp.eq.s32.totalorder %s16, 1
      %p34 = por %p32, %p33
      %p35 = scmp.ne.s32.totalorder %s24, %s25
      %p36 = scmp.eq.s32.totalorder %s16, 0
      %p37 = por %p35, %p36
      %p38 = scmp.ne.s32.totalorder %s24, %s25
      %p39 = scmp.eq.s32.totalorder %s17, 1
      %p40 = por %p38, %p39
      %p42 = scmp.ne.s32.totalorder %s25, %s41
      %p43 = scmp.eq.s32.totalorder %s17, 0
      %p44 = por %p42, %p43
      %s46 = sadd.s32 %s45, 1
      %p49 = scmp.eq.s32.totalorder %s11, 1
      %p50 = scmp.ne.s32.totalorder %s45, %s47
      %p51 = scmp.eq.s32.totalorder %s11, 0
      %p52 = por %p50, %p51
      %p53 = scmp.ne.s32.totalorder %s45, %s47
      %p54 = scmp.eq.s32.totalorder %s16, 1
      %p55 = por %p53, %p54
      %p56 = scmp.ne.s32.totalorder %s47, %s48
      %p57 = scmp.eq.s32.totalorder %s16, 0
      %p58 = por %p56, %p57
      %p59 = scmp.ne.s32.totalorder %s47, %s48
      %p60 = scmp.eq.s32.totalorder %s17, 1
      %p61 = por %p59, %p60
      %p63 = scmp.ne.s32.totalorder %s48, %s62
      %p64 = scmp.eq.s32.totalorder %s17, 0
      %p65 = por %p63, %p64
      %s66 = ssub.s32 %s11, %s18
      %p67 = scmp.eq.s32.totalorder %s66, 0
      %s69 = sadd.s32 %s68, 1
      %s70 = scalar_select %p67, %s68, %s69
      %p73 = pneg %p67
      %p74 = scmp.eq.s32.totalorder %s11, 1
      %p75 = por %p73, %p74
      %p76 = scmp.ne.s32.totalorder %s68, %s71
      %p77 = scmp.eq.s32.totalorder %s11, 0
      %p78 = por %p76, %p77
      %p79 = scmp.ne.s32.totalorder %s68, %s71
      %p80 = scmp.eq.s32.totalorder %s16, 1
      %p81 = por %p79, %p80
      %p82 = scmp.ne.s32.totalorder %s71, %s72
      %p83 = scmp.eq.s32.totalorder %s16, 0
      %p84 = por %p82, %p83
      %p85 = scmp.ne.s32.totalorder %s71, %s72
      %p86 = scmp.eq.s32.totalorder %s17, 1
      %p87 = por %p85, %p86
      %p89 = scmp.ne.s32.totalorder %s72, %s88
      %p90 = scmp.eq.s32.totalorder %s17, 0
      %p91 = por %p89, %p90
      %p92 = scmp.le.s32.totalorder 1, %s11
      %p93 = scmp.lt.s32.totalorder %s11, 3
      %p94 = pnand %p92, %p93
      %p95 = pneg %p94
      // Predicated region
      $region9: #{tpu_custom_call.1} parent=5 // pred_check
        _
      $region10: #{tpu_custom_call.1} parent=5 // pred_check_branch
        %97 = sbr.rel (%p94) target = $region12
      $region11: #{tpu_custom_call.1} parent=5 // pred_region
        %s98 = ssub.s32 %s11, 1
        // Predicated region
        $region13: #{tpu_custom_call.1} parent=11 // pred_check
          %p99 = pneg %p58
        $region14: #{tpu_custom_call.1} parent=11 // pred_check_branch
          %101 = sbr.rel (%p99) target = $region16
        $region15: #{tpu_custom_call.1} parent=11 // pred_region
          _
        $region16: #{tpu_custom_call.1} parent=11 // pred_fallthru
          _
      $region12: #{tpu_custom_call.1} parent=5 // pred_fallthru
        _
      %p102 = scmp.lt.s32.totalorder %s11, 2
      // Predicated region
      $region17: #{tpu_custom_call.1} parent=5 // pred_check
        %p103 = pneg %p102
      $region18: #{tpu_custom_call.1} parent=5 // pred_check_branch
        %105 = sbr.rel (%p103) target = $region20
      $region19: #{tpu_custom_call.1} parent=5 // pred_region
        // Predicated region
        $region21: #{tpu_custom_call.1} parent=19 // pred_check
          %p106 = pneg %p31
        $region22: #{tpu_custom_call.1} parent=19 // pred_check_branch
          %108 = sbr.rel (%p106) target = $region24
        $region23: #{tpu_custom_call.1} parent=19 // pred_region
          %s109 = smul.u32 16, %s11
          %p110 = scmp.lt.s32.totalorder %s109, 31
          %s111 = scalar_select %p110, %s109, 31
          %s112 = smul.addr %s111, 8
          %s113 = scalar_lea.vmem %s0, %s112
          %s114 = smul.u32 16, %s11
        $region24: #{tpu_custom_call.1} parent=19 // pred_fallthru
          _
      $region20: #{tpu_custom_call.1} parent=5 // pred_fallthru
        _
      %p115 = scmp.le.s32.totalorder 1, %s11
      %p116 = scmp.lt.s32.totalorder %s11, 3
      %p117 = pnand %p115, %p116
      %p118 = pneg %p117
      // Predicated region
      $region25: #{tpu_custom_call.1} parent=5 // pred_check
        _
      $region26: #{tpu_custom_call.1} parent=5 // pred_check_branch
        %120 = sbr.rel (%p117) target = $region28
      $region27: #{tpu_custom_call.1} parent=5 // pred_region
        %s121 = ssub.s32 %s11, 1
        %s122 = smul.u32 16, %s16
        %p123 = scmp.lt.s32.totalorder %s122, 31
        %s124 = scalar_select %p123, %s122, 31
        %s125 = smul.addr %s124, 8
        %s126 = scalar_lea.vmem %s0, %s125
        %p127 = pneg %p37
        %p128 = pneg %p34
        %p129 = pneg %p58
        %p130 = pneg %p55
        %p131 = pneg %p84
        %p132 = pneg %p81
        %s133 = sand.u32 %s71, 1
        %s134 = scalar_lea.sflag [#allocation3], %s133
        %s135 = sand.u32 %s71, 1
        %s136 = smul.addr %s135, 256
        %s137 = scalar_lea.vmem [#allocation2], %s136
        %s138 = smul.u32 16, %s16
        %p139 = scmp.lt.s32.totalorder %s138, 31
        %s140 = scalar_select %p139, %s138, 31
        %s141 = smul.addr %s140, 8
        %s142 = scalar_lea.vmem %s0, %s141
        %s143 = smul.u32 16, %s16
        %s144 = smul.u32 16, %s16
        %v145 = vld [vmem:[%s142] sm:$0xff]
        %v146 = vld [vmem:[%s142 + $0x8] sm:$0xff]
        %v147 = vld [vmem:[%s142 + $0x10] sm:$0xff]
        %v148 = vld [vmem:[%s142 + $0x18] sm:$0xff]
        %v149 = vld [vmem:[%s142 + $0x20] sm:$0xff]
        %v150 = vld [vmem:[%s142 + $0x28] sm:$0xff]
        %v151 = vld [vmem:[%s142 + $0x30] sm:$0xff]
        %v152 = vld [vmem:[%s142 + $0x38] sm:$0xff]
        %v153 = vld [vmem:[%s142 + $0x40] sm:$0xff]
        %v154 = vld [vmem:[%s142 + $0x48] sm:$0xff]
        %v155 = vld [vmem:[%s142 + $0x50] sm:$0xff]
        %v156 = vld [vmem:[%s142 + $0x58] sm:$0xff]
        %v157 = vld [vmem:[%s142 + $0x60] sm:$0xff]
        %v158 = vld [vmem:[%s142 + $0x68] sm:$0xff]
        %v159 = vld [vmem:[%s142 + $0x70] sm:$0xff]
        %v160 = vld [vmem:[%s142 + $0x78] sm:$0xff]
        %v161 = vld [vmem:[%s1] sm:$0xf]
        %vm162 = vcmask 31744
        %v164 = vsel %vm162, %v145, 0
        %v167 = vsel %vm162, %v146, 0
        %v170 = vsel %vm162, %v147, 0
        %v173 = vsel %vm162, %v148, 0
        %v176 = vsel %vm162, %v149, 0
        %v179 = vsel %vm162, %v150, 0
        %v182 = vsel %vm162, %v151, 0
        %v185 = vsel %vm162, %v152, 0
        %v188 = vsel %vm162, %v153, 0
        %v191 = vsel %vm162, %v154, 0
        %v194 = vsel %vm162, %v155, 0
        %v197 = vsel %vm162, %v156, 0
        %v200 = vsel %vm162, %v157, 0
        %v203 = vsel %vm162, %v158, 0
        %v206 = vsel %vm162, %v159, 0
        %v209 = vsel %vm162, %v160, 0
        %vm211 = vcmask 1043456
        %v213 = vsel %vm211, %v161, 0
        %215 = vmatprep.subr.mxu0 0.0
        %216 = vmatpush1.msra.mxu0 0.0
        %217 = vmatprep.subr.mxu0 0.0
        %218 = vmatpush1.msra.mxu0 0.0
        %219 = vmatprep.subr.mxu0 0.0
        %220 = vmatpush1.msra.mxu0 0.0
        %221 = vmatprep.subr.mxu0 0.0
        %222 = vmatpush1.msra.mxu0 0.0
        %223 = vmatprep.subr.mxu0 0.0
        %224 = vmatpush1.msra.mxu0 0.0
        %225 = vmatprep.subr.mxu0 0.0
        %226 = vmatpush1.msra.mxu0 0.0
        %227 = vmatprep.subr.mxu0 0.0
        %228 = vmatpush1.msra.mxu0 0.0
        %229 = vmatprep.subr.mxu0 0.0
        %230 = vmatpush1.msra.mxu0 0.0
        %231 = vmatprep.subr.mxu0 0.0
        %232 = vmatpush1.msra.mxu0 0.0
        %233 = vmatprep.subr.mxu0 0.0
        %234 = vmatpush1.msra.mxu0 0.0
        %235 = vmatprep.subr.mxu0 0.0
        %236 = vmatpush1.msra.mxu0 0.0
        %237 = vmatprep.subr.mxu0 0.0
        %238 = vmatpush1.msra.mxu0 0.0
        %239 = vmatprep.subr.mxu0 0.0
        %240 = vmatpush1.msra.mxu0 0.0
        %241 = vmatprep.subr.mxu0 0.0
        %242 = vmatpush1.msra.mxu0 0.0
        %243 = vmatprep.subr.mxu0 0.0
        %244 = vmatpush1.msra.mxu0 0.0
        %245 = vmatprep.subr.mxu0 0.0
        %246 = vmatpush1.msra.mxu0 %v213
        %247 = vmatprep.subr.mxu0 0.0
        %248 = vmatpush2.msra.mxu0 0.0
        %249 = vmatprep.subr.mxu0 0.0
        %250 = vmatpush2.msra.mxu0 0.0
        %251 = vmatprep.subr.mxu0 0.0
        %252 = vmatpush2.msra.mxu0 0.0
        %253 = vmatprep.subr.mxu0 0.0
        %254 = vmatpush2.msra.mxu0 0.0
        %255 = vmatprep.subr.mxu0 0.0
        %256 = vmatpush2.msra.mxu0 0.0
        %257 = vmatprep.subr.mxu0 0.0
        %258 = vmatpush2.msra.mxu0 0.0
        %259 = vmatprep.subr.mxu0 0.0
        %260 = vmatpush2.msra.mxu0 0.0
        %261 = vmatprep.subr.mxu0 0.0
        %262 = vmatpush2.msra.mxu0 0.0
        %263 = vmatprep.subr.mxu0 0.0
        %264 = vmatpush2.msra.mxu0 0.0
        %265 = vmatprep.subr.mxu0 0.0
        %266 = vmatpush2.msra.mxu0 0.0
        %267 = vmatprep.subr.mxu0 0.0
        %268 = vmatpush2.msra.mxu0 0.0
        %269 = vmatprep.subr.mxu0 0.0
        %270 = vmatpush2.msra.mxu0 0.0
        %271 = vmatprep.subr.mxu0 0.0
        %272 = vmatpush2.msra.mxu0 0.0
        %273 = vmatprep.subr.mxu0 0.0
        %274 = vmatpush2.msra.mxu0 0.0
        %275 = vmatprep.subr.mxu0 0.0
        %276 = vmatpush2.msra.mxu0 0.0
        %277 = vmatprep.subr.mxu0 0.0
        %278 = vmatpush2.msra.mxu0 0.0
        %279 = vmatprep.mubr.f32.mxu0 0.0
        %280 = vmatmul.mubr.f32.gmra.mxu0 %v164
        %v281 = vpop.f32.mrf.mxu0
        %v282 = vadd.f32 0.0, %v281
        %v283 = vpop.f32.mrf.mxu0
        %284 = vmatprep.mubr.f32.mxu0 0.0
        %285 = vmatmul.mubr.f32.gmra.mxu0 %v167
        %v286 = vpop.f32.mrf.mxu0
        %v287 = vadd.f32 0.0, %v286
        %v288 = vpop.f32.mrf.mxu0
        %289 = vmatprep.mubr.f32.mxu0 0.0
        %290 = vmatmul.mubr.f32.gmra.mxu0 %v170
        %v291 = vpop.f32.mrf.mxu0
        %v292 = vadd.f32 0.0, %v291
        %v293 = vpop.f32.mrf.mxu0
        %294 = vmatprep.mubr.f32.mxu0 0.0
        %295 = vmatmul.mubr.f32.gmra.mxu0 %v173
        %v296 = vpop.f32.mrf.mxu0
        %v297 = vadd.f32 0.0, %v296
        %v298 = vpop.f32.mrf.mxu0
        %299 = vmatprep.mubr.f32.mxu0 0.0
        %300 = vmatmul.mubr.f32.gmra.mxu0 %v176
        %v301 = vpop.f32.mrf.mxu0
        %v302 = vadd.f32 0.0, %v301
        %v303 = vpop.f32.mrf.mxu0
        %304 = vmatprep.mubr.f32.mxu0 0.0
        %305 = vmatmul.mubr.f32.gmra.mxu0 %v179
        %v306 = vpop.f32.mrf.mxu0
        %v307 = vadd.f32 0.0, %v306
        %v308 = vpop.f32.mrf.mxu0
        %309 = vmatprep.mubr.f32.mxu0 0.0
        %310 = vmatmul.mubr.f32.gmra.mxu0 %v182
        %v311 = vpop.f32.mrf.mxu0
        %v312 = vadd.f32 0.0, %v311
        %v313 = vpop.f32.mrf.mxu0
        %314 = vmatprep.mubr.f32.mxu0 0.0
        %315 = vmatmul.mubr.f32.gmra.mxu0 %v185
        %v316 = vpop.f32.mrf.mxu0
        %v317 = vadd.f32 0.0, %v316
        %v318 = vpop.f32.mrf.mxu0
        %319 = vmatprep.mubr.f32.mxu0 0.0
        %320 = vmatmul.mubr.f32.gmra.mxu0 %v188
        %v321 = vpop.f32.mrf.mxu0
        %v322 = vadd.f32 0.0, %v321
        %v323 = vpop.f32.mrf.mxu0
        %324 = vmatprep.mubr.f32.mxu0 0.0
        %325 = vmatmul.mubr.f32.gmra.mxu0 %v191
        %v326 = vpop.f32.mrf.mxu0
        %v327 = vadd.f32 0.0, %v326
        %v328 = vpop.f32.mrf.mxu0
        %329 = vmatprep.mubr.f32.mxu0 0.0
        %330 = vmatmul.mubr.f32.gmra.mxu0 %v194
        %v331 = vpop.f32.mrf.mxu0
        %v332 = vadd.f32 0.0, %v331
        %v333 = vpop.f32.mrf.mxu0
        %334 = vmatprep.mubr.f32.mxu0 0.0
        %335 = vmatmul.mubr.f32.gmra.mxu0 %v197
        %v336 = vpop.f32.mrf.mxu0
        %v337 = vadd.f32 0.0, %v336
        %v338 = vpop.f32.mrf.mxu0
        %339 = vmatprep.mubr.f32.mxu0 0.0
        %340 = vmatmul.mubr.f32.gmra.mxu0 %v200
        %v341 = vpop.f32.mrf.mxu0
        %v342 = vadd.f32 0.0, %v341
        %v343 = vpop.f32.mrf.mxu0
        %344 = vmatprep.mubr.f32.mxu0 0.0
        %345 = vmatmul.mubr.f32.gmra.mxu0 %v203
        %v346 = vpop.f32.mrf.mxu0
        %v347 = vadd.f32 0.0, %v346
        %v348 = vpop.f32.mrf.mxu0
        %349 = vmatprep.mubr.f32.mxu0 0.0
        %350 = vmatmul.mubr.f32.gmra.mxu0 %v206
        %v351 = vpop.f32.mrf.mxu0
        %v352 = vadd.f32 0.0, %v351
        %v353 = vpop.f32.mrf.mxu0
        %354 = vmatprep.mubr.f32.mxu0 0.0
        %355 = vmatmul.mubr.f32.gmra.mxu0 %v209
        %v356 = vpop.f32.mrf.mxu0
        %v357 = vadd.f32 0.0, %v356
        %v358 = vpop.f32.mrf.mxu0
        %359 = vdwg.mxu0
        %v360 = vmul.f32 %v282, 6.2831855
        %v361 = vmul.f32 %v287, 6.2831855
        %v362 = vmul.f32 %v292, 6.2831855
        %v363 = vmul.f32 %v297, 6.2831855
        %v364 = vmul.f32 %v302, 6.2831855
        %v365 = vmul.f32 %v307, 6.2831855
        %v366 = vmul.f32 %v312, 6.2831855
        %v367 = vmul.f32 %v317, 6.2831855
        %v368 = vmul.f32 %v322, 6.2831855
        %v369 = vmul.f32 %v327, 6.2831855
        %v370 = vmul.f32 %v332, 6.2831855
        %v371 = vmul.f32 %v337, 6.2831855
        %v372 = vmul.f32 %v342, 6.2831855
        %v373 = vmul.f32 %v347, 6.2831855
        %v374 = vmul.f32 %v352, 6.2831855
        %v375 = vmul.f32 %v357, 6.2831855
        %v376 = vand.u32 2147483647, %v360
        %vm377 = vcmp.le.f32.partialorder %v376, 0.7853982
        %vm378 = vcmp.lt.s32.totalorder %v360, 0
        %v379 = vand.u32 %v360, 2139095040
        %v380 = vshrl.u32 %v379, 23
        %v381 = vsub.s32 %v380, 127
        %v382 = vand.u32 2147483647, %v360
        %v383 = vand.u32 %v382, 8388607
        %v384 = vor.u32 %v383, 8388608
        %v385 = vsub.s32 0, %v384
        %v386 = vadd.s32 %v381, 1
        %vm387 = vcmp.gt.s32.totalorder %v386, 0
        %v388 = vsel %vm387, %v386, 0
        %v389 = vshrl.u32 %v388, 5
        %v390 = vand.u32 %v388, 31
        %v391 = vsub.s32 32, %v390
        %v392 = vshrl.u32 683565275, %v391
        %v393 = vshll.u32 683565275, %v390
        %v394 = vshrl.u32 2475754826, %v391
        %v395 = vor.u32 %v393, %v394
        %v396 = vshll.u32 2475754826, %v390
        %v397 = vshrl.u32 2131351028, %v391
        %v398 = vor.u32 %v396, %v397
        %v399 = vshll.u32 2131351028, %v390
        %v400 = vshrl.u32 2102212464, %v391
        %v401 = vor.u32 %v399, %v400
        %v402 = vshll.u32 2102212464, %v390
        %v403 = vshrl.u32 920167782, %v391
        %v404 = vor.u32 %v402, %v403
        %v405 = vshll.u32 920167782, %v390
        %v406 = vshrl.u32 1326507024, %v391
        %v407 = vor.u32 %v405, %v406
        %vm408 = vcmp.lt.s32.totalorder %v389, 1
        %vm409 = vcmp.lt.s32.totalorder %v389, 2
        %vm410 = vcmp.lt.s32.totalorder %v389, 3
        %vm411 = vcmp.lt.s32.totalorder %v389, 4
        %v412 = vsel %vm408, %v392, %v395
        %v413 = vsel %vm411, %v401, 2102212464
        %v414 = vsel %vm410, %v398, %v413
        %v415 = vsel %vm409, %v412, %v414
        %v416 = vsel %vm408, %v395, %v398
        %v417 = vsel %vm411, %v404, 920167782
        %v418 = vsel %vm410, %v401, %v417
        %v419 = vsel %vm409, %v416, %v418
        %v420 = vsel %vm408, %v398, %v401
        %v421 = vsel %vm411, %v407, 1326507024
        %v422 = vsel %vm410, %v404, %v421
        %v423 = vsel %vm409, %v420, %v422
        %v424 = vshll.u32 %v384, 8
        %v425 = vmul.u32.u64.compose %v424, %v423
        %v426 = vextract.low.u32 %v425
        %v427 = vextract.high.u32 %v425
        %v428 = vmul.u32.u64.compose %v424, %v419
        %v429 = vextract.low.u32 %v428
        %v430 = vextract.high.u32 %v428
        %v431 = vmul.u32 %v424, %v415
        %v432 = vadd.s32 %v427, %v429
        %vm433 = vc.u32 %v427, %v429
        %v434 = vadd.s32 %v430, 1
        %v435 = vsel %vm433, %v434, %v430
        %v436 = vadd.s32 %v431, %v435
        %v437 = vadd.s32 %v436, 536870912
        %v438 = vshrl.u32 %v437, 30
        %v439 = vshll.u32 %v438, 30
        %v440 = vsub.s32 %v436, %v439
        %vm441 = vcmp.lt.s32.totalorder %v440, 0
        %v442 = vsub.s32 0, %v440
        %v443 = vsel %vm441, %v442, %v440
        %v444 = vclz %v443
        %v445 = vsub.s32 %v444, 2
        %vm446 = vcmp.gt.s32.totalorder 0, %v445
        %v447 = vsel %vm446, 0, %v445
        %v448 = vsub.s32 32, %v447
        %v449 = vshll.u32 %v440, %v447
        %v450 = vshrl.u32 %v432, %v448
        %v451 = vor.u32 %v449, %v450
        %v452 = vsub.s32 4294967266, %v447
        %v453 = vadd.s32 %v452, 127
        %v454 = vshll.u32 %v453, 23
        %v455 = vor.u32 4788187, %v454
        %v456 = vand.u32 2147483647, %v455
        %v458 = vcvt.s32.f32 %v451
        %v459 = vmul.f32 %v458, %v456
        %v460 = vxor.u32 %v459, 2147483648
        %v461 = vsel %vm378, %v460, %v459
        %v462 = vsub.s32 4, %v438
        %v463 = vsel %vm378, %v462, %v438
        %v464 = vsel %vm377, %v360, %v461
        %v465 = vsel %vm377, 0, %v463
        %v466 = vcosq.f32.pop %v464
        %v467 = vsinq.f32.pop %v464
        %vm468 = vweird.f32 %v360
        %v469 = vand.u32 %v465, 3
        %vm470 = vcmp.lt.s32.totalorder %v469, 2
        %vm471 = vcmp.eq.s32.totalorder %v469, 0
        %v472 = vxor.u32 %v467, 2147483648
        %v473 = vsel %vm471, %v466, %v472
        %vm474 = vcmp.eq.s32.totalorder %v469, 2
        %v475 = vxor.u32 %v466, 2147483648
        %v476 = vsel %vm474, %v475, %v467
        %v477 = vsel %vm470, %v473, %v476
        %v478 = vsel %vm468, nan, %v477
        %v479 = vand.u32 2147483647, %v361
        %vm480 = vcmp.le.f32.partialorder %v479, 0.7853982
        %vm481 = vcmp.lt.s32.totalorder %v361, 0
        %v482 = vand.u32 %v361, 2139095040
        %v483 = vshrl.u32 %v482, 23
        %v484 = vsub.s32 %v483, 127
        %v485 = vand.u32 2147483647, %v361
        %v486 = vand.u32 %v485, 8388607
        %v487 = vor.u32 %v486, 8388608
        %v488 = vsub.s32 0, %v487
        %v489 = vadd.s32 %v484, 1
        %vm490 = vcmp.gt.s32.totalorder %v489, 0
        %v491 = vsel %vm490, %v489, 0
        %v492 = vshrl.u32 %v491, 5
        %v493 = vand.u32 %v491, 31
        %v494 = vsub.s32 32, %v493
        %v495 = vshrl.u32 683565275, %v494
        %v496 = vshll.u32 683565275, %v493
        %v497 = vshrl.u32 2475754826, %v494
        %v498 = vor.u32 %v496, %v497
        %v499 = vshll.u32 2475754826, %v493
        %v500 = vshrl.u32 2131351028, %v494
        %v501 = vor.u32 %v499, %v500
        %v502 = vshll.u32 2131351028, %v493
        %v503 = vshrl.u32 2102212464, %v494
        %v504 = vor.u32 %v502, %v503
        %v505 = vshll.u32 2102212464, %v493
        %v506 = vshrl.u32 920167782, %v494
        %v507 = vor.u32 %v505, %v506
        %v508 = vshll.u32 920167782, %v493
        %v509 = vshrl.u32 1326507024, %v494
        %v510 = vor.u32 %v508, %v509
        %vm511 = vcmp.lt.s32.totalorder %v492, 1
        %vm512 = vcmp.lt.s32.totalorder %v492, 2
        %vm513 = vcmp.lt.s32.totalorder %v492, 3
        %vm514 = vcmp.lt.s32.totalorder %v492, 4
        %v515 = vsel %vm511, %v495, %v498
        %v516 = vsel %vm514, %v504, 2102212464
        %v517 = vsel %vm513, %v501, %v516
        %v518 = vsel %vm512, %v515, %v517
        %v519 = vsel %vm511, %v498, %v501
        %v520 = vsel %vm514, %v507, 920167782
        %v521 = vsel %vm513, %v504, %v520
        %v522 = vsel %vm512, %v519, %v521
        %v523 = vsel %vm511, %v501, %v504
        %v524 = vsel %vm514, %v510, 1326507024
        %v525 = vsel %vm513, %v507, %v524
        %v526 = vsel %vm512, %v523, %v525
        %v527 = vshll.u32 %v487, 8
        %v528 = vmul.u32.u64.compose %v527, %v526
        %v529 = vextract.low.u32 %v528
        %v530 = vextract.high.u32 %v528
        %v531 = vmul.u32.u64.compose %v527, %v522
        %v532 = vextract.low.u32 %v531
        %v533 = vextract.high.u32 %v531
        %v534 = vmul.u32 %v527, %v518
        %v535 = vadd.s32 %v530, %v532
        %vm536 = vc.u32 %v530, %v532
        %v537 = vadd.s32 %v533, 1
        %v538 = vsel %vm536, %v537, %v533
        %v539 = vadd.s32 %v534, %v538
        %v540 = vadd.s32 %v539, 536870912
        %v541 = vshrl.u32 %v540, 30
        %v542 = vshll.u32 %v541, 30
        %v543 = vsub.s32 %v539, %v542
        %vm544 = vcmp.lt.s32.totalorder %v543, 0
        %v545 = vsub.s32 0, %v543
        %v546 = vsel %vm544, %v545, %v543
        %v547 = vclz %v546
        %v548 = vsub.s32 %v547, 2
        %vm549 = vcmp.gt.s32.totalorder 0, %v548
        %v550 = vsel %vm549, 0, %v548
        %v551 = vsub.s32 32, %v550
        %v552 = vshll.u32 %v543, %v550
        %v553 = vshrl.u32 %v535, %v551
        %v554 = vor.u32 %v552, %v553
        %v555 = vsub.s32 4294967266, %v550
        %v556 = vadd.s32 %v555, 127
        %v557 = vshll.u32 %v556, 23
        %v558 = vor.u32 4788187, %v557
        %v559 = vand.u32 2147483647, %v558
        %v561 = vcvt.s32.f32 %v554
        %v562 = vmul.f32 %v561, %v559
        %v563 = vxor.u32 %v562, 2147483648
        %v564 = vsel %vm481, %v563, %v562
        %v565 = vsub.s32 4, %v541
        %v566 = vsel %vm481, %v565, %v541
        %v567 = vsel %vm480, %v361, %v564
        %v568 = vsel %vm480, 0, %v566
        %v569 = vcosq.f32.pop %v567
        %v570 = vsinq.f32.pop %v567
        %vm571 = vweird.f32 %v361
        %v572 = vand.u32 %v568, 3
        %vm573 = vcmp.lt.s32.totalorder %v572, 2
        %vm574 = vcmp.eq.s32.totalorder %v572, 0
        %v575 = vxor.u32 %v570, 2147483648
        %v576 = vsel %vm574, %v569, %v575
        %vm577 = vcmp.eq.s32.totalorder %v572, 2
        %v578 = vxor.u32 %v569, 2147483648
        %v579 = vsel %vm577, %v578, %v570
        %v580 = vsel %vm573, %v576, %v579
        %v581 = vsel %vm571, nan, %v580
        %v582 = vand.u32 2147483647, %v362
        %vm583 = vcmp.le.f32.partialorder %v582, 0.7853982
        %vm584 = vcmp.lt.s32.totalorder %v362, 0
        %v585 = vand.u32 %v362, 2139095040
        %v586 = vshrl.u32 %v585, 23
        %v587 = vsub.s32 %v586, 127
        %v588 = vand.u32 2147483647, %v362
        %v589 = vand.u32 %v588, 8388607
        %v590 = vor.u32 %v589, 8388608
        %v591 = vsub.s32 0, %v590
        %v592 = vadd.s32 %v587, 1
        %vm593 = vcmp.gt.s32.totalorder %v592, 0
        %v594 = vsel %vm593, %v592, 0
        %v595 = vshrl.u32 %v594, 5
        %v596 = vand.u32 %v594, 31
        %v597 = vsub.s32 32, %v596
        %v598 = vshrl.u32 683565275, %v597
        %v599 = vshll.u32 683565275, %v596
        %v600 = vshrl.u32 2475754826, %v597
        %v601 = vor.u32 %v599, %v600
        %v602 = vshll.u32 2475754826, %v596
        %v603 = vshrl.u32 2131351028, %v597
        %v604 = vor.u32 %v602, %v603
        %v605 = vshll.u32 2131351028, %v596
        %v606 = vshrl.u32 2102212464, %v597
        %v607 = vor.u32 %v605, %v606
        %v608 = vshll.u32 2102212464, %v596
        %v609 = vshrl.u32 920167782, %v597
        %v610 = vor.u32 %v608, %v609
        %v611 = vshll.u32 920167782, %v596
        %v612 = vshrl.u32 1326507024, %v597
        %v613 = vor.u32 %v611, %v612
        %vm614 = vcmp.lt.s32.totalorder %v595, 1
        %vm615 = vcmp.lt.s32.totalorder %v595, 2
        %vm616 = vcmp.lt.s32.totalorder %v595, 3
        %vm617 = vcmp.lt.s32.totalorder %v595, 4
        %v618 = vsel %vm614, %v598, %v601
        %v619 = vsel %vm617, %v607, 2102212464
        %v620 = vsel %vm616, %v604, %v619
        %v621 = vsel %vm615, %v618, %v620
        %v622 = vsel %vm614, %v601, %v604
        %v623 = vsel %vm617, %v610, 920167782
        %v624 = vsel %vm616, %v607, %v623
        %v625 = vsel %vm615, %v622, %v624
        %v626 = vsel %vm614, %v604, %v607
        %v627 = vsel %vm617, %v613, 1326507024
        %v628 = vsel %vm616, %v610, %v627
        %v629 = vsel %vm615, %v626, %v628
        %v630 = vshll.u32 %v590, 8
        %v631 = vmul.u32.u64.compose %v630, %v629
        %v632 = vextract.low.u32 %v631
        %v633 = vextract.high.u32 %v631
        %v634 = vmul.u32.u64.compose %v630, %v625
        %v635 = vextract.low.u32 %v634
        %v636 = vextract.high.u32 %v634
        %v637 = vmul.u32 %v630, %v621
        %v638 = vadd.s32 %v633, %v635
        %vm639 = vc.u32 %v633, %v635
        %v640 = vadd.s32 %v636, 1
        %v641 = vsel %vm639, %v640, %v636
        %v642 = vadd.s32 %v637, %v641
        %v643 = vadd.s32 %v642, 536870912
        %v644 = vshrl.u32 %v643, 30
        %v645 = vshll.u32 %v644, 30
        %v646 = vsub.s32 %v642, %v645
        %vm647 = vcmp.lt.s32.totalorder %v646, 0
        %v648 = vsub.s32 0, %v646
        %v649 = vsel %vm647, %v648, %v646
        %v650 = vclz %v649
        %v651 = vsub.s32 %v650, 2
        %vm652 = vcmp.gt.s32.totalorder 0, %v651
        %v653 = vsel %vm652, 0, %v651
        %v654 = vsub.s32 32, %v653
        %v655 = vshll.u32 %v646, %v653
        %v656 = vshrl.u32 %v638, %v654
        %v657 = vor.u32 %v655, %v656
        %v658 = vsub.s32 4294967266, %v653
        %v659 = vadd.s32 %v658, 127
        %v660 = vshll.u32 %v659, 23
        %v661 = vor.u32 4788187, %v660
        %v662 = vand.u32 2147483647, %v661
        %v664 = vcvt.s32.f32 %v657
        %v665 = vmul.f32 %v664, %v662
        %v666 = vxor.u32 %v665, 2147483648
        %v667 = vsel %vm584, %v666, %v665
        %v668 = vsub.s32 4, %v644
        %v669 = vsel %vm584, %v668, %v644
        %v670 = vsel %vm583, %v362, %v667
        %v671 = vsel %vm583, 0, %v669
        %v672 = vcosq.f32.pop %v670
        %v673 = vsinq.f32.pop %v670
        %vm674 = vweird.f32 %v362
        %v675 = vand.u32 %v671, 3
        %vm676 = vcmp.lt.s32.totalorder %v675, 2
        %vm677 = vcmp.eq.s32.totalorder %v675, 0
        %v678 = vxor.u32 %v673, 2147483648
        %v679 = vsel %vm677, %v672, %v678
        %vm680 = vcmp.eq.s32.totalorder %v675, 2
        %v681 = vxor.u32 %v672, 2147483648
        %v682 = vsel %vm680, %v681, %v673
        %v683 = vsel %vm676, %v679, %v682
        %v684 = vsel %vm674, nan, %v683
        %v685 = vand.u32 2147483647, %v363
        %vm686 = vcmp.le.f32.partialorder %v685, 0.7853982
        %vm687 = vcmp.lt.s32.totalorder %v363, 0
        %v688 = vand.u32 %v363, 2139095040
        %v689 = vshrl.u32 %v688, 23
        %v690 = vsub.s32 %v689, 127
        %v691 = vand.u32 2147483647, %v363
        %v692 = vand.u32 %v691, 8388607
        %v693 = vor.u32 %v692, 8388608
        %v694 = vsub.s32 0, %v693
        %v695 = vadd.s32 %v690, 1
        %vm696 = vcmp.gt.s32.totalorder %v695, 0
        %v697 = vsel %vm696, %v695, 0
        %v698 = vshrl.u32 %v697, 5
        %v699 = vand.u32 %v697, 31
        %v700 = vsub.s32 32, %v699
        %v701 = vshrl.u32 683565275, %v700
        %v702 = vshll.u32 683565275, %v699
        %v703 = vshrl.u32 2475754826, %v700
        %v704 = vor.u32 %v702, %v703
        %v705 = vshll.u32 2475754826, %v699
        %v706 = vshrl.u32 2131351028, %v700
        %v707 = vor.u32 %v705, %v706
        %v708 = vshll.u32 2131351028, %v699
        %v709 = vshrl.u32 2102212464, %v700
        %v710 = vor.u32 %v708, %v709
        %v711 = vshll.u32 2102212464, %v699
        %v712 = vshrl.u32 920167782, %v700
        %v713 = vor.u32 %v711, %v712
        %v714 = vshll.u32 920167782, %v699
        %v715 = vshrl.u32 1326507024, %v700
        %v716 = vor.u32 %v714, %v715
        %vm717 = vcmp.lt.s32.totalorder %v698, 1
        %vm718 = vcmp.lt.s32.totalorder %v698, 2
        %vm719 = vcmp.lt.s32.totalorder %v698, 3
        %vm720 = vcmp.lt.s32.totalorder %v698, 4
        %v721 = vsel %vm717, %v701, %v704
        %v722 = vsel %vm720, %v710, 2102212464
        %v723 = vsel %vm719, %v707, %v722
        %v724 = vsel %vm718, %v721, %v723
        %v725 = vsel %vm717, %v704, %v707
        %v726 = vsel %vm720, %v713, 920167782
        %v727 = vsel %vm719, %v710, %v726
        %v728 = vsel %vm718, %v725, %v727
        %v729 = vsel %vm717, %v707, %v710
        %v730 = vsel %vm720, %v716, 1326507024
        %v731 = vsel %vm719, %v713, %v730
        %v732 = vsel %vm718, %v729, %v731
        %v733 = vshll.u32 %v693, 8
        %v734 = vmul.u32.u64.compose %v733, %v732
        %v735 = vextract.low.u32 %v734
        %v736 = vextract.high.u32 %v734
        %v737 = vmul.u32.u64.compose %v733, %v728
        %v738 = vextract.low.u32 %v737
        %v739 = vextract.high.u32 %v737
        %v740 = vmul.u32 %v733, %v724
        %v741 = vadd.s32 %v736, %v738
        %vm742 = vc.u32 %v736, %v738
        %v743 = vadd.s32 %v739, 1
        %v744 = vsel %vm742, %v743, %v739
        %v745 = vadd.s32 %v740, %v744
        %v746 = vadd.s32 %v745, 536870912
        %v747 = vshrl.u32 %v746, 30
        %v748 = vshll.u32 %v747, 30
        %v749 = vsub.s32 %v745, %v748
        %vm750 = vcmp.lt.s32.totalorder %v749, 0
        %v751 = vsub.s32 0, %v749
        %v752 = vsel %vm750, %v751, %v749
        %v753 = vclz %v752
        %v754 = vsub.s32 %v753, 2
        %vm755 = vcmp.gt.s32.totalorder 0, %v754
        %v756 = vsel %vm755, 0, %v754
        %v757 = vsub.s32 32, %v756
        %v758 = vshll.u32 %v749, %v756
        %v759 = vshrl.u32 %v741, %v757
        %v760 = vor.u32 %v758, %v759
        %v761 = vsub.s32 4294967266, %v756
        %v762 = vadd.s32 %v761, 127
        %v763 = vshll.u32 %v762, 23
        %v764 = vor.u32 4788187, %v763
        %v765 = vand.u32 2147483647, %v764
        %v767 = vcvt.s32.f32 %v760
        %v768 = vmul.f32 %v767, %v765
        %v769 = vxor.u32 %v768, 2147483648
        %v770 = vsel %vm687, %v769, %v768
        %v771 = vsub.s32 4, %v747
        %v772 = vsel %vm687, %v771, %v747
        %v773 = vsel %vm686, %v363, %v770
        %v774 = vsel %vm686, 0, %v772
        %v775 = vcosq.f32.pop %v773
        %v776 = vsinq.f32.pop %v773
        %vm777 = vweird.f32 %v363
        %v778 = vand.u32 %v774, 3
        %vm779 = vcmp.lt.s32.totalorder %v778, 2
        %vm780 = vcmp.eq.s32.totalorder %v778, 0
        %v781 = vxor.u32 %v776, 2147483648
        %v782 = vsel %vm780, %v775, %v781
        %vm783 = vcmp.eq.s32.totalorder %v778, 2
        %v784 = vxor.u32 %v775, 2147483648
        %v785 = vsel %vm783, %v784, %v776
        %v786 = vsel %vm779, %v782, %v785
        %v787 = vsel %vm777, nan, %v786
        %v788 = vand.u32 2147483647, %v364
        %vm789 = vcmp.le.f32.partialorder %v788, 0.7853982
        %vm790 = vcmp.lt.s32.totalorder %v364, 0
        %v791 = vand.u32 %v364, 2139095040
        %v792 = vshrl.u32 %v791, 23
        %v793 = vsub.s32 %v792, 127
        %v794 = vand.u32 2147483647, %v364
        %v795 = vand.u32 %v794, 8388607
        %v796 = vor.u32 %v795, 8388608
        %v797 = vsub.s32 0, %v796
        %v798 = vadd.s32 %v793, 1
        %vm799 = vcmp.gt.s32.totalorder %v798, 0
        %v800 = vsel %vm799, %v798, 0
        %v801 = vshrl.u32 %v800, 5
        %v802 = vand.u32 %v800, 31
        %v803 = vsub.s32 32, %v802
        %v804 = vshrl.u32 683565275, %v803
        %v805 = vshll.u32 683565275, %v802
        %v806 = vshrl.u32 2475754826, %v803
        %v807 = vor.u32 %v805, %v806
        %v808 = vshll.u32 2475754826, %v802
        %v809 = vshrl.u32 2131351028, %v803
        %v810 = vor.u32 %v808, %v809
        %v811 = vshll.u32 2131351028, %v802
        %v812 = vshrl.u32 2102212464, %v803
        %v813 = vor.u32 %v811, %v812
        %v814 = vshll.u32 2102212464, %v802
        %v815 = vshrl.u32 920167782, %v803
        %v816 = vor.u32 %v814, %v815
        %v817 = vshll.u32 920167782, %v802
        %v818 = vshrl.u32 1326507024, %v803
        %v819 = vor.u32 %v817, %v818
        %vm820 = vcmp.lt.s32.totalorder %v801, 1
        %vm821 = vcmp.lt.s32.totalorder %v801, 2
        %vm822 = vcmp.lt.s32.totalorder %v801, 3
        %vm823 = vcmp.lt.s32.totalorder %v801, 4
        %v824 = vsel %vm820, %v804, %v807
        %v825 = vsel %vm823, %v813, 2102212464
        %v826 = vsel %vm822, %v810, %v825
        %v827 = vsel %vm821, %v824, %v826
        %v828 = vsel %vm820, %v807, %v810
        %v829 = vsel %vm823, %v816, 920167782
        %v830 = vsel %vm822, %v813, %v829
        %v831 = vsel %vm821, %v828, %v830
        %v832 = vsel %vm820, %v810, %v813
        %v833 = vsel %vm823, %v819, 1326507024
        %v834 = vsel %vm822, %v816, %v833
        %v835 = vsel %vm821, %v832, %v834
        %v836 = vshll.u32 %v796, 8
        %v837 = vmul.u32.u64.compose %v836, %v835
        %v838 = vextract.low.u32 %v837
        %v839 = vextract.high.u32 %v837
        %v840 = vmul.u32.u64.compose %v836, %v831
        %v841 = vextract.low.u32 %v840
        %v842 = vextract.high.u32 %v840
        %v843 = vmul.u32 %v836, %v827
        %v844 = vadd.s32 %v839, %v841
        %vm845 = vc.u32 %v839, %v841
        %v846 = vadd.s32 %v842, 1
        %v847 = vsel %vm845, %v846, %v842
        %v848 = vadd.s32 %v843, %v847
        %v849 = vadd.s32 %v848, 536870912
        %v850 = vshrl.u32 %v849, 30
        %v851 = vshll.u32 %v850, 30
        %v852 = vsub.s32 %v848, %v851
        %vm853 = vcmp.lt.s32.totalorder %v852, 0
        %v854 = vsub.s32 0, %v852
        %v855 = vsel %vm853, %v854, %v852
        %v856 = vclz %v855
        %v857 = vsub.s32 %v856, 2
        %vm858 = vcmp.gt.s32.totalorder 0, %v857
        %v859 = vsel %vm858, 0, %v857
        %v860 = vsub.s32 32, %v859
        %v861 = vshll.u32 %v852, %v859
        %v862 = vshrl.u32 %v844, %v860
        %v863 = vor.u32 %v861, %v862
        %v864 = vsub.s32 4294967266, %v859
        %v865 = vadd.s32 %v864, 127
        %v866 = vshll.u32 %v865, 23
        %v867 = vor.u32 4788187, %v866
        %v868 = vand.u32 2147483647, %v867
        %v870 = vcvt.s32.f32 %v863
        %v871 = vmul.f32 %v870, %v868
        %v872 = vxor.u32 %v871, 2147483648
        %v873 = vsel %vm790, %v872, %v871
        %v874 = vsub.s32 4, %v850
        %v875 = vsel %vm790, %v874, %v850
        %v876 = vsel %vm789, %v364, %v873
        %v877 = vsel %vm789, 0, %v875
        %v878 = vcosq.f32.pop %v876
        %v879 = vsinq.f32.pop %v876
        %vm880 = vweird.f32 %v364
        %v881 = vand.u32 %v877, 3
        %vm882 = vcmp.lt.s32.totalorder %v881, 2
        %vm883 = vcmp.eq.s32.totalorder %v881, 0
        %v884 = vxor.u32 %v879, 2147483648
        %v885 = vsel %vm883, %v878, %v884
        %vm886 = vcmp.eq.s32.totalorder %v881, 2
        %v887 = vxor.u32 %v878, 2147483648
        %v888 = vsel %vm886, %v887, %v879
        %v889 = vsel %vm882, %v885, %v888
        %v890 = vsel %vm880, nan, %v889
        %v891 = vand.u32 2147483647, %v365
        %vm892 = vcmp.le.f32.partialorder %v891, 0.7853982
        %vm893 = vcmp.lt.s32.totalorder %v365, 0
        %v894 = vand.u32 %v365, 2139095040
        %v895 = vshrl.u32 %v894, 23
        %v896 = vsub.s32 %v895, 127
        %v897 = vand.u32 2147483647, %v365
        %v898 = vand.u32 %v897, 8388607
        %v899 = vor.u32 %v898, 8388608
        %v900 = vsub.s32 0, %v899
        %v901 = vadd.s32 %v896, 1
        %vm902 = vcmp.gt.s32.totalorder %v901, 0
        %v903 = vsel %vm902, %v901, 0
        %v904 = vshrl.u32 %v903, 5
        %v905 = vand.u32 %v903, 31
        %v906 = vsub.s32 32, %v905
        %v907 = vshrl.u32 683565275, %v906
        %v908 = vshll.u32 683565275, %v905
        %v909 = vshrl.u32 2475754826, %v906
        %v910 = vor.u32 %v908, %v909
        %v911 = vshll.u32 2475754826, %v905
        %v912 = vshrl.u32 2131351028, %v906
        %v913 = vor.u32 %v911, %v912
        %v914 = vshll.u32 2131351028, %v905
        %v915 = vshrl.u32 2102212464, %v906
        %v916 = vor.u32 %v914, %v915
        %v917 = vshll.u32 2102212464, %v905
        %v918 = vshrl.u32 920167782, %v906
        %v919 = vor.u32 %v917, %v918
        %v920 = vshll.u32 920167782, %v905
        %v921 = vshrl.u32 1326507024, %v906
        %v922 = vor.u32 %v920, %v921
        %vm923 = vcmp.lt.s32.totalorder %v904, 1
        %vm924 = vcmp.lt.s32.totalorder %v904, 2
        %vm925 = vcmp.lt.s32.totalorder %v904, 3
        %vm926 = vcmp.lt.s32.totalorder %v904, 4
        %v927 = vsel %vm923, %v907, %v910
        %v928 = vsel %vm926, %v916, 2102212464
        %v929 = vsel %vm925, %v913, %v928
        %v930 = vsel %vm924, %v927, %v929
        %v931 = vsel %vm923, %v910, %v913
        %v932 = vsel %vm926, %v919, 920167782
        %v933 = vsel %vm925, %v916, %v932
        %v934 = vsel %vm924, %v931, %v933
        %v935 = vsel %vm923, %v913, %v916
        %v936 = vsel %vm926, %v922, 1326507024
        %v937 = vsel %vm925, %v919, %v936
        %v938 = vsel %vm924, %v935, %v937
        %v939 = vshll.u32 %v899, 8
        %v940 = vmul.u32.u64.compose %v939, %v938
        %v941 = vextract.low.u32 %v940
        %v942 = vextract.high.u32 %v940
        %v943 = vmul.u32.u64.compose %v939, %v934
        %v944 = vextract.low.u32 %v943
        %v945 = vextract.high.u32 %v943
        %v946 = vmul.u32 %v939, %v930
        %v947 = vadd.s32 %v942, %v944
        %vm948 = vc.u32 %v942, %v944
        %v949 = vadd.s32 %v945, 1
        %v950 = vsel %vm948, %v949, %v945
        %v951 = vadd.s32 %v946, %v950
        %v952 = vadd.s32 %v951, 536870912
        %v953 = vshrl.u32 %v952, 30
        %v954 = vshll.u32 %v953, 30
        %v955 = vsub.s32 %v951, %v954
        %vm956 = vcmp.lt.s32.totalorder %v955, 0
        %v957 = vsub.s32 0, %v955
        %v958 = vsel %vm956, %v957, %v955
        %v959 = vclz %v958
        %v960 = vsub.s32 %v959, 2
        %vm961 = vcmp.gt.s32.totalorder 0, %v960
        %v962 = vsel %vm961, 0, %v960
        %v963 = vsub.s32 32, %v962
        %v964 = vshll.u32 %v955, %v962
        %v965 = vshrl.u32 %v947, %v963
        %v966 = vor.u32 %v964, %v965
        %v967 = vsub.s32 4294967266, %v962
        %v968 = vadd.s32 %v967, 127
        %v969 = vshll.u32 %v968, 23
        %v970 = vor.u32 4788187, %v969
        %v971 = vand.u32 2147483647, %v970
        %v973 = vcvt.s32.f32 %v966
        %v974 = vmul.f32 %v973, %v971
        %v975 = vxor.u32 %v974, 2147483648
        %v976 = vsel %vm893, %v975, %v974
        %v977 = vsub.s32 4, %v953
        %v978 = vsel %vm893, %v977, %v953
        %v979 = vsel %vm892, %v365, %v976
        %v980 = vsel %vm892, 0, %v978
        %v981 = vcosq.f32.pop %v979
        %v982 = vsinq.f32.pop %v979
        %vm983 = vweird.f32 %v365
        %v984 = vand.u32 %v980, 3
        %vm985 = vcmp.lt.s32.totalorder %v984, 2
        %vm986 = vcmp.eq.s32.totalorder %v984, 0
        %v987 = vxor.u32 %v982, 2147483648
        %v988 = vsel %vm986, %v981, %v987
        %vm989 = vcmp.eq.s32.totalorder %v984, 2
        %v990 = vxor.u32 %v981, 2147483648
        %v991 = vsel %vm989, %v990, %v982
        %v992 = vsel %vm985, %v988, %v991
        %v993 = vsel %vm983, nan, %v992
        %v994 = vand.u32 2147483647, %v366
        %vm995 = vcmp.le.f32.partialorder %v994, 0.7853982
        %vm996 = vcmp.lt.s32.totalorder %v366, 0
        %v997 = vand.u32 %v366, 2139095040
        %v998 = vshrl.u32 %v997, 23
        %v999 = vsub.s32 %v998, 127
        %v1000 = vand.u32 2147483647, %v366
        %v1001 = vand.u32 %v1000, 8388607
        %v1002 = vor.u32 %v1001, 8388608
        %v1003 = vsub.s32 0, %v1002
        %v1004 = vadd.s32 %v999, 1
        %vm1005 = vcmp.gt.s32.totalorder %v1004, 0
        %v1006 = vsel %vm1005, %v1004, 0
        %v1007 = vshrl.u32 %v1006, 5
        %v1008 = vand.u32 %v1006, 31
        %v1009 = vsub.s32 32, %v1008
        %v1010 = vshrl.u32 683565275, %v1009
        %v1011 = vshll.u32 683565275, %v1008
        %v1012 = vshrl.u32 2475754826, %v1009
        %v1013 = vor.u32 %v1011, %v1012
        %v1014 = vshll.u32 2475754826, %v1008
        %v1015 = vshrl.u32 2131351028, %v1009
        %v1016 = vor.u32 %v1014, %v1015
        %v1017 = vshll.u32 2131351028, %v1008
        %v1018 = vshrl.u32 2102212464, %v1009
        %v1019 = vor.u32 %v1017, %v1018
        %v1020 = vshll.u32 2102212464, %v1008
        %v1021 = vshrl.u32 920167782, %v1009
        %v1022 = vor.u32 %v1020, %v1021
        %v1023 = vshll.u32 920167782, %v1008
        %v1024 = vshrl.u32 1326507024, %v1009
        %v1025 = vor.u32 %v1023, %v1024
        %vm1026 = vcmp.lt.s32.totalorder %v1007, 1
        %vm1027 = vcmp.lt.s32.totalorder %v1007, 2
        %vm1028 = vcmp.lt.s32.totalorder %v1007, 3
        %vm1029 = vcmp.lt.s32.totalorder %v1007, 4
        %v1030 = vsel %vm1026, %v1010, %v1013
        %v1031 = vsel %vm1029, %v1019, 2102212464
        %v1032 = vsel %vm1028, %v1016, %v1031
        %v1033 = vsel %vm1027, %v1030, %v1032
        %v1034 = vsel %vm1026, %v1013, %v1016
        %v1035 = vsel %vm1029, %v1022, 920167782
        %v1036 = vsel %vm1028, %v1019, %v1035
        %v1037 = vsel %vm1027, %v1034, %v1036
        %v1038 = vsel %vm1026, %v1016, %v1019
        %v1039 = vsel %vm1029, %v1025, 1326507024
        %v1040 = vsel %vm1028, %v1022, %v1039
        %v1041 = vsel %vm1027, %v1038, %v1040
        %v1042 = vshll.u32 %v1002, 8
        %v1043 = vmul.u32.u64.compose %v1042, %v1041
        %v1044 = vextract.low.u32 %v1043
        %v1045 = vextract.high.u32 %v1043
        %v1046 = vmul.u32.u64.compose %v1042, %v1037
        %v1047 = vextract.low.u32 %v1046
        %v1048 = vextract.high.u32 %v1046
        %v1049 = vmul.u32 %v1042, %v1033
        %v1050 = vadd.s32 %v1045, %v1047
        %vm1051 = vc.u32 %v1045, %v1047
        %v1052 = vadd.s32 %v1048, 1
        %v1053 = vsel %vm1051, %v1052, %v1048
        %v1054 = vadd.s32 %v1049, %v1053
        %v1055 = vadd.s32 %v1054, 536870912
        %v1056 = vshrl.u32 %v1055, 30
        %v1057 = vshll.u32 %v1056, 30
        %v1058 = vsub.s32 %v1054, %v1057
        %vm1059 = vcmp.lt.s32.totalorder %v1058, 0
        %v1060 = vsub.s32 0, %v1058
        %v1061 = vsel %vm1059, %v1060, %v1058
        %v1062 = vclz %v1061
        %v1063 = vsub.s32 %v1062, 2
        %vm1064 = vcmp.gt.s32.totalorder 0, %v1063
        %v1065 = vsel %vm1064, 0, %v1063
        %v1066 = vsub.s32 32, %v1065
        %v1067 = vshll.u32 %v1058, %v1065
        %v1068 = vshrl.u32 %v1050, %v1066
        %v1069 = vor.u32 %v1067, %v1068
        %v1070 = vsub.s32 4294967266, %v1065
        %v1071 = vadd.s32 %v1070, 127
        %v1072 = vshll.u32 %v1071, 23
        %v1073 = vor.u32 4788187, %v1072
        %v1074 = vand.u32 2147483647, %v1073
        %v1076 = vcvt.s32.f32 %v1069
        %v1077 = vmul.f32 %v1076, %v1074
        %v1078 = vxor.u32 %v1077, 2147483648
        %v1079 = vsel %vm996, %v1078, %v1077
        %v1080 = vsub.s32 4, %v1056
        %v1081 = vsel %vm996, %v1080, %v1056
        %v1082 = vsel %vm995, %v366, %v1079
        %v1083 = vsel %vm995, 0, %v1081
        %v1084 = vcosq.f32.pop %v1082
        %v1085 = vsinq.f32.pop %v1082
        %vm1086 = vweird.f32 %v366
        %v1087 = vand.u32 %v1083, 3
        %vm1088 = vcmp.lt.s32.totalorder %v1087, 2
        %vm1089 = vcmp.eq.s32.totalorder %v1087, 0
        %v1090 = vxor.u32 %v1085, 2147483648
        %v1091 = vsel %vm1089, %v1084, %v1090
        %vm1092 = vcmp.eq.s32.totalorder %v1087, 2
        %v1093 = vxor.u32 %v1084, 2147483648
        %v1094 = vsel %vm1092, %v1093, %v1085
        %v1095 = vsel %vm1088, %v1091, %v1094
        %v1096 = vsel %vm1086, nan, %v1095
        %v1097 = vand.u32 2147483647, %v367
        %vm1098 = vcmp.le.f32.partialorder %v1097, 0.7853982
        %vm1099 = vcmp.lt.s32.totalorder %v367, 0
        %v1100 = vand.u32 %v367, 2139095040
        %v1101 = vshrl.u32 %v1100, 23
        %v1102 = vsub.s32 %v1101, 127
        %v1103 = vand.u32 2147483647, %v367
        %v1104 = vand.u32 %v1103, 8388607
        %v1105 = vor.u32 %v1104, 8388608
        %v1106 = vsub.s32 0, %v1105
        %v1107 = vadd.s32 %v1102, 1
        %vm1108 = vcmp.gt.s32.totalorder %v1107, 0
        %v1109 = vsel %vm1108, %v1107, 0
        %v1110 = vshrl.u32 %v1109, 5
        %v1111 = vand.u32 %v1109, 31
        %v1112 = vsub.s32 32, %v1111
        %v1113 = vshrl.u32 683565275, %v1112
        %v1114 = vshll.u32 683565275, %v1111
        %v1115 = vshrl.u32 2475754826, %v1112
        %v1116 = vor.u32 %v1114, %v1115
        %v1117 = vshll.u32 2475754826, %v1111
        %v1118 = vshrl.u32 2131351028, %v1112
        %v1119 = vor.u32 %v1117, %v1118
        %v1120 = vshll.u32 2131351028, %v1111
        %v1121 = vshrl.u32 2102212464, %v1112
        %v1122 = vor.u32 %v1120, %v1121
        %v1123 = vshll.u32 2102212464, %v1111
        %v1124 = vshrl.u32 920167782, %v1112
        %v1125 = vor.u32 %v1123, %v1124
        %v1126 = vshll.u32 920167782, %v1111
        %v1127 = vshrl.u32 1326507024, %v1112
        %v1128 = vor.u32 %v1126, %v1127
        %vm1129 = vcmp.lt.s32.totalorder %v1110, 1
        %vm1130 = vcmp.lt.s32.totalorder %v1110, 2
        %vm1131 = vcmp.lt.s32.totalorder %v1110, 3
        %vm1132 = vcmp.lt.s32.totalorder %v1110, 4
        %v1133 = vsel %vm1129, %v1113, %v1116
        %v1134 = vsel %vm1132, %v1122, 2102212464
        %v1135 = vsel %vm1131, %v1119, %v1134
        %v1136 = vsel %vm1130, %v1133, %v1135
        %v1137 = vsel %vm1129, %v1116, %v1119
        %v1138 = vsel %vm1132, %v1125, 920167782
        %v1139 = vsel %vm1131, %v1122, %v1138
        %v1140 = vsel %vm1130, %v1137, %v1139
        %v1141 = vsel %vm1129, %v1119, %v1122
        %v1142 = vsel %vm1132, %v1128, 1326507024
        %v1143 = vsel %vm1131, %v1125, %v1142
        %v1144 = vsel %vm1130, %v1141, %v1143
        %v1145 = vshll.u32 %v1105, 8
        %v1146 = vmul.u32.u64.compose %v1145, %v1144
        %v1147 = vextract.low.u32 %v1146
        %v1148 = vextract.high.u32 %v1146
        %v1149 = vmul.u32.u64.compose %v1145, %v1140
        %v1150 = vextract.low.u32 %v1149
        %v1151 = vextract.high.u32 %v1149
        %v1152 = vmul.u32 %v1145, %v1136
        %v1153 = vadd.s32 %v1148, %v1150
        %vm1154 = vc.u32 %v1148, %v1150
        %v1155 = vadd.s32 %v1151, 1
        %v1156 = vsel %vm1154, %v1155, %v1151
        %v1157 = vadd.s32 %v1152, %v1156
        %v1158 = vadd.s32 %v1157, 536870912
        %v1159 = vshrl.u32 %v1158, 30
        %v1160 = vshll.u32 %v1159, 30
        %v1161 = vsub.s32 %v1157, %v1160
        %vm1162 = vcmp.lt.s32.totalorder %v1161, 0
        %v1163 = vsub.s32 0, %v1161
        %v1164 = vsel %vm1162, %v1163, %v1161
        %v1165 = vclz %v1164
        %v1166 = vsub.s32 %v1165, 2
        %vm1167 = vcmp.gt.s32.totalorder 0, %v1166
        %v1168 = vsel %vm1167, 0, %v1166
        %v1169 = vsub.s32 32, %v1168
        %v1170 = vshll.u32 %v1161, %v1168
        %v1171 = vshrl.u32 %v1153, %v1169
        %v1172 = vor.u32 %v1170, %v1171
        %v1173 = vsub.s32 4294967266, %v1168
        %v1174 = vadd.s32 %v1173, 127
        %v1175 = vshll.u32 %v1174, 23
        %v1176 = vor.u32 4788187, %v1175
        %v1177 = vand.u32 2147483647, %v1176
        %v1179 = vcvt.s32.f32 %v1172
        %v1180 = vmul.f32 %v1179, %v1177
        %v1181 = vxor.u32 %v1180, 2147483648
        %v1182 = vsel %vm1099, %v1181, %v1180
        %v1183 = vsub.s32 4, %v1159
        %v1184 = vsel %vm1099, %v1183, %v1159
        %v1185 = vsel %vm1098, %v367, %v1182
        %v1186 = vsel %vm1098, 0, %v1184
        %v1187 = vcosq.f32.pop %v1185
        %v1188 = vsinq.f32.pop %v1185
        %vm1189 = vweird.f32 %v367
        %v1190 = vand.u32 %v1186, 3
        %vm1191 = vcmp.lt.s32.totalorder %v1190, 2
        %vm1192 = vcmp.eq.s32.totalorder %v1190, 0
        %v1193 = vxor.u32 %v1188, 2147483648
        %v1194 = vsel %vm1192, %v1187, %v1193
        %vm1195 = vcmp.eq.s32.totalorder %v1190, 2
        %v1196 = vxor.u32 %v1187, 2147483648
        %v1197 = vsel %vm1195, %v1196, %v1188
        %v1198 = vsel %vm1191, %v1194, %v1197
        %v1199 = vsel %vm1189, nan, %v1198
        %v1200 = vand.u32 2147483647, %v368
        %vm1201 = vcmp.le.f32.partialorder %v1200, 0.7853982
        %vm1202 = vcmp.lt.s32.totalorder %v368, 0
        %v1203 = vand.u32 %v368, 2139095040
        %v1204 = vshrl.u32 %v1203, 23
        %v1205 = vsub.s32 %v1204, 127
        %v1206 = vand.u32 2147483647, %v368
        %v1207 = vand.u32 %v1206, 8388607
        %v1208 = vor.u32 %v1207, 8388608
        %v1209 = vsub.s32 0, %v1208
        %v1210 = vadd.s32 %v1205, 1
        %vm1211 = vcmp.gt.s32.totalorder %v1210, 0
        %v1212 = vsel %vm1211, %v1210, 0
        %v1213 = vshrl.u32 %v1212, 5
        %v1214 = vand.u32 %v1212, 31
        %v1215 = vsub.s32 32, %v1214
        %v1216 = vshrl.u32 683565275, %v1215
        %v1217 = vshll.u32 683565275, %v1214
        %v1218 = vshrl.u32 2475754826, %v1215
        %v1219 = vor.u32 %v1217, %v1218
        %v1220 = vshll.u32 2475754826, %v1214
        %v1221 = vshrl.u32 2131351028, %v1215
        %v1222 = vor.u32 %v1220, %v1221
        %v1223 = vshll.u32 2131351028, %v1214
        %v1224 = vshrl.u32 2102212464, %v1215
        %v1225 = vor.u32 %v1223, %v1224
        %v1226 = vshll.u32 2102212464, %v1214
        %v1227 = vshrl.u32 920167782, %v1215
        %v1228 = vor.u32 %v1226, %v1227
        %v1229 = vshll.u32 920167782, %v1214
        %v1230 = vshrl.u32 1326507024, %v1215
        %v1231 = vor.u32 %v1229, %v1230
        %vm1232 = vcmp.lt.s32.totalorder %v1213, 1
        %vm1233 = vcmp.lt.s32.totalorder %v1213, 2
        %vm1234 = vcmp.lt.s32.totalorder %v1213, 3
        %vm1235 = vcmp.lt.s32.totalorder %v1213, 4
        %v1236 = vsel %vm1232, %v1216, %v1219
        %v1237 = vsel %vm1235, %v1225, 2102212464
        %v1238 = vsel %vm1234, %v1222, %v1237
        %v1239 = vsel %vm1233, %v1236, %v1238
        %v1240 = vsel %vm1232, %v1219, %v1222
        %v1241 = vsel %vm1235, %v1228, 920167782
        %v1242 = vsel %vm1234, %v1225, %v1241
        %v1243 = vsel %vm1233, %v1240, %v1242
        %v1244 = vsel %vm1232, %v1222, %v1225
        %v1245 = vsel %vm1235, %v1231, 1326507024
        %v1246 = vsel %vm1234, %v1228, %v1245
        %v1247 = vsel %vm1233, %v1244, %v1246
        %v1248 = vshll.u32 %v1208, 8
        %v1249 = vmul.u32.u64.compose %v1248, %v1247
        %v1250 = vextract.low.u32 %v1249
        %v1251 = vextract.high.u32 %v1249
        %v1252 = vmul.u32.u64.compose %v1248, %v1243
        %v1253 = vextract.low.u32 %v1252
        %v1254 = vextract.high.u32 %v1252
        %v1255 = vmul.u32 %v1248, %v1239
        %v1256 = vadd.s32 %v1251, %v1253
        %vm1257 = vc.u32 %v1251, %v1253
        %v1258 = vadd.s32 %v1254, 1
        %v1259 = vsel %vm1257, %v1258, %v1254
        %v1260 = vadd.s32 %v1255, %v1259
        %v1261 = vadd.s32 %v1260, 536870912
        %v1262 = vshrl.u32 %v1261, 30
        %v1263 = vshll.u32 %v1262, 30
        %v1264 = vsub.s32 %v1260, %v1263
        %vm1265 = vcmp.lt.s32.totalorder %v1264, 0
        %v1266 = vsub.s32 0, %v1264
        %v1267 = vsel %vm1265, %v1266, %v1264
        %v1268 = vclz %v1267
        %v1269 = vsub.s32 %v1268, 2
        %vm1270 = vcmp.gt.s32.totalorder 0, %v1269
        %v1271 = vsel %vm1270, 0, %v1269
        %v1272 = vsub.s32 32, %v1271
        %v1273 = vshll.u32 %v1264, %v1271
        %v1274 = vshrl.u32 %v1256, %v1272
        %v1275 = vor.u32 %v1273, %v1274
        %v1276 = vsub.s32 4294967266, %v1271
        %v1277 = vadd.s32 %v1276, 127
        %v1278 = vshll.u32 %v1277, 23
        %v1279 = vor.u32 4788187, %v1278
        %v1280 = vand.u32 2147483647, %v1279
        %v1282 = vcvt.s32.f32 %v1275
        %v1283 = vmul.f32 %v1282, %v1280
        %v1284 = vxor.u32 %v1283, 2147483648
        %v1285 = vsel %vm1202, %v1284, %v1283
        %v1286 = vsub.s32 4, %v1262
        %v1287 = vsel %vm1202, %v1286, %v1262
        %v1288 = vsel %vm1201, %v368, %v1285
        %v1289 = vsel %vm1201, 0, %v1287
        %v1290 = vcosq.f32.pop %v1288
        %v1291 = vsinq.f32.pop %v1288
        %vm1292 = vweird.f32 %v368
        %v1293 = vand.u32 %v1289, 3
        %vm1294 = vcmp.lt.s32.totalorder %v1293, 2
        %vm1295 = vcmp.eq.s32.totalorder %v1293, 0
        %v1296 = vxor.u32 %v1291, 2147483648
        %v1297 = vsel %vm1295, %v1290, %v1296
        %vm1298 = vcmp.eq.s32.totalorder %v1293, 2
        %v1299 = vxor.u32 %v1290, 2147483648
        %v1300 = vsel %vm1298, %v1299, %v1291
        %v1301 = vsel %vm1294, %v1297, %v1300
        %v1302 = vsel %vm1292, nan, %v1301
        %v1303 = vand.u32 2147483647, %v369
        %vm1304 = vcmp.le.f32.partialorder %v1303, 0.7853982
        %vm1305 = vcmp.lt.s32.totalorder %v369, 0
        %v1306 = vand.u32 %v369, 2139095040
        %v1307 = vshrl.u32 %v1306, 23
        %v1308 = vsub.s32 %v1307, 127
        %v1309 = vand.u32 2147483647, %v369
        %v1310 = vand.u32 %v1309, 8388607
        %v1311 = vor.u32 %v1310, 8388608
        %v1312 = vsub.s32 0, %v1311
        %v1313 = vadd.s32 %v1308, 1
        %vm1314 = vcmp.gt.s32.totalorder %v1313, 0
        %v1315 = vsel %vm1314, %v1313, 0
        %v1316 = vshrl.u32 %v1315, 5
        %v1317 = vand.u32 %v1315, 31
        %v1318 = vsub.s32 32, %v1317
        %v1319 = vshrl.u32 683565275, %v1318
        %v1320 = vshll.u32 683565275, %v1317
        %v1321 = vshrl.u32 2475754826, %v1318
        %v1322 = vor.u32 %v1320, %v1321
        %v1323 = vshll.u32 2475754826, %v1317
        %v1324 = vshrl.u32 2131351028, %v1318
        %v1325 = vor.u32 %v1323, %v1324
        %v1326 = vshll.u32 2131351028, %v1317
        %v1327 = vshrl.u32 2102212464, %v1318
        %v1328 = vor.u32 %v1326, %v1327
        %v1329 = vshll.u32 2102212464, %v1317
        %v1330 = vshrl.u32 920167782, %v1318
        %v1331 = vor.u32 %v1329, %v1330
        %v1332 = vshll.u32 920167782, %v1317
        %v1333 = vshrl.u32 1326507024, %v1318
        %v1334 = vor.u32 %v1332, %v1333
        %vm1335 = vcmp.lt.s32.totalorder %v1316, 1
        %vm1336 = vcmp.lt.s32.totalorder %v1316, 2
        %vm1337 = vcmp.lt.s32.totalorder %v1316, 3
        %vm1338 = vcmp.lt.s32.totalorder %v1316, 4
        %v1339 = vsel %vm1335, %v1319, %v1322
        %v1340 = vsel %vm1338, %v1328, 2102212464
        %v1341 = vsel %vm1337, %v1325, %v1340
        %v1342 = vsel %vm1336, %v1339, %v1341
        %v1343 = vsel %vm1335, %v1322, %v1325
        %v1344 = vsel %vm1338, %v1331, 920167782
        %v1345 = vsel %vm1337, %v1328, %v1344
        %v1346 = vsel %vm1336, %v1343, %v1345
        %v1347 = vsel %vm1335, %v1325, %v1328
        %v1348 = vsel %vm1338, %v1334, 1326507024
        %v1349 = vsel %vm1337, %v1331, %v1348
        %v1350 = vsel %vm1336, %v1347, %v1349
        %v1351 = vshll.u32 %v1311, 8
        %v1352 = vmul.u32.u64.compose %v1351, %v1350
        %v1353 = vextract.low.u32 %v1352
        %v1354 = vextract.high.u32 %v1352
        %v1355 = vmul.u32.u64.compose %v1351, %v1346
        %v1356 = vextract.low.u32 %v1355
        %v1357 = vextract.high.u32 %v1355
        %v1358 = vmul.u32 %v1351, %v1342
        %v1359 = vadd.s32 %v1354, %v1356
        %vm1360 = vc.u32 %v1354, %v1356
        %v1361 = vadd.s32 %v1357, 1
        %v1362 = vsel %vm1360, %v1361, %v1357
        %v1363 = vadd.s32 %v1358, %v1362
        %v1364 = vadd.s32 %v1363, 536870912
        %v1365 = vshrl.u32 %v1364, 30
        %v1366 = vshll.u32 %v1365, 30
        %v1367 = vsub.s32 %v1363, %v1366
        %vm1368 = vcmp.lt.s32.totalorder %v1367, 0
        %v1369 = vsub.s32 0, %v1367
        %v1370 = vsel %vm1368, %v1369, %v1367
        %v1371 = vclz %v1370
        %v1372 = vsub.s32 %v1371, 2
        %vm1373 = vcmp.gt.s32.totalorder 0, %v1372
        %v1374 = vsel %vm1373, 0, %v1372
        %v1375 = vsub.s32 32, %v1374
        %v1376 = vshll.u32 %v1367, %v1374
        %v1377 = vshrl.u32 %v1359, %v1375
        %v1378 = vor.u32 %v1376, %v1377
        %v1379 = vsub.s32 4294967266, %v1374
        %v1380 = vadd.s32 %v1379, 127
        %v1381 = vshll.u32 %v1380, 23
        %v1382 = vor.u32 4788187, %v1381
        %v1383 = vand.u32 2147483647, %v1382
        %v1385 = vcvt.s32.f32 %v1378
        %v1386 = vmul.f32 %v1385, %v1383
        %v1387 = vxor.u32 %v1386, 2147483648
        %v1388 = vsel %vm1305, %v1387, %v1386
        %v1389 = vsub.s32 4, %v1365
        %v1390 = vsel %vm1305, %v1389, %v1365
        %v1391 = vsel %vm1304, %v369, %v1388
        %v1392 = vsel %vm1304, 0, %v1390
        %v1393 = vcosq.f32.pop %v1391
        %v1394 = vsinq.f32.pop %v1391
        %vm1395 = vweird.f32 %v369
        %v1396 = vand.u32 %v1392, 3
        %vm1397 = vcmp.lt.s32.totalorder %v1396, 2
        %vm1398 = vcmp.eq.s32.totalorder %v1396, 0
        %v1399 = vxor.u32 %v1394, 2147483648
        %v1400 = vsel %vm1398, %v1393, %v1399
        %vm1401 = vcmp.eq.s32.totalorder %v1396, 2
        %v1402 = vxor.u32 %v1393, 2147483648
        %v1403 = vsel %vm1401, %v1402, %v1394
        %v1404 = vsel %vm1397, %v1400, %v1403
        %v1405 = vsel %vm1395, nan, %v1404
        %v1406 = vand.u32 2147483647, %v370
        %vm1407 = vcmp.le.f32.partialorder %v1406, 0.7853982
        %vm1408 = vcmp.lt.s32.totalorder %v370, 0
        %v1409 = vand.u32 %v370, 2139095040
        %v1410 = vshrl.u32 %v1409, 23
        %v1411 = vsub.s32 %v1410, 127
        %v1412 = vand.u32 2147483647, %v370
        %v1413 = vand.u32 %v1412, 8388607
        %v1414 = vor.u32 %v1413, 8388608
        %v1415 = vsub.s32 0, %v1414
        %v1416 = vadd.s32 %v1411, 1
        %vm1417 = vcmp.gt.s32.totalorder %v1416, 0
        %v1418 = vsel %vm1417, %v1416, 0
        %v1419 = vshrl.u32 %v1418, 5
        %v1420 = vand.u32 %v1418, 31
        %v1421 = vsub.s32 32, %v1420
        %v1422 = vshrl.u32 683565275, %v1421
        %v1423 = vshll.u32 683565275, %v1420
        %v1424 = vshrl.u32 2475754826, %v1421
        %v1425 = vor.u32 %v1423, %v1424
        %v1426 = vshll.u32 2475754826, %v1420
        %v1427 = vshrl.u32 2131351028, %v1421
        %v1428 = vor.u32 %v1426, %v1427
        %v1429 = vshll.u32 2131351028, %v1420
        %v1430 = vshrl.u32 2102212464, %v1421
        %v1431 = vor.u32 %v1429, %v1430
        %v1432 = vshll.u32 2102212464, %v1420
        %v1433 = vshrl.u32 920167782, %v1421
        %v1434 = vor.u32 %v1432, %v1433
        %v1435 = vshll.u32 920167782, %v1420
        %v1436 = vshrl.u32 1326507024, %v1421
        %v1437 = vor.u32 %v1435, %v1436
        %vm1438 = vcmp.lt.s32.totalorder %v1419, 1
        %vm1439 = vcmp.lt.s32.totalorder %v1419, 2
        %vm1440 = vcmp.lt.s32.totalorder %v1419, 3
        %vm1441 = vcmp.lt.s32.totalorder %v1419, 4
        %v1442 = vsel %vm1438, %v1422, %v1425
        %v1443 = vsel %vm1441, %v1431, 2102212464
        %v1444 = vsel %vm1440, %v1428, %v1443
        %v1445 = vsel %vm1439, %v1442, %v1444
        %v1446 = vsel %vm1438, %v1425, %v1428
        %v1447 = vsel %vm1441, %v1434, 920167782
        %v1448 = vsel %vm1440, %v1431, %v1447
        %v1449 = vsel %vm1439, %v1446, %v1448
        %v1450 = vsel %vm1438, %v1428, %v1431
        %v1451 = vsel %vm1441, %v1437, 1326507024
        %v1452 = vsel %vm1440, %v1434, %v1451
        %v1453 = vsel %vm1439, %v1450, %v1452
        %v1454 = vshll.u32 %v1414, 8
        %v1455 = vmul.u32.u64.compose %v1454, %v1453
        %v1456 = vextract.low.u32 %v1455
        %v1457 = vextract.high.u32 %v1455
        %v1458 = vmul.u32.u64.compose %v1454, %v1449
        %v1459 = vextract.low.u32 %v1458
        %v1460 = vextract.high.u32 %v1458
        %v1461 = vmul.u32 %v1454, %v1445
        %v1462 = vadd.s32 %v1457, %v1459
        %vm1463 = vc.u32 %v1457, %v1459
        %v1464 = vadd.s32 %v1460, 1
        %v1465 = vsel %vm1463, %v1464, %v1460
        %v1466 = vadd.s32 %v1461, %v1465
        %v1467 = vadd.s32 %v1466, 536870912
        %v1468 = vshrl.u32 %v1467, 30
        %v1469 = vshll.u32 %v1468, 30
        %v1470 = vsub.s32 %v1466, %v1469
        %vm1471 = vcmp.lt.s32.totalorder %v1470, 0
        %v1472 = vsub.s32 0, %v1470
        %v1473 = vsel %vm1471, %v1472, %v1470
        %v1474 = vclz %v1473
        %v1475 = vsub.s32 %v1474, 2
        %vm1476 = vcmp.gt.s32.totalorder 0, %v1475
        %v1477 = vsel %vm1476, 0, %v1475
        %v1478 = vsub.s32 32, %v1477
        %v1479 = vshll.u32 %v1470, %v1477
        %v1480 = vshrl.u32 %v1462, %v1478
        %v1481 = vor.u32 %v1479, %v1480
        %v1482 = vsub.s32 4294967266, %v1477
        %v1483 = vadd.s32 %v1482, 127
        %v1484 = vshll.u32 %v1483, 23
        %v1485 = vor.u32 4788187, %v1484
        %v1486 = vand.u32 2147483647, %v1485
        %v1488 = vcvt.s32.f32 %v1481
        %v1489 = vmul.f32 %v1488, %v1486
        %v1490 = vxor.u32 %v1489, 2147483648
        %v1491 = vsel %vm1408, %v1490, %v1489
        %v1492 = vsub.s32 4, %v1468
        %v1493 = vsel %vm1408, %v1492, %v1468
        %v1494 = vsel %vm1407, %v370, %v1491
        %v1495 = vsel %vm1407, 0, %v1493
        %v1496 = vcosq.f32.pop %v1494
        %v1497 = vsinq.f32.pop %v1494
        %vm1498 = vweird.f32 %v370
        %v1499 = vand.u32 %v1495, 3
        %vm1500 = vcmp.lt.s32.totalorder %v1499, 2
        %vm1501 = vcmp.eq.s32.totalorder %v1499, 0
        %v1502 = vxor.u32 %v1497, 2147483648
        %v1503 = vsel %vm1501, %v1496, %v1502
        %vm1504 = vcmp.eq.s32.totalorder %v1499, 2
        %v1505 = vxor.u32 %v1496, 2147483648
        %v1506 = vsel %vm1504, %v1505, %v1497
        %v1507 = vsel %vm1500, %v1503, %v1506
        %v1508 = vsel %vm1498, nan, %v1507
        %v1509 = vand.u32 2147483647, %v371
        %vm1510 = vcmp.le.f32.partialorder %v1509, 0.7853982
        %vm1511 = vcmp.lt.s32.totalorder %v371, 0
        %v1512 = vand.u32 %v371, 2139095040
        %v1513 = vshrl.u32 %v1512, 23
        %v1514 = vsub.s32 %v1513, 127
        %v1515 = vand.u32 2147483647, %v371
        %v1516 = vand.u32 %v1515, 8388607
        %v1517 = vor.u32 %v1516, 8388608
        %v1518 = vsub.s32 0, %v1517
        %v1519 = vadd.s32 %v1514, 1
        %vm1520 = vcmp.gt.s32.totalorder %v1519, 0
        %v1521 = vsel %vm1520, %v1519, 0
        %v1522 = vshrl.u32 %v1521, 5
        %v1523 = vand.u32 %v1521, 31
        %v1524 = vsub.s32 32, %v1523
        %v1525 = vshrl.u32 683565275, %v1524
        %v1526 = vshll.u32 683565275, %v1523
        %v1527 = vshrl.u32 2475754826, %v1524
        %v1528 = vor.u32 %v1526, %v1527
        %v1529 = vshll.u32 2475754826, %v1523
        %v1530 = vshrl.u32 2131351028, %v1524
        %v1531 = vor.u32 %v1529, %v1530
        %v1532 = vshll.u32 2131351028, %v1523
        %v1533 = vshrl.u32 2102212464, %v1524
        %v1534 = vor.u32 %v1532, %v1533
        %v1535 = vshll.u32 2102212464, %v1523
        %v1536 = vshrl.u32 920167782, %v1524
        %v1537 = vor.u32 %v1535, %v1536
        %v1538 = vshll.u32 920167782, %v1523
        %v1539 = vshrl.u32 1326507024, %v1524
        %v1540 = vor.u32 %v1538, %v1539
        %vm1541 = vcmp.lt.s32.totalorder %v1522, 1
        %vm1542 = vcmp.lt.s32.totalorder %v1522, 2
        %vm1543 = vcmp.lt.s32.totalorder %v1522, 3
        %vm1544 = vcmp.lt.s32.totalorder %v1522, 4
        %v1545 = vsel %vm1541, %v1525, %v1528
        %v1546 = vsel %vm1544, %v1534, 2102212464
        %v1547 = vsel %vm1543, %v1531, %v1546
        %v1548 = vsel %vm1542, %v1545, %v1547
        %v1549 = vsel %vm1541, %v1528, %v1531
        %v1550 = vsel %vm1544, %v1537, 920167782
        %v1551 = vsel %vm1543, %v1534, %v1550
        %v1552 = vsel %vm1542, %v1549, %v1551
        %v1553 = vsel %vm1541, %v1531, %v1534
        %v1554 = vsel %vm1544, %v1540, 1326507024
        %v1555 = vsel %vm1543, %v1537, %v1554
        %v1556 = vsel %vm1542, %v1553, %v1555
        %v1557 = vshll.u32 %v1517, 8
        %v1558 = vmul.u32.u64.compose %v1557, %v1556
        %v1559 = vextract.low.u32 %v1558
        %v1560 = vextract.high.u32 %v1558
        %v1561 = vmul.u32.u64.compose %v1557, %v1552
        %v1562 = vextract.low.u32 %v1561
        %v1563 = vextract.high.u32 %v1561
        %v1564 = vmul.u32 %v1557, %v1548
        %v1565 = vadd.s32 %v1560, %v1562
        %vm1566 = vc.u32 %v1560, %v1562
        %v1567 = vadd.s32 %v1563, 1
        %v1568 = vsel %vm1566, %v1567, %v1563
        %v1569 = vadd.s32 %v1564, %v1568
        %v1570 = vadd.s32 %v1569, 536870912
        %v1571 = vshrl.u32 %v1570, 30
        %v1572 = vshll.u32 %v1571, 30
        %v1573 = vsub.s32 %v1569, %v1572
        %vm1574 = vcmp.lt.s32.totalorder %v1573, 0
        %v1575 = vsub.s32 0, %v1573
        %v1576 = vsel %vm1574, %v1575, %v1573
        %v1577 = vclz %v1576
        %v1578 = vsub.s32 %v1577, 2
        %vm1579 = vcmp.gt.s32.totalorder 0, %v1578
        %v1580 = vsel %vm1579, 0, %v1578
        %v1581 = vsub.s32 32, %v1580
        %v1582 = vshll.u32 %v1573, %v1580
        %v1583 = vshrl.u32 %v1565, %v1581
        %v1584 = vor.u32 %v1582, %v1583
        %v1585 = vsub.s32 4294967266, %v1580
        %v1586 = vadd.s32 %v1585, 127
        %v1587 = vshll.u32 %v1586, 23
        %v1588 = vor.u32 4788187, %v1587
        %v1589 = vand.u32 2147483647, %v1588
        %v1591 = vcvt.s32.f32 %v1584
        %v1592 = vmul.f32 %v1591, %v1589
        %v1593 = vxor.u32 %v1592, 2147483648
        %v1594 = vsel %vm1511, %v1593, %v1592
        %v1595 = vsub.s32 4, %v1571
        %v1596 = vsel %vm1511, %v1595, %v1571
        %v1597 = vsel %vm1510, %v371, %v1594
        %v1598 = vsel %vm1510, 0, %v1596
        %v1599 = vcosq.f32.pop %v1597
        %v1600 = vsinq.f32.pop %v1597
        %vm1601 = vweird.f32 %v371
        %v1602 = vand.u32 %v1598, 3
        %vm1603 = vcmp.lt.s32.totalorder %v1602, 2
        %vm1604 = vcmp.eq.s32.totalorder %v1602, 0
        %v1605 = vxor.u32 %v1600, 2147483648
        %v1606 = vsel %vm1604, %v1599, %v1605
        %vm1607 = vcmp.eq.s32.totalorder %v1602, 2
        %v1608 = vxor.u32 %v1599, 2147483648
        %v1609 = vsel %vm1607, %v1608, %v1600
        %v1610 = vsel %vm1603, %v1606, %v1609
        %v1611 = vsel %vm1601, nan, %v1610
        %v1612 = vand.u32 2147483647, %v372
        %vm1613 = vcmp.le.f32.partialorder %v1612, 0.7853982
        %vm1614 = vcmp.lt.s32.totalorder %v372, 0
        %v1615 = vand.u32 %v372, 2139095040
        %v1616 = vshrl.u32 %v1615, 23
        %v1617 = vsub.s32 %v1616, 127
        %v1618 = vand.u32 2147483647, %v372
        %v1619 = vand.u32 %v1618, 8388607
        %v1620 = vor.u32 %v1619, 8388608
        %v1621 = vsub.s32 0, %v1620
        %v1622 = vadd.s32 %v1617, 1
        %vm1623 = vcmp.gt.s32.totalorder %v1622, 0
        %v1624 = vsel %vm1623, %v1622, 0
        %v1625 = vshrl.u32 %v1624, 5
        %v1626 = vand.u32 %v1624, 31
        %v1627 = vsub.s32 32, %v1626
        %v1628 = vshrl.u32 683565275, %v1627
        %v1629 = vshll.u32 683565275, %v1626
        %v1630 = vshrl.u32 2475754826, %v1627
        %v1631 = vor.u32 %v1629, %v1630
        %v1632 = vshll.u32 2475754826, %v1626
        %v1633 = vshrl.u32 2131351028, %v1627
        %v1634 = vor.u32 %v1632, %v1633
        %v1635 = vshll.u32 2131351028, %v1626
        %v1636 = vshrl.u32 2102212464, %v1627
        %v1637 = vor.u32 %v1635, %v1636
        %v1638 = vshll.u32 2102212464, %v1626
        %v1639 = vshrl.u32 920167782, %v1627
        %v1640 = vor.u32 %v1638, %v1639
        %v1641 = vshll.u32 920167782, %v1626
        %v1642 = vshrl.u32 1326507024, %v1627
        %v1643 = vor.u32 %v1641, %v1642
        %vm1644 = vcmp.lt.s32.totalorder %v1625, 1
        %vm1645 = vcmp.lt.s32.totalorder %v1625, 2
        %vm1646 = vcmp.lt.s32.totalorder %v1625, 3
        %vm1647 = vcmp.lt.s32.totalorder %v1625, 4
        %v1648 = vsel %vm1644, %v1628, %v1631
        %v1649 = vsel %vm1647, %v1637, 2102212464
        %v1650 = vsel %vm1646, %v1634, %v1649
        %v1651 = vsel %vm1645, %v1648, %v1650
        %v1652 = vsel %vm1644, %v1631, %v1634
        %v1653 = vsel %vm1647, %v1640, 920167782
        %v1654 = vsel %vm1646, %v1637, %v1653
        %v1655 = vsel %vm1645, %v1652, %v1654
        %v1656 = vsel %vm1644, %v1634, %v1637
        %v1657 = vsel %vm1647, %v1643, 1326507024
        %v1658 = vsel %vm1646, %v1640, %v1657
        %v1659 = vsel %vm1645, %v1656, %v1658
        %v1660 = vshll.u32 %v1620, 8
        %v1661 = vmul.u32.u64.compose %v1660, %v1659
        %v1662 = vextract.low.u32 %v1661
        %v1663 = vextract.high.u32 %v1661
        %v1664 = vmul.u32.u64.compose %v1660, %v1655
        %v1665 = vextract.low.u32 %v1664
        %v1666 = vextract.high.u32 %v1664
        %v1667 = vmul.u32 %v1660, %v1651
        %v1668 = vadd.s32 %v1663, %v1665
        %vm1669 = vc.u32 %v1663, %v1665
        %v1670 = vadd.s32 %v1666, 1
        %v1671 = vsel %vm1669, %v1670, %v1666
        %v1672 = vadd.s32 %v1667, %v1671
        %v1673 = vadd.s32 %v1672, 536870912
        %v1674 = vshrl.u32 %v1673, 30
        %v1675 = vshll.u32 %v1674, 30
        %v1676 = vsub.s32 %v1672, %v1675
        %vm1677 = vcmp.lt.s32.totalorder %v1676, 0
        %v1678 = vsub.s32 0, %v1676
        %v1679 = vsel %vm1677, %v1678, %v1676
        %v1680 = vclz %v1679
        %v1681 = vsub.s32 %v1680, 2
        %vm1682 = vcmp.gt.s32.totalorder 0, %v1681
        %v1683 = vsel %vm1682, 0, %v1681
        %v1684 = vsub.s32 32, %v1683
        %v1685 = vshll.u32 %v1676, %v1683
        %v1686 = vshrl.u32 %v1668, %v1684
        %v1687 = vor.u32 %v1685, %v1686
        %v1688 = vsub.s32 4294967266, %v1683
        %v1689 = vadd.s32 %v1688, 127
        %v1690 = vshll.u32 %v1689, 23
        %v1691 = vor.u32 4788187, %v1690
        %v1692 = vand.u32 2147483647, %v1691
        %v1694 = vcvt.s32.f32 %v1687
        %v1695 = vmul.f32 %v1694, %v1692
        %v1696 = vxor.u32 %v1695, 2147483648
        %v1697 = vsel %vm1614, %v1696, %v1695
        %v1698 = vsub.s32 4, %v1674
        %v1699 = vsel %vm1614, %v1698, %v1674
        %v1700 = vsel %vm1613, %v372, %v1697
        %v1701 = vsel %vm1613, 0, %v1699
        %v1702 = vcosq.f32.pop %v1700
        %v1703 = vsinq.f32.pop %v1700
        %vm1704 = vweird.f32 %v372
        %v1705 = vand.u32 %v1701, 3
        %vm1706 = vcmp.lt.s32.totalorder %v1705, 2
        %vm1707 = vcmp.eq.s32.totalorder %v1705, 0
        %v1708 = vxor.u32 %v1703, 2147483648
        %v1709 = vsel %vm1707, %v1702, %v1708
        %vm1710 = vcmp.eq.s32.totalorder %v1705, 2
        %v1711 = vxor.u32 %v1702, 2147483648
        %v1712 = vsel %vm1710, %v1711, %v1703
        %v1713 = vsel %vm1706, %v1709, %v1712
        %v1714 = vsel %vm1704, nan, %v1713
        %v1715 = vand.u32 2147483647, %v373
        %vm1716 = vcmp.le.f32.partialorder %v1715, 0.7853982
        %vm1717 = vcmp.lt.s32.totalorder %v373, 0
        %v1718 = vand.u32 %v373, 2139095040
        %v1719 = vshrl.u32 %v1718, 23
        %v1720 = vsub.s32 %v1719, 127
        %v1721 = vand.u32 2147483647, %v373
        %v1722 = vand.u32 %v1721, 8388607
        %v1723 = vor.u32 %v1722, 8388608
        %v1724 = vsub.s32 0, %v1723
        %v1725 = vadd.s32 %v1720, 1
        %vm1726 = vcmp.gt.s32.totalorder %v1725, 0
        %v1727 = vsel %vm1726, %v1725, 0
        %v1728 = vshrl.u32 %v1727, 5
        %v1729 = vand.u32 %v1727, 31
        %v1730 = vsub.s32 32, %v1729
        %v1731 = vshrl.u32 683565275, %v1730
        %v1732 = vshll.u32 683565275, %v1729
        %v1733 = vshrl.u32 2475754826, %v1730
        %v1734 = vor.u32 %v1732, %v1733
        %v1735 = vshll.u32 2475754826, %v1729
        %v1736 = vshrl.u32 2131351028, %v1730
        %v1737 = vor.u32 %v1735, %v1736
        %v1738 = vshll.u32 2131351028, %v1729
        %v1739 = vshrl.u32 2102212464, %v1730
        %v1740 = vor.u32 %v1738, %v1739
        %v1741 = vshll.u32 2102212464, %v1729
        %v1742 = vshrl.u32 920167782, %v1730
        %v1743 = vor.u32 %v1741, %v1742
        %v1744 = vshll.u32 920167782, %v1729
        %v1745 = vshrl.u32 1326507024, %v1730
        %v1746 = vor.u32 %v1744, %v1745
        %vm1747 = vcmp.lt.s32.totalorder %v1728, 1
        %vm1748 = vcmp.lt.s32.totalorder %v1728, 2
        %vm1749 = vcmp.lt.s32.totalorder %v1728, 3
        %vm1750 = vcmp.lt.s32.totalorder %v1728, 4
        %v1751 = vsel %vm1747, %v1731, %v1734
        %v1752 = vsel %vm1750, %v1740, 2102212464
        %v1753 = vsel %vm1749, %v1737, %v1752
        %v1754 = vsel %vm1748, %v1751, %v1753
        %v1755 = vsel %vm1747, %v1734, %v1737
        %v1756 = vsel %vm1750, %v1743, 920167782
        %v1757 = vsel %vm1749, %v1740, %v1756
        %v1758 = vsel %vm1748, %v1755, %v1757
        %v1759 = vsel %vm1747, %v1737, %v1740
        %v1760 = vsel %vm1750, %v1746, 1326507024
        %v1761 = vsel %vm1749, %v1743, %v1760
        %v1762 = vsel %vm1748, %v1759, %v1761
        %v1763 = vshll.u32 %v1723, 8
        %v1764 = vmul.u32.u64.compose %v1763, %v1762
        %v1765 = vextract.low.u32 %v1764
        %v1766 = vextract.high.u32 %v1764
        %v1767 = vmul.u32.u64.compose %v1763, %v1758
        %v1768 = vextract.low.u32 %v1767
        %v1769 = vextract.high.u32 %v1767
        %v1770 = vmul.u32 %v1763, %v1754
        %v1771 = vadd.s32 %v1766, %v1768
        %vm1772 = vc.u32 %v1766, %v1768
        %v1773 = vadd.s32 %v1769, 1
        %v1774 = vsel %vm1772, %v1773, %v1769
        %v1775 = vadd.s32 %v1770, %v1774
        %v1776 = vadd.s32 %v1775, 536870912
        %v1777 = vshrl.u32 %v1776, 30
        %v1778 = vshll.u32 %v1777, 30
        %v1779 = vsub.s32 %v1775, %v1778
        %vm1780 = vcmp.lt.s32.totalorder %v1779, 0
        %v1781 = vsub.s32 0, %v1779
        %v1782 = vsel %vm1780, %v1781, %v1779
        %v1783 = vclz %v1782
        %v1784 = vsub.s32 %v1783, 2
        %vm1785 = vcmp.gt.s32.totalorder 0, %v1784
        %v1786 = vsel %vm1785, 0, %v1784
        %v1787 = vsub.s32 32, %v1786
        %v1788 = vshll.u32 %v1779, %v1786
        %v1789 = vshrl.u32 %v1771, %v1787
        %v1790 = vor.u32 %v1788, %v1789
        %v1791 = vsub.s32 4294967266, %v1786
        %v1792 = vadd.s32 %v1791, 127
        %v1793 = vshll.u32 %v1792, 23
        %v1794 = vor.u32 4788187, %v1793
        %v1795 = vand.u32 2147483647, %v1794
        %v1797 = vcvt.s32.f32 %v1790
        %v1798 = vmul.f32 %v1797, %v1795
        %v1799 = vxor.u32 %v1798, 2147483648
        %v1800 = vsel %vm1717, %v1799, %v1798
        %v1801 = vsub.s32 4, %v1777
        %v1802 = vsel %vm1717, %v1801, %v1777
        %v1803 = vsel %vm1716, %v373, %v1800
        %v1804 = vsel %vm1716, 0, %v1802
        %v1805 = vcosq.f32.pop %v1803
        %v1806 = vsinq.f32.pop %v1803
        %vm1807 = vweird.f32 %v373
        %v1808 = vand.u32 %v1804, 3
        %vm1809 = vcmp.lt.s32.totalorder %v1808, 2
        %vm1810 = vcmp.eq.s32.totalorder %v1808, 0
        %v1811 = vxor.u32 %v1806, 2147483648
        %v1812 = vsel %vm1810, %v1805, %v1811
        %vm1813 = vcmp.eq.s32.totalorder %v1808, 2
        %v1814 = vxor.u32 %v1805, 2147483648
        %v1815 = vsel %vm1813, %v1814, %v1806
        %v1816 = vsel %vm1809, %v1812, %v1815
        %v1817 = vsel %vm1807, nan, %v1816
        %v1818 = vand.u32 2147483647, %v374
        %vm1819 = vcmp.le.f32.partialorder %v1818, 0.7853982
        %vm1820 = vcmp.lt.s32.totalorder %v374, 0
        %v1821 = vand.u32 %v374, 2139095040
        %v1822 = vshrl.u32 %v1821, 23
        %v1823 = vsub.s32 %v1822, 127
        %v1824 = vand.u32 2147483647, %v374
        %v1825 = vand.u32 %v1824, 8388607
        %v1826 = vor.u32 %v1825, 8388608
        %v1827 = vsub.s32 0, %v1826
        %v1828 = vadd.s32 %v1823, 1
        %vm1829 = vcmp.gt.s32.totalorder %v1828, 0
        %v1830 = vsel %vm1829, %v1828, 0
        %v1831 = vshrl.u32 %v1830, 5
        %v1832 = vand.u32 %v1830, 31
        %v1833 = vsub.s32 32, %v1832
        %v1834 = vshrl.u32 683565275, %v1833
        %v1835 = vshll.u32 683565275, %v1832
        %v1836 = vshrl.u32 2475754826, %v1833
        %v1837 = vor.u32 %v1835, %v1836
        %v1838 = vshll.u32 2475754826, %v1832
        %v1839 = vshrl.u32 2131351028, %v1833
        %v1840 = vor.u32 %v1838, %v1839
        %v1841 = vshll.u32 2131351028, %v1832
        %v1842 = vshrl.u32 2102212464, %v1833
        %v1843 = vor.u32 %v1841, %v1842
        %v1844 = vshll.u32 2102212464, %v1832
        %v1845 = vshrl.u32 920167782, %v1833
        %v1846 = vor.u32 %v1844, %v1845
        %v1847 = vshll.u32 920167782, %v1832
        %v1848 = vshrl.u32 1326507024, %v1833
        %v1849 = vor.u32 %v1847, %v1848
        %vm1850 = vcmp.lt.s32.totalorder %v1831, 1
        %vm1851 = vcmp.lt.s32.totalorder %v1831, 2
        %vm1852 = vcmp.lt.s32.totalorder %v1831, 3
        %vm1853 = vcmp.lt.s32.totalorder %v1831, 4
        %v1854 = vsel %vm1850, %v1834, %v1837
        %v1855 = vsel %vm1853, %v1843, 2102212464
        %v1856 = vsel %vm1852, %v1840, %v1855
        %v1857 = vsel %vm1851, %v1854, %v1856
        %v1858 = vsel %vm1850, %v1837, %v1840
        %v1859 = vsel %vm1853, %v1846, 920167782
        %v1860 = vsel %vm1852, %v1843, %v1859
        %v1861 = vsel %vm1851, %v1858, %v1860
        %v1862 = vsel %vm1850, %v1840, %v1843
        %v1863 = vsel %vm1853, %v1849, 1326507024
        %v1864 = vsel %vm1852, %v1846, %v1863
        %v1865 = vsel %vm1851, %v1862, %v1864
        %v1866 = vshll.u32 %v1826, 8
        %v1867 = vmul.u32.u64.compose %v1866, %v1865
        %v1868 = vextract.low.u32 %v1867
        %v1869 = vextract.high.u32 %v1867
        %v1870 = vmul.u32.u64.compose %v1866, %v1861
        %v1871 = vextract.low.u32 %v1870
        %v1872 = vextract.high.u32 %v1870
        %v1873 = vmul.u32 %v1866, %v1857
        %v1874 = vadd.s32 %v1869, %v1871
        %vm1875 = vc.u32 %v1869, %v1871
        %v1876 = vadd.s32 %v1872, 1
        %v1877 = vsel %vm1875, %v1876, %v1872
        %v1878 = vadd.s32 %v1873, %v1877
        %v1879 = vadd.s32 %v1878, 536870912
        %v1880 = vshrl.u32 %v1879, 30
        %v1881 = vshll.u32 %v1880, 30
        %v1882 = vsub.s32 %v1878, %v1881
        %vm1883 = vcmp.lt.s32.totalorder %v1882, 0
        %v1884 = vsub.s32 0, %v1882
        %v1885 = vsel %vm1883, %v1884, %v1882
        %v1886 = vclz %v1885
        %v1887 = vsub.s32 %v1886, 2
        %vm1888 = vcmp.gt.s32.totalorder 0, %v1887
        %v1889 = vsel %vm1888, 0, %v1887
        %v1890 = vsub.s32 32, %v1889
        %v1891 = vshll.u32 %v1882, %v1889
        %v1892 = vshrl.u32 %v1874, %v1890
        %v1893 = vor.u32 %v1891, %v1892
        %v1894 = vsub.s32 4294967266, %v1889
        %v1895 = vadd.s32 %v1894, 127
        %v1896 = vshll.u32 %v1895, 23
        %v1897 = vor.u32 4788187, %v1896
        %v1898 = vand.u32 2147483647, %v1897
        %v1900 = vcvt.s32.f32 %v1893
        %v1901 = vmul.f32 %v1900, %v1898
        %v1902 = vxor.u32 %v1901, 2147483648
        %v1903 = vsel %vm1820, %v1902, %v1901
        %v1904 = vsub.s32 4, %v1880
        %v1905 = vsel %vm1820, %v1904, %v1880
        %v1906 = vsel %vm1819, %v374, %v1903
        %v1907 = vsel %vm1819, 0, %v1905
        %v1908 = vcosq.f32.pop %v1906
        %v1909 = vsinq.f32.pop %v1906
        %vm1910 = vweird.f32 %v374
        %v1911 = vand.u32 %v1907, 3
        %vm1912 = vcmp.lt.s32.totalorder %v1911, 2
        %vm1913 = vcmp.eq.s32.totalorder %v1911, 0
        %v1914 = vxor.u32 %v1909, 2147483648
        %v1915 = vsel %vm1913, %v1908, %v1914
        %vm1916 = vcmp.eq.s32.totalorder %v1911, 2
        %v1917 = vxor.u32 %v1908, 2147483648
        %v1918 = vsel %vm1916, %v1917, %v1909
        %v1919 = vsel %vm1912, %v1915, %v1918
        %v1920 = vsel %vm1910, nan, %v1919
        %v1921 = vand.u32 2147483647, %v375
        %vm1922 = vcmp.le.f32.partialorder %v1921, 0.7853982
        %vm1923 = vcmp.lt.s32.totalorder %v375, 0
        %v1924 = vand.u32 %v375, 2139095040
        %v1925 = vshrl.u32 %v1924, 23
        %v1926 = vsub.s32 %v1925, 127
        %v1927 = vand.u32 2147483647, %v375
        %v1928 = vand.u32 %v1927, 8388607
        %v1929 = vor.u32 %v1928, 8388608
        %v1930 = vsub.s32 0, %v1929
        %v1931 = vadd.s32 %v1926, 1
        %vm1932 = vcmp.gt.s32.totalorder %v1931, 0
        %v1933 = vsel %vm1932, %v1931, 0
        %v1934 = vshrl.u32 %v1933, 5
        %v1935 = vand.u32 %v1933, 31
        %v1936 = vsub.s32 32, %v1935
        %v1937 = vshrl.u32 683565275, %v1936
        %v1938 = vshll.u32 683565275, %v1935
        %v1939 = vshrl.u32 2475754826, %v1936
        %v1940 = vor.u32 %v1938, %v1939
        %v1941 = vshll.u32 2475754826, %v1935
        %v1942 = vshrl.u32 2131351028, %v1936
        %v1943 = vor.u32 %v1941, %v1942
        %v1944 = vshll.u32 2131351028, %v1935
        %v1945 = vshrl.u32 2102212464, %v1936
        %v1946 = vor.u32 %v1944, %v1945
        %v1947 = vshll.u32 2102212464, %v1935
        %v1948 = vshrl.u32 920167782, %v1936
        %v1949 = vor.u32 %v1947, %v1948
        %v1950 = vshll.u32 920167782, %v1935
        %v1951 = vshrl.u32 1326507024, %v1936
        %v1952 = vor.u32 %v1950, %v1951
        %vm1953 = vcmp.lt.s32.totalorder %v1934, 1
        %vm1954 = vcmp.lt.s32.totalorder %v1934, 2
        %vm1955 = vcmp.lt.s32.totalorder %v1934, 3
        %vm1956 = vcmp.lt.s32.totalorder %v1934, 4
        %v1957 = vsel %vm1953, %v1937, %v1940
        %v1958 = vsel %vm1956, %v1946, 2102212464
        %v1959 = vsel %vm1955, %v1943, %v1958
        %v1960 = vsel %vm1954, %v1957, %v1959
        %v1961 = vsel %vm1953, %v1940, %v1943
        %v1962 = vsel %vm1956, %v1949, 920167782
        %v1963 = vsel %vm1955, %v1946, %v1962
        %v1964 = vsel %vm1954, %v1961, %v1963
        %v1965 = vsel %vm1953, %v1943, %v1946
        %v1966 = vsel %vm1956, %v1952, 1326507024
        %v1967 = vsel %vm1955, %v1949, %v1966
        %v1968 = vsel %vm1954, %v1965, %v1967
        %v1969 = vshll.u32 %v1929, 8
        %v1970 = vmul.u32.u64.compose %v1969, %v1968
        %v1971 = vextract.low.u32 %v1970
        %v1972 = vextract.high.u32 %v1970
        %v1973 = vmul.u32.u64.compose %v1969, %v1964
        %v1974 = vextract.low.u32 %v1973
        %v1975 = vextract.high.u32 %v1973
        %v1976 = vmul.u32 %v1969, %v1960
        %v1977 = vadd.s32 %v1972, %v1974
        %vm1978 = vc.u32 %v1972, %v1974
        %v1979 = vadd.s32 %v1975, 1
        %v1980 = vsel %vm1978, %v1979, %v1975
        %v1981 = vadd.s32 %v1976, %v1980
        %v1982 = vadd.s32 %v1981, 536870912
        %v1983 = vshrl.u32 %v1982, 30
        %v1984 = vshll.u32 %v1983, 30
        %v1985 = vsub.s32 %v1981, %v1984
        %vm1986 = vcmp.lt.s32.totalorder %v1985, 0
        %v1987 = vsub.s32 0, %v1985
        %v1988 = vsel %vm1986, %v1987, %v1985
        %v1989 = vclz %v1988
        %v1990 = vsub.s32 %v1989, 2
        %vm1991 = vcmp.gt.s32.totalorder 0, %v1990
        %v1992 = vsel %vm1991, 0, %v1990
        %v1993 = vsub.s32 32, %v1992
        %v1994 = vshll.u32 %v1985, %v1992
        %v1995 = vshrl.u32 %v1977, %v1993
        %v1996 = vor.u32 %v1994, %v1995
        %v1997 = vsub.s32 4294967266, %v1992
        %v1998 = vadd.s32 %v1997, 127
        %v1999 = vshll.u32 %v1998, 23
        %v2000 = vor.u32 4788187, %v1999
        %v2001 = vand.u32 2147483647, %v2000
        %v2003 = vcvt.s32.f32 %v1996
        %v2004 = vmul.f32 %v2003, %v2001
        %v2005 = vxor.u32 %v2004, 2147483648
        %v2006 = vsel %vm1923, %v2005, %v2004
        %v2007 = vsub.s32 4, %v1983
        %v2008 = vsel %vm1923, %v2007, %v1983
        %v2009 = vsel %vm1922, %v375, %v2006
        %v2010 = vsel %vm1922, 0, %v2008
        %v2011 = vcosq.f32.pop %v2009
        %v2012 = vsinq.f32.pop %v2009
        %vm2013 = vweird.f32 %v375
        %v2014 = vand.u32 %v2010, 3
        %vm2015 = vcmp.lt.s32.totalorder %v2014, 2
        %vm2016 = vcmp.eq.s32.totalorder %v2014, 0
        %v2017 = vxor.u32 %v2012, 2147483648
        %v2018 = vsel %vm2016, %v2011, %v2017
        %vm2019 = vcmp.eq.s32.totalorder %v2014, 2
        %v2020 = vxor.u32 %v2011, 2147483648
        %v2021 = vsel %vm2019, %v2020, %v2012
        %v2022 = vsel %vm2015, %v2018, %v2021
        %v2023 = vsel %vm2013, nan, %v2022
        %2024 = vst [vmem:[%s137] sm:$0xff] %v478
        %2025 = vst [vmem:[%s137 + $0x10] sm:$0xff] %v581
        %2026 = vst [vmem:[%s137 + $0x20] sm:$0xff] %v684
        %2027 = vst [vmem:[%s137 + $0x30] sm:$0xff] %v787
        %2028 = vst [vmem:[%s137 + $0x40] sm:$0xff] %v890
        %2029 = vst [vmem:[%s137 + $0x50] sm:$0xff] %v993
        %2030 = vst [vmem:[%s137 + $0x60] sm:$0xff] %v1096
        %2031 = vst [vmem:[%s137 + $0x70] sm:$0xff] %v1199
        %2032 = vst [vmem:[%s137 + $0x80] sm:$0xff] %v1302
        %2033 = vst [vmem:[%s137 + $0x90] sm:$0xff] %v1405
        %2034 = vst [vmem:[%s137 + $0xa0] sm:$0xff] %v1508
        %2035 = vst [vmem:[%s137 + $0xb0] sm:$0xff] %v1611
        %2036 = vst [vmem:[%s137 + $0xc0] sm:$0xff] %v1714
        %2037 = vst [vmem:[%s137 + $0xd0] sm:$0xff] %v1817
        %2038 = vst [vmem:[%s137 + $0xe0] sm:$0xff] %v1920
        %2039 = vst [vmem:[%s137 + $0xf0] sm:$0xff] %v2023
        %v2040 = vand.u32 2147483647, %v360
        %vm2041 = vcmp.le.f32.partialorder %v2040, 0.7853982
        %vm2042 = vcmp.lt.s32.totalorder %v360, 0
        %v2043 = vand.u32 %v360, 2139095040
        %v2044 = vshrl.u32 %v2043, 23
        %v2045 = vsub.s32 %v2044, 127
        %v2046 = vand.u32 2147483647, %v360
        %v2047 = vand.u32 %v2046, 8388607
        %v2048 = vor.u32 %v2047, 8388608
        %v2049 = vsub.s32 0, %v2048
        %v2050 = vadd.s32 %v2045, 1
        %vm2051 = vcmp.gt.s32.totalorder %v2050, 0
        %v2052 = vsel %vm2051, %v2050, 0
        %v2053 = vshrl.u32 %v2052, 5
        %v2054 = vand.u32 %v2052, 31
        %v2055 = vsub.s32 32, %v2054
        %v2056 = vshrl.u32 683565275, %v2055
        %v2057 = vshll.u32 683565275, %v2054
        %v2058 = vshrl.u32 2475754826, %v2055
        %v2059 = vor.u32 %v2057, %v2058
        %v2060 = vshll.u32 2475754826, %v2054
        %v2061 = vshrl.u32 2131351028, %v2055
        %v2062 = vor.u32 %v2060, %v2061
        %v2063 = vshll.u32 2131351028, %v2054
        %v2064 = vshrl.u32 2102212464, %v2055
        %v2065 = vor.u32 %v2063, %v2064
        %v2066 = vshll.u32 2102212464, %v2054
        %v2067 = vshrl.u32 920167782, %v2055
        %v2068 = vor.u32 %v2066, %v2067
        %v2069 = vshll.u32 920167782, %v2054
        %v2070 = vshrl.u32 1326507024, %v2055
        %v2071 = vor.u32 %v2069, %v2070
        %vm2072 = vcmp.lt.s32.totalorder %v2053, 1
        %vm2073 = vcmp.lt.s32.totalorder %v2053, 2
        %vm2074 = vcmp.lt.s32.totalorder %v2053, 3
        %vm2075 = vcmp.lt.s32.totalorder %v2053, 4
        %v2076 = vsel %vm2072, %v2056, %v2059
        %v2077 = vsel %vm2075, %v2065, 2102212464
        %v2078 = vsel %vm2074, %v2062, %v2077
        %v2079 = vsel %vm2073, %v2076, %v2078
        %v2080 = vsel %vm2072, %v2059, %v2062
        %v2081 = vsel %vm2075, %v2068, 920167782
        %v2082 = vsel %vm2074, %v2065, %v2081
        %v2083 = vsel %vm2073, %v2080, %v2082
        %v2084 = vsel %vm2072, %v2062, %v2065
        %v2085 = vsel %vm2075, %v2071, 1326507024
        %v2086 = vsel %vm2074, %v2068, %v2085
        %v2087 = vsel %vm2073, %v2084, %v2086
        %v2088 = vshll.u32 %v2048, 8
        %v2089 = vmul.u32.u64.compose %v2088, %v2087
        %v2090 = vextract.low.u32 %v2089
        %v2091 = vextract.high.u32 %v2089
        %v2092 = vmul.u32.u64.compose %v2088, %v2083
        %v2093 = vextract.low.u32 %v2092
        %v2094 = vextract.high.u32 %v2092
        %v2095 = vmul.u32 %v2088, %v2079
        %v2096 = vadd.s32 %v2091, %v2093
        %vm2097 = vc.u32 %v2091, %v2093
        %v2098 = vadd.s32 %v2094, 1
        %v2099 = vsel %vm2097, %v2098, %v2094
        %v2100 = vadd.s32 %v2095, %v2099
        %v2101 = vadd.s32 %v2100, 536870912
        %v2102 = vshrl.u32 %v2101, 30
        %v2103 = vshll.u32 %v2102, 30
        %v2104 = vsub.s32 %v2100, %v2103
        %vm2105 = vcmp.lt.s32.totalorder %v2104, 0
        %v2106 = vsub.s32 0, %v2104
        %v2107 = vsel %vm2105, %v2106, %v2104
        %v2108 = vclz %v2107
        %v2109 = vsub.s32 %v2108, 2
        %vm2110 = vcmp.gt.s32.totalorder 0, %v2109
        %v2111 = vsel %vm2110, 0, %v2109
        %v2112 = vsub.s32 32, %v2111
        %v2113 = vshll.u32 %v2104, %v2111
        %v2114 = vshrl.u32 %v2096, %v2112
        %v2115 = vor.u32 %v2113, %v2114
        %v2116 = vsub.s32 4294967266, %v2111
        %v2117 = vadd.s32 %v2116, 127
        %v2118 = vshll.u32 %v2117, 23
        %v2119 = vor.u32 4788187, %v2118
        %v2120 = vand.u32 2147483647, %v2119
        %v2122 = vcvt.s32.f32 %v2115
        %v2123 = vmul.f32 %v2122, %v2120
        %v2124 = vxor.u32 %v2123, 2147483648
        %v2125 = vsel %vm2042, %v2124, %v2123
        %v2126 = vsub.s32 4, %v2102
        %v2127 = vsel %vm2042, %v2126, %v2102
        %v2128 = vsel %vm2041, %v360, %v2125
        %v2129 = vsel %vm2041, 0, %v2127
        %v2130 = vcosq.f32.pop %v2128
        %v2131 = vsinq.f32.pop %v2128
        %vm2132 = vweird.f32 %v360
        %v2133 = vadd.s32 %v2129, 3
        %v2134 = vand.u32 %v2133, 3
        %vm2135 = vcmp.lt.s32.totalorder %v2134, 2
        %vm2136 = vcmp.eq.s32.totalorder %v2134, 0
        %v2137 = vxor.u32 %v2131, 2147483648
        %v2138 = vsel %vm2136, %v2130, %v2137
        %vm2139 = vcmp.eq.s32.totalorder %v2134, 2
        %v2140 = vxor.u32 %v2130, 2147483648
        %v2141 = vsel %vm2139, %v2140, %v2131
        %v2142 = vsel %vm2135, %v2138, %v2141
        %v2143 = vsel %vm2132, nan, %v2142
        %v2144 = vand.u32 2147483647, %v361
        %vm2145 = vcmp.le.f32.partialorder %v2144, 0.7853982
        %vm2146 = vcmp.lt.s32.totalorder %v361, 0
        %v2147 = vand.u32 %v361, 2139095040
        %v2148 = vshrl.u32 %v2147, 23
        %v2149 = vsub.s32 %v2148, 127
        %v2150 = vand.u32 2147483647, %v361
        %v2151 = vand.u32 %v2150, 8388607
        %v2152 = vor.u32 %v2151, 8388608
        %v2153 = vsub.s32 0, %v2152
        %v2154 = vadd.s32 %v2149, 1
        %vm2155 = vcmp.gt.s32.totalorder %v2154, 0
        %v2156 = vsel %vm2155, %v2154, 0
        %v2157 = vshrl.u32 %v2156, 5
        %v2158 = vand.u32 %v2156, 31
        %v2159 = vsub.s32 32, %v2158
        %v2160 = vshrl.u32 683565275, %v2159
        %v2161 = vshll.u32 683565275, %v2158
        %v2162 = vshrl.u32 2475754826, %v2159
        %v2163 = vor.u32 %v2161, %v2162
        %v2164 = vshll.u32 2475754826, %v2158
        %v2165 = vshrl.u32 2131351028, %v2159
        %v2166 = vor.u32 %v2164, %v2165
        %v2167 = vshll.u32 2131351028, %v2158
        %v2168 = vshrl.u32 2102212464, %v2159
        %v2169 = vor.u32 %v2167, %v2168
        %v2170 = vshll.u32 2102212464, %v2158
        %v2171 = vshrl.u32 920167782, %v2159
        %v2172 = vor.u32 %v2170, %v2171
        %v2173 = vshll.u32 920167782, %v2158
        %v2174 = vshrl.u32 1326507024, %v2159
        %v2175 = vor.u32 %v2173, %v2174
        %vm2176 = vcmp.lt.s32.totalorder %v2157, 1
        %vm2177 = vcmp.lt.s32.totalorder %v2157, 2
        %vm2178 = vcmp.lt.s32.totalorder %v2157, 3
        %vm2179 = vcmp.lt.s32.totalorder %v2157, 4
        %v2180 = vsel %vm2176, %v2160, %v2163
        %v2181 = vsel %vm2179, %v2169, 2102212464
        %v2182 = vsel %vm2178, %v2166, %v2181
        %v2183 = vsel %vm2177, %v2180, %v2182
        %v2184 = vsel %vm2176, %v2163, %v2166
        %v2185 = vsel %vm2179, %v2172, 920167782
        %v2186 = vsel %vm2178, %v2169, %v2185
        %v2187 = vsel %vm2177, %v2184, %v2186
        %v2188 = vsel %vm2176, %v2166, %v2169
        %v2189 = vsel %vm2179, %v2175, 1326507024
        %v2190 = vsel %vm2178, %v2172, %v2189
        %v2191 = vsel %vm2177, %v2188, %v2190
        %v2192 = vshll.u32 %v2152, 8
        %v2193 = vmul.u32.u64.compose %v2192, %v2191
        %v2194 = vextract.low.u32 %v2193
        %v2195 = vextract.high.u32 %v2193
        %v2196 = vmul.u32.u64.compose %v2192, %v2187
        %v2197 = vextract.low.u32 %v2196
        %v2198 = vextract.high.u32 %v2196
        %v2199 = vmul.u32 %v2192, %v2183
        %v2200 = vadd.s32 %v2195, %v2197
        %vm2201 = vc.u32 %v2195, %v2197
        %v2202 = vadd.s32 %v2198, 1
        %v2203 = vsel %vm2201, %v2202, %v2198
        %v2204 = vadd.s32 %v2199, %v2203
        %v2205 = vadd.s32 %v2204, 536870912
        %v2206 = vshrl.u32 %v2205, 30
        %v2207 = vshll.u32 %v2206, 30
        %v2208 = vsub.s32 %v2204, %v2207
        %vm2209 = vcmp.lt.s32.totalorder %v2208, 0
        %v2210 = vsub.s32 0, %v2208
        %v2211 = vsel %vm2209, %v2210, %v2208
        %v2212 = vclz %v2211
        %v2213 = vsub.s32 %v2212, 2
        %vm2214 = vcmp.gt.s32.totalorder 0, %v2213
        %v2215 = vsel %vm2214, 0, %v2213
        %v2216 = vsub.s32 32, %v2215
        %v2217 = vshll.u32 %v2208, %v2215
        %v2218 = vshrl.u32 %v2200, %v2216
        %v2219 = vor.u32 %v2217, %v2218
        %v2220 = vsub.s32 4294967266, %v2215
        %v2221 = vadd.s32 %v2220, 127
        %v2222 = vshll.u32 %v2221, 23
        %v2223 = vor.u32 4788187, %v2222
        %v2224 = vand.u32 2147483647, %v2223
        %v2226 = vcvt.s32.f32 %v2219
        %v2227 = vmul.f32 %v2226, %v2224
        %v2228 = vxor.u32 %v2227, 2147483648
        %v2229 = vsel %vm2146, %v2228, %v2227
        %v2230 = vsub.s32 4, %v2206
        %v2231 = vsel %vm2146, %v2230, %v2206
        %v2232 = vsel %vm2145, %v361, %v2229
        %v2233 = vsel %vm2145, 0, %v2231
        %v2234 = vcosq.f32.pop %v2232
        %v2235 = vsinq.f32.pop %v2232
        %vm2236 = vweird.f32 %v361
        %v2237 = vadd.s32 %v2233, 3
        %v2238 = vand.u32 %v2237, 3
        %vm2239 = vcmp.lt.s32.totalorder %v2238, 2
        %vm2240 = vcmp.eq.s32.totalorder %v2238, 0
        %v2241 = vxor.u32 %v2235, 2147483648
        %v2242 = vsel %vm2240, %v2234, %v2241
        %vm2243 = vcmp.eq.s32.totalorder %v2238, 2
        %v2244 = vxor.u32 %v2234, 2147483648
        %v2245 = vsel %vm2243, %v2244, %v2235
        %v2246 = vsel %vm2239, %v2242, %v2245
        %v2247 = vsel %vm2236, nan, %v2246
        %v2248 = vand.u32 2147483647, %v362
        %vm2249 = vcmp.le.f32.partialorder %v2248, 0.7853982
        %vm2250 = vcmp.lt.s32.totalorder %v362, 0
        %v2251 = vand.u32 %v362, 2139095040
        %v2252 = vshrl.u32 %v2251, 23
        %v2253 = vsub.s32 %v2252, 127
        %v2254 = vand.u32 2147483647, %v362
        %v2255 = vand.u32 %v2254, 8388607
        %v2256 = vor.u32 %v2255, 8388608
        %v2257 = vsub.s32 0, %v2256
        %v2258 = vadd.s32 %v2253, 1
        %vm2259 = vcmp.gt.s32.totalorder %v2258, 0
        %v2260 = vsel %vm2259, %v2258, 0
        %v2261 = vshrl.u32 %v2260, 5
        %v2262 = vand.u32 %v2260, 31
        %v2263 = vsub.s32 32, %v2262
        %v2264 = vshrl.u32 683565275, %v2263
        %v2265 = vshll.u32 683565275, %v2262
        %v2266 = vshrl.u32 2475754826, %v2263
        %v2267 = vor.u32 %v2265, %v2266
        %v2268 = vshll.u32 2475754826, %v2262
        %v2269 = vshrl.u32 2131351028, %v2263
        %v2270 = vor.u32 %v2268, %v2269
        %v2271 = vshll.u32 2131351028, %v2262
        %v2272 = vshrl.u32 2102212464, %v2263
        %v2273 = vor.u32 %v2271, %v2272
        %v2274 = vshll.u32 2102212464, %v2262
        %v2275 = vshrl.u32 920167782, %v2263
        %v2276 = vor.u32 %v2274, %v2275
        %v2277 = vshll.u32 920167782, %v2262
        %v2278 = vshrl.u32 1326507024, %v2263
        %v2279 = vor.u32 %v2277, %v2278
        %vm2280 = vcmp.lt.s32.totalorder %v2261, 1
        %vm2281 = vcmp.lt.s32.totalorder %v2261, 2
        %vm2282 = vcmp.lt.s32.totalorder %v2261, 3
        %vm2283 = vcmp.lt.s32.totalorder %v2261, 4
        %v2284 = vsel %vm2280, %v2264, %v2267
        %v2285 = vsel %vm2283, %v2273, 2102212464
        %v2286 = vsel %vm2282, %v2270, %v2285
        %v2287 = vsel %vm2281, %v2284, %v2286
        %v2288 = vsel %vm2280, %v2267, %v2270
        %v2289 = vsel %vm2283, %v2276, 920167782
        %v2290 = vsel %vm2282, %v2273, %v2289
        %v2291 = vsel %vm2281, %v2288, %v2290
        %v2292 = vsel %vm2280, %v2270, %v2273
        %v2293 = vsel %vm2283, %v2279, 1326507024
        %v2294 = vsel %vm2282, %v2276, %v2293
        %v2295 = vsel %vm2281, %v2292, %v2294
        %v2296 = vshll.u32 %v2256, 8
        %v2297 = vmul.u32.u64.compose %v2296, %v2295
        %v2298 = vextract.low.u32 %v2297
        %v2299 = vextract.high.u32 %v2297
        %v2300 = vmul.u32.u64.compose %v2296, %v2291
        %v2301 = vextract.low.u32 %v2300
        %v2302 = vextract.high.u32 %v2300
        %v2303 = vmul.u32 %v2296, %v2287
        %v2304 = vadd.s32 %v2299, %v2301
        %vm2305 = vc.u32 %v2299, %v2301
        %v2306 = vadd.s32 %v2302, 1
        %v2307 = vsel %vm2305, %v2306, %v2302
        %v2308 = vadd.s32 %v2303, %v2307
        %v2309 = vadd.s32 %v2308, 536870912
        %v2310 = vshrl.u32 %v2309, 30
        %v2311 = vshll.u32 %v2310, 30
        %v2312 = vsub.s32 %v2308, %v2311
        %vm2313 = vcmp.lt.s32.totalorder %v2312, 0
        %v2314 = vsub.s32 0, %v2312
        %v2315 = vsel %vm2313, %v2314, %v2312
        %v2316 = vclz %v2315
        %v2317 = vsub.s32 %v2316, 2
        %vm2318 = vcmp.gt.s32.totalorder 0, %v2317
        %v2319 = vsel %vm2318, 0, %v2317
        %v2320 = vsub.s32 32, %v2319
        %v2321 = vshll.u32 %v2312, %v2319
        %v2322 = vshrl.u32 %v2304, %v2320
        %v2323 = vor.u32 %v2321, %v2322
        %v2324 = vsub.s32 4294967266, %v2319
        %v2325 = vadd.s32 %v2324, 127
        %v2326 = vshll.u32 %v2325, 23
        %v2327 = vor.u32 4788187, %v2326
        %v2328 = vand.u32 2147483647, %v2327
        %v2330 = vcvt.s32.f32 %v2323
        %v2331 = vmul.f32 %v2330, %v2328
        %v2332 = vxor.u32 %v2331, 2147483648
        %v2333 = vsel %vm2250, %v2332, %v2331
        %v2334 = vsub.s32 4, %v2310
        %v2335 = vsel %vm2250, %v2334, %v2310
        %v2336 = vsel %vm2249, %v362, %v2333
        %v2337 = vsel %vm2249, 0, %v2335
        %v2338 = vcosq.f32.pop %v2336
        %v2339 = vsinq.f32.pop %v2336
        %vm2340 = vweird.f32 %v362
        %v2341 = vadd.s32 %v2337, 3
        %v2342 = vand.u32 %v2341, 3
        %vm2343 = vcmp.lt.s32.totalorder %v2342, 2
        %vm2344 = vcmp.eq.s32.totalorder %v2342, 0
        %v2345 = vxor.u32 %v2339, 2147483648
        %v2346 = vsel %vm2344, %v2338, %v2345
        %vm2347 = vcmp.eq.s32.totalorder %v2342, 2
        %v2348 = vxor.u32 %v2338, 2147483648
        %v2349 = vsel %vm2347, %v2348, %v2339
        %v2350 = vsel %vm2343, %v2346, %v2349
        %v2351 = vsel %vm2340, nan, %v2350
        %v2352 = vand.u32 2147483647, %v363
        %vm2353 = vcmp.le.f32.partialorder %v2352, 0.7853982
        %vm2354 = vcmp.lt.s32.totalorder %v363, 0
        %v2355 = vand.u32 %v363, 2139095040
        %v2356 = vshrl.u32 %v2355, 23
        %v2357 = vsub.s32 %v2356, 127
        %v2358 = vand.u32 2147483647, %v363
        %v2359 = vand.u32 %v2358, 8388607
        %v2360 = vor.u32 %v2359, 8388608
        %v2361 = vsub.s32 0, %v2360
        %v2362 = vadd.s32 %v2357, 1
        %vm2363 = vcmp.gt.s32.totalorder %v2362, 0
        %v2364 = vsel %vm2363, %v2362, 0
        %v2365 = vshrl.u32 %v2364, 5
        %v2366 = vand.u32 %v2364, 31
        %v2367 = vsub.s32 32, %v2366
        %v2368 = vshrl.u32 683565275, %v2367
        %v2369 = vshll.u32 683565275, %v2366
        %v2370 = vshrl.u32 2475754826, %v2367
        %v2371 = vor.u32 %v2369, %v2370
        %v2372 = vshll.u32 2475754826, %v2366
        %v2373 = vshrl.u32 2131351028, %v2367
        %v2374 = vor.u32 %v2372, %v2373
        %v2375 = vshll.u32 2131351028, %v2366
        %v2376 = vshrl.u32 2102212464, %v2367
        %v2377 = vor.u32 %v2375, %v2376
        %v2378 = vshll.u32 2102212464, %v2366
        %v2379 = vshrl.u32 920167782, %v2367
        %v2380 = vor.u32 %v2378, %v2379
        %v2381 = vshll.u32 920167782, %v2366
        %v2382 = vshrl.u32 1326507024, %v2367
        %v2383 = vor.u32 %v2381, %v2382
        %vm2384 = vcmp.lt.s32.totalorder %v2365, 1
        %vm2385 = vcmp.lt.s32.totalorder %v2365, 2
        %vm2386 = vcmp.lt.s32.totalorder %v2365, 3
        %vm2387 = vcmp.lt.s32.totalorder %v2365, 4
        %v2388 = vsel %vm2384, %v2368, %v2371
        %v2389 = vsel %vm2387, %v2377, 2102212464
        %v2390 = vsel %vm2386, %v2374, %v2389
        %v2391 = vsel %vm2385, %v2388, %v2390
        %v2392 = vsel %vm2384, %v2371, %v2374
        %v2393 = vsel %vm2387, %v2380, 920167782
        %v2394 = vsel %vm2386, %v2377, %v2393
        %v2395 = vsel %vm2385, %v2392, %v2394
        %v2396 = vsel %vm2384, %v2374, %v2377
        %v2397 = vsel %vm2387, %v2383, 1326507024
        %v2398 = vsel %vm2386, %v2380, %v2397
        %v2399 = vsel %vm2385, %v2396, %v2398
        %v2400 = vshll.u32 %v2360, 8
        %v2401 = vmul.u32.u64.compose %v2400, %v2399
        %v2402 = vextract.low.u32 %v2401
        %v2403 = vextract.high.u32 %v2401
        %v2404 = vmul.u32.u64.compose %v2400, %v2395
        %v2405 = vextract.low.u32 %v2404
        %v2406 = vextract.high.u32 %v2404
        %v2407 = vmul.u32 %v2400, %v2391
        %v2408 = vadd.s32 %v2403, %v2405
        %vm2409 = vc.u32 %v2403, %v2405
        %v2410 = vadd.s32 %v2406, 1
        %v2411 = vsel %vm2409, %v2410, %v2406
        %v2412 = vadd.s32 %v2407, %v2411
        %v2413 = vadd.s32 %v2412, 536870912
        %v2414 = vshrl.u32 %v2413, 30
        %v2415 = vshll.u32 %v2414, 30
        %v2416 = vsub.s32 %v2412, %v2415
        %vm2417 = vcmp.lt.s32.totalorder %v2416, 0
        %v2418 = vsub.s32 0, %v2416
        %v2419 = vsel %vm2417, %v2418, %v2416
        %v2420 = vclz %v2419
        %v2421 = vsub.s32 %v2420, 2
        %vm2422 = vcmp.gt.s32.totalorder 0, %v2421
        %v2423 = vsel %vm2422, 0, %v2421
        %v2424 = vsub.s32 32, %v2423
        %v2425 = vshll.u32 %v2416, %v2423
        %v2426 = vshrl.u32 %v2408, %v2424
        %v2427 = vor.u32 %v2425, %v2426
        %v2428 = vsub.s32 4294967266, %v2423
        %v2429 = vadd.s32 %v2428, 127
        %v2430 = vshll.u32 %v2429, 23
        %v2431 = vor.u32 4788187, %v2430
        %v2432 = vand.u32 2147483647, %v2431
        %v2434 = vcvt.s32.f32 %v2427
        %v2435 = vmul.f32 %v2434, %v2432
        %v2436 = vxor.u32 %v2435, 2147483648
        %v2437 = vsel %vm2354, %v2436, %v2435
        %v2438 = vsub.s32 4, %v2414
        %v2439 = vsel %vm2354, %v2438, %v2414
        %v2440 = vsel %vm2353, %v363, %v2437
        %v2441 = vsel %vm2353, 0, %v2439
        %v2442 = vcosq.f32.pop %v2440
        %v2443 = vsinq.f32.pop %v2440
        %vm2444 = vweird.f32 %v363
        %v2445 = vadd.s32 %v2441, 3
        %v2446 = vand.u32 %v2445, 3
        %vm2447 = vcmp.lt.s32.totalorder %v2446, 2
        %vm2448 = vcmp.eq.s32.totalorder %v2446, 0
        %v2449 = vxor.u32 %v2443, 2147483648
        %v2450 = vsel %vm2448, %v2442, %v2449
        %vm2451 = vcmp.eq.s32.totalorder %v2446, 2
        %v2452 = vxor.u32 %v2442, 2147483648
        %v2453 = vsel %vm2451, %v2452, %v2443
        %v2454 = vsel %vm2447, %v2450, %v2453
        %v2455 = vsel %vm2444, nan, %v2454
        %v2456 = vand.u32 2147483647, %v364
        %vm2457 = vcmp.le.f32.partialorder %v2456, 0.7853982
        %vm2458 = vcmp.lt.s32.totalorder %v364, 0
        %v2459 = vand.u32 %v364, 2139095040
        %v2460 = vshrl.u32 %v2459, 23
        %v2461 = vsub.s32 %v2460, 127
        %v2462 = vand.u32 2147483647, %v364
        %v2463 = vand.u32 %v2462, 8388607
        %v2464 = vor.u32 %v2463, 8388608
        %v2465 = vsub.s32 0, %v2464
        %v2466 = vadd.s32 %v2461, 1
        %vm2467 = vcmp.gt.s32.totalorder %v2466, 0
        %v2468 = vsel %vm2467, %v2466, 0
        %v2469 = vshrl.u32 %v2468, 5
        %v2470 = vand.u32 %v2468, 31
        %v2471 = vsub.s32 32, %v2470
        %v2472 = vshrl.u32 683565275, %v2471
        %v2473 = vshll.u32 683565275, %v2470
        %v2474 = vshrl.u32 2475754826, %v2471
        %v2475 = vor.u32 %v2473, %v2474
        %v2476 = vshll.u32 2475754826, %v2470
        %v2477 = vshrl.u32 2131351028, %v2471
        %v2478 = vor.u32 %v2476, %v2477
        %v2479 = vshll.u32 2131351028, %v2470
        %v2480 = vshrl.u32 2102212464, %v2471
        %v2481 = vor.u32 %v2479, %v2480
        %v2482 = vshll.u32 2102212464, %v2470
        %v2483 = vshrl.u32 920167782, %v2471
        %v2484 = vor.u32 %v2482, %v2483
        %v2485 = vshll.u32 920167782, %v2470
        %v2486 = vshrl.u32 1326507024, %v2471
        %v2487 = vor.u32 %v2485, %v2486
        %vm2488 = vcmp.lt.s32.totalorder %v2469, 1
        %vm2489 = vcmp.lt.s32.totalorder %v2469, 2
        %vm2490 = vcmp.lt.s32.totalorder %v2469, 3
        %vm2491 = vcmp.lt.s32.totalorder %v2469, 4
        %v2492 = vsel %vm2488, %v2472, %v2475
        %v2493 = vsel %vm2491, %v2481, 2102212464
        %v2494 = vsel %vm2490, %v2478, %v2493
        %v2495 = vsel %vm2489, %v2492, %v2494
        %v2496 = vsel %vm2488, %v2475, %v2478
        %v2497 = vsel %vm2491, %v2484, 920167782
        %v2498 = vsel %vm2490, %v2481, %v2497
        %v2499 = vsel %vm2489, %v2496, %v2498
        %v2500 = vsel %vm2488, %v2478, %v2481
        %v2501 = vsel %vm2491, %v2487, 1326507024
        %v2502 = vsel %vm2490, %v2484, %v2501
        %v2503 = vsel %vm2489, %v2500, %v2502
        %v2504 = vshll.u32 %v2464, 8
        %v2505 = vmul.u32.u64.compose %v2504, %v2503
        %v2506 = vextract.low.u32 %v2505
        %v2507 = vextract.high.u32 %v2505
        %v2508 = vmul.u32.u64.compose %v2504, %v2499
        %v2509 = vextract.low.u32 %v2508
        %v2510 = vextract.high.u32 %v2508
        %v2511 = vmul.u32 %v2504, %v2495
        %v2512 = vadd.s32 %v2507, %v2509
        %vm2513 = vc.u32 %v2507, %v2509
        %v2514 = vadd.s32 %v2510, 1
        %v2515 = vsel %vm2513, %v2514, %v2510
        %v2516 = vadd.s32 %v2511, %v2515
        %v2517 = vadd.s32 %v2516, 536870912
        %v2518 = vshrl.u32 %v2517, 30
        %v2519 = vshll.u32 %v2518, 30
        %v2520 = vsub.s32 %v2516, %v2519
        %vm2521 = vcmp.lt.s32.totalorder %v2520, 0
        %v2522 = vsub.s32 0, %v2520
        %v2523 = vsel %vm2521, %v2522, %v2520
        %v2524 = vclz %v2523
        %v2525 = vsub.s32 %v2524, 2
        %vm2526 = vcmp.gt.s32.totalorder 0, %v2525
        %v2527 = vsel %vm2526, 0, %v2525
        %v2528 = vsub.s32 32, %v2527
        %v2529 = vshll.u32 %v2520, %v2527
        %v2530 = vshrl.u32 %v2512, %v2528
        %v2531 = vor.u32 %v2529, %v2530
        %v2532 = vsub.s32 4294967266, %v2527
        %v2533 = vadd.s32 %v2532, 127
        %v2534 = vshll.u32 %v2533, 23
        %v2535 = vor.u32 4788187, %v2534
        %v2536 = vand.u32 2147483647, %v2535
        %v2538 = vcvt.s32.f32 %v2531
        %v2539 = vmul.f32 %v2538, %v2536
        %v2540 = vxor.u32 %v2539, 2147483648
        %v2541 = vsel %vm2458, %v2540, %v2539
        %v2542 = vsub.s32 4, %v2518
        %v2543 = vsel %vm2458, %v2542, %v2518
        %v2544 = vsel %vm2457, %v364, %v2541
        %v2545 = vsel %vm2457, 0, %v2543
        %v2546 = vcosq.f32.pop %v2544
        %v2547 = vsinq.f32.pop %v2544
        %vm2548 = vweird.f32 %v364
        %v2549 = vadd.s32 %v2545, 3
        %v2550 = vand.u32 %v2549, 3
        %vm2551 = vcmp.lt.s32.totalorder %v2550, 2
        %vm2552 = vcmp.eq.s32.totalorder %v2550, 0
        %v2553 = vxor.u32 %v2547, 2147483648
        %v2554 = vsel %vm2552, %v2546, %v2553
        %vm2555 = vcmp.eq.s32.totalorder %v2550, 2
        %v2556 = vxor.u32 %v2546, 2147483648
        %v2557 = vsel %vm2555, %v2556, %v2547
        %v2558 = vsel %vm2551, %v2554, %v2557
        %v2559 = vsel %vm2548, nan, %v2558
        %v2560 = vand.u32 2147483647, %v365
        %vm2561 = vcmp.le.f32.partialorder %v2560, 0.7853982
        %vm2562 = vcmp.lt.s32.totalorder %v365, 0
        %v2563 = vand.u32 %v365, 2139095040
        %v2564 = vshrl.u32 %v2563, 23
        %v2565 = vsub.s32 %v2564, 127
        %v2566 = vand.u32 2147483647, %v365
        %v2567 = vand.u32 %v2566, 8388607
        %v2568 = vor.u32 %v2567, 8388608
        %v2569 = vsub.s32 0, %v2568
        %v2570 = vadd.s32 %v2565, 1
        %vm2571 = vcmp.gt.s32.totalorder %v2570, 0
        %v2572 = vsel %vm2571, %v2570, 0
        %v2573 = vshrl.u32 %v2572, 5
        %v2574 = vand.u32 %v2572, 31
        %v2575 = vsub.s32 32, %v2574
        %v2576 = vshrl.u32 683565275, %v2575
        %v2577 = vshll.u32 683565275, %v2574
        %v2578 = vshrl.u32 2475754826, %v2575
        %v2579 = vor.u32 %v2577, %v2578
        %v2580 = vshll.u32 2475754826, %v2574
        %v2581 = vshrl.u32 2131351028, %v2575
        %v2582 = vor.u32 %v2580, %v2581
        %v2583 = vshll.u32 2131351028, %v2574
        %v2584 = vshrl.u32 2102212464, %v2575
        %v2585 = vor.u32 %v2583, %v2584
        %v2586 = vshll.u32 2102212464, %v2574
        %v2587 = vshrl.u32 920167782, %v2575
        %v2588 = vor.u32 %v2586, %v2587
        %v2589 = vshll.u32 920167782, %v2574
        %v2590 = vshrl.u32 1326507024, %v2575
        %v2591 = vor.u32 %v2589, %v2590
        %vm2592 = vcmp.lt.s32.totalorder %v2573, 1
        %vm2593 = vcmp.lt.s32.totalorder %v2573, 2
        %vm2594 = vcmp.lt.s32.totalorder %v2573, 3
        %vm2595 = vcmp.lt.s32.totalorder %v2573, 4
        %v2596 = vsel %vm2592, %v2576, %v2579
        %v2597 = vsel %vm2595, %v2585, 2102212464
        %v2598 = vsel %vm2594, %v2582, %v2597
        %v2599 = vsel %vm2593, %v2596, %v2598
        %v2600 = vsel %vm2592, %v2579, %v2582
        %v2601 = vsel %vm2595, %v2588, 920167782
        %v2602 = vsel %vm2594, %v2585, %v2601
        %v2603 = vsel %vm2593, %v2600, %v2602
        %v2604 = vsel %vm2592, %v2582, %v2585
        %v2605 = vsel %vm2595, %v2591, 1326507024
        %v2606 = vsel %vm2594, %v2588, %v2605
        %v2607 = vsel %vm2593, %v2604, %v2606
        %v2608 = vshll.u32 %v2568, 8
        %v2609 = vmul.u32.u64.compose %v2608, %v2607
        %v2610 = vextract.low.u32 %v2609
        %v2611 = vextract.high.u32 %v2609
        %v2612 = vmul.u32.u64.compose %v2608, %v2603
        %v2613 = vextract.low.u32 %v2612
        %v2614 = vextract.high.u32 %v2612
        %v2615 = vmul.u32 %v2608, %v2599
        %v2616 = vadd.s32 %v2611, %v2613
        %vm2617 = vc.u32 %v2611, %v2613
        %v2618 = vadd.s32 %v2614, 1
        %v2619 = vsel %vm2617, %v2618, %v2614
        %v2620 = vadd.s32 %v2615, %v2619
        %v2621 = vadd.s32 %v2620, 536870912
        %v2622 = vshrl.u32 %v2621, 30
        %v2623 = vshll.u32 %v2622, 30
        %v2624 = vsub.s32 %v2620, %v2623
        %vm2625 = vcmp.lt.s32.totalorder %v2624, 0
        %v2626 = vsub.s32 0, %v2624
        %v2627 = vsel %vm2625, %v2626, %v2624
        %v2628 = vclz %v2627
        %v2629 = vsub.s32 %v2628, 2
        %vm2630 = vcmp.gt.s32.totalorder 0, %v2629
        %v2631 = vsel %vm2630, 0, %v2629
        %v2632 = vsub.s32 32, %v2631
        %v2633 = vshll.u32 %v2624, %v2631
        %v2634 = vshrl.u32 %v2616, %v2632
        %v2635 = vor.u32 %v2633, %v2634
        %v2636 = vsub.s32 4294967266, %v2631
        %v2637 = vadd.s32 %v2636, 127
        %v2638 = vshll.u32 %v2637, 23
        %v2639 = vor.u32 4788187, %v2638
        %v2640 = vand.u32 2147483647, %v2639
        %v2642 = vcvt.s32.f32 %v2635
        %v2643 = vmul.f32 %v2642, %v2640
        %v2644 = vxor.u32 %v2643, 2147483648
        %v2645 = vsel %vm2562, %v2644, %v2643
        %v2646 = vsub.s32 4, %v2622
        %v2647 = vsel %vm2562, %v2646, %v2622
        %v2648 = vsel %vm2561, %v365, %v2645
        %v2649 = vsel %vm2561, 0, %v2647
        %v2650 = vcosq.f32.pop %v2648
        %v2651 = vsinq.f32.pop %v2648
        %vm2652 = vweird.f32 %v365
        %v2653 = vadd.s32 %v2649, 3
        %v2654 = vand.u32 %v2653, 3
        %vm2655 = vcmp.lt.s32.totalorder %v2654, 2
        %vm2656 = vcmp.eq.s32.totalorder %v2654, 0
        %v2657 = vxor.u32 %v2651, 2147483648
        %v2658 = vsel %vm2656, %v2650, %v2657
        %vm2659 = vcmp.eq.s32.totalorder %v2654, 2
        %v2660 = vxor.u32 %v2650, 2147483648
        %v2661 = vsel %vm2659, %v2660, %v2651
        %v2662 = vsel %vm2655, %v2658, %v2661
        %v2663 = vsel %vm2652, nan, %v2662
        %v2664 = vand.u32 2147483647, %v366
        %vm2665 = vcmp.le.f32.partialorder %v2664, 0.7853982
        %vm2666 = vcmp.lt.s32.totalorder %v366, 0
        %v2667 = vand.u32 %v366, 2139095040
        %v2668 = vshrl.u32 %v2667, 23
        %v2669 = vsub.s32 %v2668, 127
        %v2670 = vand.u32 2147483647, %v366
        %v2671 = vand.u32 %v2670, 8388607
        %v2672 = vor.u32 %v2671, 8388608
        %v2673 = vsub.s32 0, %v2672
        %v2674 = vadd.s32 %v2669, 1
        %vm2675 = vcmp.gt.s32.totalorder %v2674, 0
        %v2676 = vsel %vm2675, %v2674, 0
        %v2677 = vshrl.u32 %v2676, 5
        %v2678 = vand.u32 %v2676, 31
        %v2679 = vsub.s32 32, %v2678
        %v2680 = vshrl.u32 683565275, %v2679
        %v2681 = vshll.u32 683565275, %v2678
        %v2682 = vshrl.u32 2475754826, %v2679
        %v2683 = vor.u32 %v2681, %v2682
        %v2684 = vshll.u32 2475754826, %v2678
        %v2685 = vshrl.u32 2131351028, %v2679
        %v2686 = vor.u32 %v2684, %v2685
        %v2687 = vshll.u32 2131351028, %v2678
        %v2688 = vshrl.u32 2102212464, %v2679
        %v2689 = vor.u32 %v2687, %v2688
        %v2690 = vshll.u32 2102212464, %v2678
        %v2691 = vshrl.u32 920167782, %v2679
        %v2692 = vor.u32 %v2690, %v2691
        %v2693 = vshll.u32 920167782, %v2678
        %v2694 = vshrl.u32 1326507024, %v2679
        %v2695 = vor.u32 %v2693, %v2694
        %vm2696 = vcmp.lt.s32.totalorder %v2677, 1
        %vm2697 = vcmp.lt.s32.totalorder %v2677, 2
        %vm2698 = vcmp.lt.s32.totalorder %v2677, 3
        %vm2699 = vcmp.lt.s32.totalorder %v2677, 4
        %v2700 = vsel %vm2696, %v2680, %v2683
        %v2701 = vsel %vm2699, %v2689, 2102212464
        %v2702 = vsel %vm2698, %v2686, %v2701
        %v2703 = vsel %vm2697, %v2700, %v2702
        %v2704 = vsel %vm2696, %v2683, %v2686
        %v2705 = vsel %vm2699, %v2692, 920167782
        %v2706 = vsel %vm2698, %v2689, %v2705
        %v2707 = vsel %vm2697, %v2704, %v2706
        %v2708 = vsel %vm2696, %v2686, %v2689
        %v2709 = vsel %vm2699, %v2695, 1326507024
        %v2710 = vsel %vm2698, %v2692, %v2709
        %v2711 = vsel %vm2697, %v2708, %v2710
        %v2712 = vshll.u32 %v2672, 8
        %v2713 = vmul.u32.u64.compose %v2712, %v2711
        %v2714 = vextract.low.u32 %v2713
        %v2715 = vextract.high.u32 %v2713
        %v2716 = vmul.u32.u64.compose %v2712, %v2707
        %v2717 = vextract.low.u32 %v2716
        %v2718 = vextract.high.u32 %v2716
        %v2719 = vmul.u32 %v2712, %v2703
        %v2720 = vadd.s32 %v2715, %v2717
        %vm2721 = vc.u32 %v2715, %v2717
        %v2722 = vadd.s32 %v2718, 1
        %v2723 = vsel %vm2721, %v2722, %v2718
        %v2724 = vadd.s32 %v2719, %v2723
        %v2725 = vadd.s32 %v2724, 536870912
        %v2726 = vshrl.u32 %v2725, 30
        %v2727 = vshll.u32 %v2726, 30
        %v2728 = vsub.s32 %v2724, %v2727
        %vm2729 = vcmp.lt.s32.totalorder %v2728, 0
        %v2730 = vsub.s32 0, %v2728
        %v2731 = vsel %vm2729, %v2730, %v2728
        %v2732 = vclz %v2731
        %v2733 = vsub.s32 %v2732, 2
        %vm2734 = vcmp.gt.s32.totalorder 0, %v2733
        %v2735 = vsel %vm2734, 0, %v2733
        %v2736 = vsub.s32 32, %v2735
        %v2737 = vshll.u32 %v2728, %v2735
        %v2738 = vshrl.u32 %v2720, %v2736
        %v2739 = vor.u32 %v2737, %v2738
        %v2740 = vsub.s32 4294967266, %v2735
        %v2741 = vadd.s32 %v2740, 127
        %v2742 = vshll.u32 %v2741, 23
        %v2743 = vor.u32 4788187, %v2742
        %v2744 = vand.u32 2147483647, %v2743
        %v2746 = vcvt.s32.f32 %v2739
        %v2747 = vmul.f32 %v2746, %v2744
        %v2748 = vxor.u32 %v2747, 2147483648
        %v2749 = vsel %vm2666, %v2748, %v2747
        %v2750 = vsub.s32 4, %v2726
        %v2751 = vsel %vm2666, %v2750, %v2726
        %v2752 = vsel %vm2665, %v366, %v2749
        %v2753 = vsel %vm2665, 0, %v2751
        %v2754 = vcosq.f32.pop %v2752
        %v2755 = vsinq.f32.pop %v2752
        %vm2756 = vweird.f32 %v366
        %v2757 = vadd.s32 %v2753, 3
        %v2758 = vand.u32 %v2757, 3
        %vm2759 = vcmp.lt.s32.totalorder %v2758, 2
        %vm2760 = vcmp.eq.s32.totalorder %v2758, 0
        %v2761 = vxor.u32 %v2755, 2147483648
        %v2762 = vsel %vm2760, %v2754, %v2761
        %vm2763 = vcmp.eq.s32.totalorder %v2758, 2
        %v2764 = vxor.u32 %v2754, 2147483648
        %v2765 = vsel %vm2763, %v2764, %v2755
        %v2766 = vsel %vm2759, %v2762, %v2765
        %v2767 = vsel %vm2756, nan, %v2766
        %v2768 = vand.u32 2147483647, %v367
        %vm2769 = vcmp.le.f32.partialorder %v2768, 0.7853982
        %vm2770 = vcmp.lt.s32.totalorder %v367, 0
        %v2771 = vand.u32 %v367, 2139095040
        %v2772 = vshrl.u32 %v2771, 23
        %v2773 = vsub.s32 %v2772, 127
        %v2774 = vand.u32 2147483647, %v367
        %v2775 = vand.u32 %v2774, 8388607
        %v2776 = vor.u32 %v2775, 8388608
        %v2777 = vsub.s32 0, %v2776
        %v2778 = vadd.s32 %v2773, 1
        %vm2779 = vcmp.gt.s32.totalorder %v2778, 0
        %v2780 = vsel %vm2779, %v2778, 0
        %v2781 = vshrl.u32 %v2780, 5
        %v2782 = vand.u32 %v2780, 31
        %v2783 = vsub.s32 32, %v2782
        %v2784 = vshrl.u32 683565275, %v2783
        %v2785 = vshll.u32 683565275, %v2782
        %v2786 = vshrl.u32 2475754826, %v2783
        %v2787 = vor.u32 %v2785, %v2786
        %v2788 = vshll.u32 2475754826, %v2782
        %v2789 = vshrl.u32 2131351028, %v2783
        %v2790 = vor.u32 %v2788, %v2789
        %v2791 = vshll.u32 2131351028, %v2782
        %v2792 = vshrl.u32 2102212464, %v2783
        %v2793 = vor.u32 %v2791, %v2792
        %v2794 = vshll.u32 2102212464, %v2782
        %v2795 = vshrl.u32 920167782, %v2783
        %v2796 = vor.u32 %v2794, %v2795
        %v2797 = vshll.u32 920167782, %v2782
        %v2798 = vshrl.u32 1326507024, %v2783
        %v2799 = vor.u32 %v2797, %v2798
        %vm2800 = vcmp.lt.s32.totalorder %v2781, 1
        %vm2801 = vcmp.lt.s32.totalorder %v2781, 2
        %vm2802 = vcmp.lt.s32.totalorder %v2781, 3
        %vm2803 = vcmp.lt.s32.totalorder %v2781, 4
        %v2804 = vsel %vm2800, %v2784, %v2787
        %v2805 = vsel %vm2803, %v2793, 2102212464
        %v2806 = vsel %vm2802, %v2790, %v2805
        %v2807 = vsel %vm2801, %v2804, %v2806
        %v2808 = vsel %vm2800, %v2787, %v2790
        %v2809 = vsel %vm2803, %v2796, 920167782
        %v2810 = vsel %vm2802, %v2793, %v2809
        %v2811 = vsel %vm2801, %v2808, %v2810
        %v2812 = vsel %vm2800, %v2790, %v2793
        %v2813 = vsel %vm2803, %v2799, 1326507024
        %v2814 = vsel %vm2802, %v2796, %v2813
        %v2815 = vsel %vm2801, %v2812, %v2814
        %v2816 = vshll.u32 %v2776, 8
        %v2817 = vmul.u32.u64.compose %v2816, %v2815
        %v2818 = vextract.low.u32 %v2817
        %v2819 = vextract.high.u32 %v2817
        %v2820 = vmul.u32.u64.compose %v2816, %v2811
        %v2821 = vextract.low.u32 %v2820
        %v2822 = vextract.high.u32 %v2820
        %v2823 = vmul.u32 %v2816, %v2807
        %v2824 = vadd.s32 %v2819, %v2821
        %vm2825 = vc.u32 %v2819, %v2821
        %v2826 = vadd.s32 %v2822, 1
        %v2827 = vsel %vm2825, %v2826, %v2822
        %v2828 = vadd.s32 %v2823, %v2827
        %v2829 = vadd.s32 %v2828, 536870912
        %v2830 = vshrl.u32 %v2829, 30
        %v2831 = vshll.u32 %v2830, 30
        %v2832 = vsub.s32 %v2828, %v2831
        %vm2833 = vcmp.lt.s32.totalorder %v2832, 0
        %v2834 = vsub.s32 0, %v2832
        %v2835 = vsel %vm2833, %v2834, %v2832
        %v2836 = vclz %v2835
        %v2837 = vsub.s32 %v2836, 2
        %vm2838 = vcmp.gt.s32.totalorder 0, %v2837
        %v2839 = vsel %vm2838, 0, %v2837
        %v2840 = vsub.s32 32, %v2839
        %v2841 = vshll.u32 %v2832, %v2839
        %v2842 = vshrl.u32 %v2824, %v2840
        %v2843 = vor.u32 %v2841, %v2842
        %v2844 = vsub.s32 4294967266, %v2839
        %v2845 = vadd.s32 %v2844, 127
        %v2846 = vshll.u32 %v2845, 23
        %v2847 = vor.u32 4788187, %v2846
        %v2848 = vand.u32 2147483647, %v2847
        %v2850 = vcvt.s32.f32 %v2843
        %v2851 = vmul.f32 %v2850, %v2848
        %v2852 = vxor.u32 %v2851, 2147483648
        %v2853 = vsel %vm2770, %v2852, %v2851
        %v2854 = vsub.s32 4, %v2830
        %v2855 = vsel %vm2770, %v2854, %v2830
        %v2856 = vsel %vm2769, %v367, %v2853
        %v2857 = vsel %vm2769, 0, %v2855
        %v2858 = vcosq.f32.pop %v2856
        %v2859 = vsinq.f32.pop %v2856
        %vm2860 = vweird.f32 %v367
        %v2861 = vadd.s32 %v2857, 3
        %v2862 = vand.u32 %v2861, 3
        %vm2863 = vcmp.lt.s32.totalorder %v2862, 2
        %vm2864 = vcmp.eq.s32.totalorder %v2862, 0
        %v2865 = vxor.u32 %v2859, 2147483648
        %v2866 = vsel %vm2864, %v2858, %v2865
        %vm2867 = vcmp.eq.s32.totalorder %v2862, 2
        %v2868 = vxor.u32 %v2858, 2147483648
        %v2869 = vsel %vm2867, %v2868, %v2859
        %v2870 = vsel %vm2863, %v2866, %v2869
        %v2871 = vsel %vm2860, nan, %v2870
        %v2872 = vand.u32 2147483647, %v368
        %vm2873 = vcmp.le.f32.partialorder %v2872, 0.7853982
        %vm2874 = vcmp.lt.s32.totalorder %v368, 0
        %v2875 = vand.u32 %v368, 2139095040
        %v2876 = vshrl.u32 %v2875, 23
        %v2877 = vsub.s32 %v2876, 127
        %v2878 = vand.u32 2147483647, %v368
        %v2879 = vand.u32 %v2878, 8388607
        %v2880 = vor.u32 %v2879, 8388608
        %v2881 = vsub.s32 0, %v2880
        %v2882 = vadd.s32 %v2877, 1
        %vm2883 = vcmp.gt.s32.totalorder %v2882, 0
        %v2884 = vsel %vm2883, %v2882, 0
        %v2885 = vshrl.u32 %v2884, 5
        %v2886 = vand.u32 %v2884, 31
        %v2887 = vsub.s32 32, %v2886
        %v2888 = vshrl.u32 683565275, %v2887
        %v2889 = vshll.u32 683565275, %v2886
        %v2890 = vshrl.u32 2475754826, %v2887
        %v2891 = vor.u32 %v2889, %v2890
        %v2892 = vshll.u32 2475754826, %v2886
        %v2893 = vshrl.u32 2131351028, %v2887
        %v2894 = vor.u32 %v2892, %v2893
        %v2895 = vshll.u32 2131351028, %v2886
        %v2896 = vshrl.u32 2102212464, %v2887
        %v2897 = vor.u32 %v2895, %v2896
        %v2898 = vshll.u32 2102212464, %v2886
        %v2899 = vshrl.u32 920167782, %v2887
        %v2900 = vor.u32 %v2898, %v2899
        %v2901 = vshll.u32 920167782, %v2886
        %v2902 = vshrl.u32 1326507024, %v2887
        %v2903 = vor.u32 %v2901, %v2902
        %vm2904 = vcmp.lt.s32.totalorder %v2885, 1
        %vm2905 = vcmp.lt.s32.totalorder %v2885, 2
        %vm2906 = vcmp.lt.s32.totalorder %v2885, 3
        %vm2907 = vcmp.lt.s32.totalorder %v2885, 4
        %v2908 = vsel %vm2904, %v2888, %v2891
        %v2909 = vsel %vm2907, %v2897, 2102212464
        %v2910 = vsel %vm2906, %v2894, %v2909
        %v2911 = vsel %vm2905, %v2908, %v2910
        %v2912 = vsel %vm2904, %v2891, %v2894
        %v2913 = vsel %vm2907, %v2900, 920167782
        %v2914 = vsel %vm2906, %v2897, %v2913
        %v2915 = vsel %vm2905, %v2912, %v2914
        %v2916 = vsel %vm2904, %v2894, %v2897
        %v2917 = vsel %vm2907, %v2903, 1326507024
        %v2918 = vsel %vm2906, %v2900, %v2917
        %v2919 = vsel %vm2905, %v2916, %v2918
        %v2920 = vshll.u32 %v2880, 8
        %v2921 = vmul.u32.u64.compose %v2920, %v2919
        %v2922 = vextract.low.u32 %v2921
        %v2923 = vextract.high.u32 %v2921
        %v2924 = vmul.u32.u64.compose %v2920, %v2915
        %v2925 = vextract.low.u32 %v2924
        %v2926 = vextract.high.u32 %v2924
        %v2927 = vmul.u32 %v2920, %v2911
        %v2928 = vadd.s32 %v2923, %v2925
        %vm2929 = vc.u32 %v2923, %v2925
        %v2930 = vadd.s32 %v2926, 1
        %v2931 = vsel %vm2929, %v2930, %v2926
        %v2932 = vadd.s32 %v2927, %v2931
        %v2933 = vadd.s32 %v2932, 536870912
        %v2934 = vshrl.u32 %v2933, 30
        %v2935 = vshll.u32 %v2934, 30
        %v2936 = vsub.s32 %v2932, %v2935
        %vm2937 = vcmp.lt.s32.totalorder %v2936, 0
        %v2938 = vsub.s32 0, %v2936
        %v2939 = vsel %vm2937, %v2938, %v2936
        %v2940 = vclz %v2939
        %v2941 = vsub.s32 %v2940, 2
        %vm2942 = vcmp.gt.s32.totalorder 0, %v2941
        %v2943 = vsel %vm2942, 0, %v2941
        %v2944 = vsub.s32 32, %v2943
        %v2945 = vshll.u32 %v2936, %v2943
        %v2946 = vshrl.u32 %v2928, %v2944
        %v2947 = vor.u32 %v2945, %v2946
        %v2948 = vsub.s32 4294967266, %v2943
        %v2949 = vadd.s32 %v2948, 127
        %v2950 = vshll.u32 %v2949, 23
        %v2951 = vor.u32 4788187, %v2950
        %v2952 = vand.u32 2147483647, %v2951
        %v2954 = vcvt.s32.f32 %v2947
        %v2955 = vmul.f32 %v2954, %v2952
        %v2956 = vxor.u32 %v2955, 2147483648
        %v2957 = vsel %vm2874, %v2956, %v2955
        %v2958 = vsub.s32 4, %v2934
        %v2959 = vsel %vm2874, %v2958, %v2934
        %v2960 = vsel %vm2873, %v368, %v2957
        %v2961 = vsel %vm2873, 0, %v2959
        %v2962 = vcosq.f32.pop %v2960
        %v2963 = vsinq.f32.pop %v2960
        %vm2964 = vweird.f32 %v368
        %v2965 = vadd.s32 %v2961, 3
        %v2966 = vand.u32 %v2965, 3
        %vm2967 = vcmp.lt.s32.totalorder %v2966, 2
        %vm2968 = vcmp.eq.s32.totalorder %v2966, 0
        %v2969 = vxor.u32 %v2963, 2147483648
        %v2970 = vsel %vm2968, %v2962, %v2969
        %vm2971 = vcmp.eq.s32.totalorder %v2966, 2
        %v2972 = vxor.u32 %v2962, 2147483648
        %v2973 = vsel %vm2971, %v2972, %v2963
        %v2974 = vsel %vm2967, %v2970, %v2973
        %v2975 = vsel %vm2964, nan, %v2974
        %v2976 = vand.u32 2147483647, %v369
        %vm2977 = vcmp.le.f32.partialorder %v2976, 0.7853982
        %vm2978 = vcmp.lt.s32.totalorder %v369, 0
        %v2979 = vand.u32 %v369, 2139095040
        %v2980 = vshrl.u32 %v2979, 23
        %v2981 = vsub.s32 %v2980, 127
        %v2982 = vand.u32 2147483647, %v369
        %v2983 = vand.u32 %v2982, 8388607
        %v2984 = vor.u32 %v2983, 8388608
        %v2985 = vsub.s32 0, %v2984
        %v2986 = vadd.s32 %v2981, 1
        %vm2987 = vcmp.gt.s32.totalorder %v2986, 0
        %v2988 = vsel %vm2987, %v2986, 0
        %v2989 = vshrl.u32 %v2988, 5
        %v2990 = vand.u32 %v2988, 31
        %v2991 = vsub.s32 32, %v2990
        %v2992 = vshrl.u32 683565275, %v2991
        %v2993 = vshll.u32 683565275, %v2990
        %v2994 = vshrl.u32 2475754826, %v2991
        %v2995 = vor.u32 %v2993, %v2994
        %v2996 = vshll.u32 2475754826, %v2990
        %v2997 = vshrl.u32 2131351028, %v2991
        %v2998 = vor.u32 %v2996, %v2997
        %v2999 = vshll.u32 2131351028, %v2990
        %v3000 = vshrl.u32 2102212464, %v2991
        %v3001 = vor.u32 %v2999, %v3000
        %v3002 = vshll.u32 2102212464, %v2990
        %v3003 = vshrl.u32 920167782, %v2991
        %v3004 = vor.u32 %v3002, %v3003
        %v3005 = vshll.u32 920167782, %v2990
        %v3006 = vshrl.u32 1326507024, %v2991
        %v3007 = vor.u32 %v3005, %v3006
        %vm3008 = vcmp.lt.s32.totalorder %v2989, 1
        %vm3009 = vcmp.lt.s32.totalorder %v2989, 2
        %vm3010 = vcmp.lt.s32.totalorder %v2989, 3
        %vm3011 = vcmp.lt.s32.totalorder %v2989, 4
        %v3012 = vsel %vm3008, %v2992, %v2995
        %v3013 = vsel %vm3011, %v3001, 2102212464
        %v3014 = vsel %vm3010, %v2998, %v3013
        %v3015 = vsel %vm3009, %v3012, %v3014
        %v3016 = vsel %vm3008, %v2995, %v2998
        %v3017 = vsel %vm3011, %v3004, 920167782
        %v3018 = vsel %vm3010, %v3001, %v3017
        %v3019 = vsel %vm3009, %v3016, %v3018
        %v3020 = vsel %vm3008, %v2998, %v3001
        %v3021 = vsel %vm3011, %v3007, 1326507024
        %v3022 = vsel %vm3010, %v3004, %v3021
        %v3023 = vsel %vm3009, %v3020, %v3022
        %v3024 = vshll.u32 %v2984, 8
        %v3025 = vmul.u32.u64.compose %v3024, %v3023
        %v3026 = vextract.low.u32 %v3025
        %v3027 = vextract.high.u32 %v3025
        %v3028 = vmul.u32.u64.compose %v3024, %v3019
        %v3029 = vextract.low.u32 %v3028
        %v3030 = vextract.high.u32 %v3028
        %v3031 = vmul.u32 %v3024, %v3015
        %v3032 = vadd.s32 %v3027, %v3029
        %vm3033 = vc.u32 %v3027, %v3029
        %v3034 = vadd.s32 %v3030, 1
        %v3035 = vsel %vm3033, %v3034, %v3030
        %v3036 = vadd.s32 %v3031, %v3035
        %v3037 = vadd.s32 %v3036, 536870912
        %v3038 = vshrl.u32 %v3037, 30
        %v3039 = vshll.u32 %v3038, 30
        %v3040 = vsub.s32 %v3036, %v3039
        %vm3041 = vcmp.lt.s32.totalorder %v3040, 0
        %v3042 = vsub.s32 0, %v3040
        %v3043 = vsel %vm3041, %v3042, %v3040
        %v3044 = vclz %v3043
        %v3045 = vsub.s32 %v3044, 2
        %vm3046 = vcmp.gt.s32.totalorder 0, %v3045
        %v3047 = vsel %vm3046, 0, %v3045
        %v3048 = vsub.s32 32, %v3047
        %v3049 = vshll.u32 %v3040, %v3047
        %v3050 = vshrl.u32 %v3032, %v3048
        %v3051 = vor.u32 %v3049, %v3050
        %v3052 = vsub.s32 4294967266, %v3047
        %v3053 = vadd.s32 %v3052, 127
        %v3054 = vshll.u32 %v3053, 23
        %v3055 = vor.u32 4788187, %v3054
        %v3056 = vand.u32 2147483647, %v3055
        %v3058 = vcvt.s32.f32 %v3051
        %v3059 = vmul.f32 %v3058, %v3056
        %v3060 = vxor.u32 %v3059, 2147483648
        %v3061 = vsel %vm2978, %v3060, %v3059
        %v3062 = vsub.s32 4, %v3038
        %v3063 = vsel %vm2978, %v3062, %v3038
        %v3064 = vsel %vm2977, %v369, %v3061
        %v3065 = vsel %vm2977, 0, %v3063
        %v3066 = vcosq.f32.pop %v3064
        %v3067 = vsinq.f32.pop %v3064
        %vm3068 = vweird.f32 %v369
        %v3069 = vadd.s32 %v3065, 3
        %v3070 = vand.u32 %v3069, 3
        %vm3071 = vcmp.lt.s32.totalorder %v3070, 2
        %vm3072 = vcmp.eq.s32.totalorder %v3070, 0
        %v3073 = vxor.u32 %v3067, 2147483648
        %v3074 = vsel %vm3072, %v3066, %v3073
        %vm3075 = vcmp.eq.s32.totalorder %v3070, 2
        %v3076 = vxor.u32 %v3066, 2147483648
        %v3077 = vsel %vm3075, %v3076, %v3067
        %v3078 = vsel %vm3071, %v3074, %v3077
        %v3079 = vsel %vm3068, nan, %v3078
        %v3080 = vand.u32 2147483647, %v370
        %vm3081 = vcmp.le.f32.partialorder %v3080, 0.7853982
        %vm3082 = vcmp.lt.s32.totalorder %v370, 0
        %v3083 = vand.u32 %v370, 2139095040
        %v3084 = vshrl.u32 %v3083, 23
        %v3085 = vsub.s32 %v3084, 127
        %v3086 = vand.u32 2147483647, %v370
        %v3087 = vand.u32 %v3086, 8388607
        %v3088 = vor.u32 %v3087, 8388608
        %v3089 = vsub.s32 0, %v3088
        %v3090 = vadd.s32 %v3085, 1
        %vm3091 = vcmp.gt.s32.totalorder %v3090, 0
        %v3092 = vsel %vm3091, %v3090, 0
        %v3093 = vshrl.u32 %v3092, 5
        %v3094 = vand.u32 %v3092, 31
        %v3095 = vsub.s32 32, %v3094
        %v3096 = vshrl.u32 683565275, %v3095
        %v3097 = vshll.u32 683565275, %v3094
        %v3098 = vshrl.u32 2475754826, %v3095
        %v3099 = vor.u32 %v3097, %v3098
        %v3100 = vshll.u32 2475754826, %v3094
        %v3101 = vshrl.u32 2131351028, %v3095
        %v3102 = vor.u32 %v3100, %v3101
        %v3103 = vshll.u32 2131351028, %v3094
        %v3104 = vshrl.u32 2102212464, %v3095
        %v3105 = vor.u32 %v3103, %v3104
        %v3106 = vshll.u32 2102212464, %v3094
        %v3107 = vshrl.u32 920167782, %v3095
        %v3108 = vor.u32 %v3106, %v3107
        %v3109 = vshll.u32 920167782, %v3094
        %v3110 = vshrl.u32 1326507024, %v3095
        %v3111 = vor.u32 %v3109, %v3110
        %vm3112 = vcmp.lt.s32.totalorder %v3093, 1
        %vm3113 = vcmp.lt.s32.totalorder %v3093, 2
        %vm3114 = vcmp.lt.s32.totalorder %v3093, 3
        %vm3115 = vcmp.lt.s32.totalorder %v3093, 4
        %v3116 = vsel %vm3112, %v3096, %v3099
        %v3117 = vsel %vm3115, %v3105, 2102212464
        %v3118 = vsel %vm3114, %v3102, %v3117
        %v3119 = vsel %vm3113, %v3116, %v3118
        %v3120 = vsel %vm3112, %v3099, %v3102
        %v3121 = vsel %vm3115, %v3108, 920167782
        %v3122 = vsel %vm3114, %v3105, %v3121
        %v3123 = vsel %vm3113, %v3120, %v3122
        %v3124 = vsel %vm3112, %v3102, %v3105
        %v3125 = vsel %vm3115, %v3111, 1326507024
        %v3126 = vsel %vm3114, %v3108, %v3125
        %v3127 = vsel %vm3113, %v3124, %v3126
        %v3128 = vshll.u32 %v3088, 8
        %v3129 = vmul.u32.u64.compose %v3128, %v3127
        %v3130 = vextract.low.u32 %v3129
        %v3131 = vextract.high.u32 %v3129
        %v3132 = vmul.u32.u64.compose %v3128, %v3123
        %v3133 = vextract.low.u32 %v3132
        %v3134 = vextract.high.u32 %v3132
        %v3135 = vmul.u32 %v3128, %v3119
        %v3136 = vadd.s32 %v3131, %v3133
        %vm3137 = vc.u32 %v3131, %v3133
        %v3138 = vadd.s32 %v3134, 1
        %v3139 = vsel %vm3137, %v3138, %v3134
        %v3140 = vadd.s32 %v3135, %v3139
        %v3141 = vadd.s32 %v3140, 536870912
        %v3142 = vshrl.u32 %v3141, 30
        %v3143 = vshll.u32 %v3142, 30
        %v3144 = vsub.s32 %v3140, %v3143
        %vm3145 = vcmp.lt.s32.totalorder %v3144, 0
        %v3146 = vsub.s32 0, %v3144
        %v3147 = vsel %vm3145, %v3146, %v3144
        %v3148 = vclz %v3147
        %v3149 = vsub.s32 %v3148, 2
        %vm3150 = vcmp.gt.s32.totalorder 0, %v3149
        %v3151 = vsel %vm3150, 0, %v3149
        %v3152 = vsub.s32 32, %v3151
        %v3153 = vshll.u32 %v3144, %v3151
        %v3154 = vshrl.u32 %v3136, %v3152
        %v3155 = vor.u32 %v3153, %v3154
        %v3156 = vsub.s32 4294967266, %v3151
        %v3157 = vadd.s32 %v3156, 127
        %v3158 = vshll.u32 %v3157, 23
        %v3159 = vor.u32 4788187, %v3158
        %v3160 = vand.u32 2147483647, %v3159
        %v3162 = vcvt.s32.f32 %v3155
        %v3163 = vmul.f32 %v3162, %v3160
        %v3164 = vxor.u32 %v3163, 2147483648
        %v3165 = vsel %vm3082, %v3164, %v3163
        %v3166 = vsub.s32 4, %v3142
        %v3167 = vsel %vm3082, %v3166, %v3142
        %v3168 = vsel %vm3081, %v370, %v3165
        %v3169 = vsel %vm3081, 0, %v3167
        %v3170 = vcosq.f32.pop %v3168
        %v3171 = vsinq.f32.pop %v3168
        %vm3172 = vweird.f32 %v370
        %v3173 = vadd.s32 %v3169, 3
        %v3174 = vand.u32 %v3173, 3
        %vm3175 = vcmp.lt.s32.totalorder %v3174, 2
        %vm3176 = vcmp.eq.s32.totalorder %v3174, 0
        %v3177 = vxor.u32 %v3171, 2147483648
        %v3178 = vsel %vm3176, %v3170, %v3177
        %vm3179 = vcmp.eq.s32.totalorder %v3174, 2
        %v3180 = vxor.u32 %v3170, 2147483648
        %v3181 = vsel %vm3179, %v3180, %v3171
        %v3182 = vsel %vm3175, %v3178, %v3181
        %v3183 = vsel %vm3172, nan, %v3182
        %v3184 = vand.u32 2147483647, %v371
        %vm3185 = vcmp.le.f32.partialorder %v3184, 0.7853982
        %vm3186 = vcmp.lt.s32.totalorder %v371, 0
        %v3187 = vand.u32 %v371, 2139095040
        %v3188 = vshrl.u32 %v3187, 23
        %v3189 = vsub.s32 %v3188, 127
        %v3190 = vand.u32 2147483647, %v371
        %v3191 = vand.u32 %v3190, 8388607
        %v3192 = vor.u32 %v3191, 8388608
        %v3193 = vsub.s32 0, %v3192
        %v3194 = vadd.s32 %v3189, 1
        %vm3195 = vcmp.gt.s32.totalorder %v3194, 0
        %v3196 = vsel %vm3195, %v3194, 0
        %v3197 = vshrl.u32 %v3196, 5
        %v3198 = vand.u32 %v3196, 31
        %v3199 = vsub.s32 32, %v3198
        %v3200 = vshrl.u32 683565275, %v3199
        %v3201 = vshll.u32 683565275, %v3198
        %v3202 = vshrl.u32 2475754826, %v3199
        %v3203 = vor.u32 %v3201, %v3202
        %v3204 = vshll.u32 2475754826, %v3198
        %v3205 = vshrl.u32 2131351028, %v3199
        %v3206 = vor.u32 %v3204, %v3205
        %v3207 = vshll.u32 2131351028, %v3198
        %v3208 = vshrl.u32 2102212464, %v3199
        %v3209 = vor.u32 %v3207, %v3208
        %v3210 = vshll.u32 2102212464, %v3198
        %v3211 = vshrl.u32 920167782, %v3199
        %v3212 = vor.u32 %v3210, %v3211
        %v3213 = vshll.u32 920167782, %v3198
        %v3214 = vshrl.u32 1326507024, %v3199
        %v3215 = vor.u32 %v3213, %v3214
        %vm3216 = vcmp.lt.s32.totalorder %v3197, 1
        %vm3217 = vcmp.lt.s32.totalorder %v3197, 2
        %vm3218 = vcmp.lt.s32.totalorder %v3197, 3
        %vm3219 = vcmp.lt.s32.totalorder %v3197, 4
        %v3220 = vsel %vm3216, %v3200, %v3203
        %v3221 = vsel %vm3219, %v3209, 2102212464
        %v3222 = vsel %vm3218, %v3206, %v3221
        %v3223 = vsel %vm3217, %v3220, %v3222
        %v3224 = vsel %vm3216, %v3203, %v3206
        %v3225 = vsel %vm3219, %v3212, 920167782
        %v3226 = vsel %vm3218, %v3209, %v3225
        %v3227 = vsel %vm3217, %v3224, %v3226
        %v3228 = vsel %vm3216, %v3206, %v3209
        %v3229 = vsel %vm3219, %v3215, 1326507024
        %v3230 = vsel %vm3218, %v3212, %v3229
        %v3231 = vsel %vm3217, %v3228, %v3230
        %v3232 = vshll.u32 %v3192, 8
        %v3233 = vmul.u32.u64.compose %v3232, %v3231
        %v3234 = vextract.low.u32 %v3233
        %v3235 = vextract.high.u32 %v3233
        %v3236 = vmul.u32.u64.compose %v3232, %v3227
        %v3237 = vextract.low.u32 %v3236
        %v3238 = vextract.high.u32 %v3236
        %v3239 = vmul.u32 %v3232, %v3223
        %v3240 = vadd.s32 %v3235, %v3237
        %vm3241 = vc.u32 %v3235, %v3237
        %v3242 = vadd.s32 %v3238, 1
        %v3243 = vsel %vm3241, %v3242, %v3238
        %v3244 = vadd.s32 %v3239, %v3243
        %v3245 = vadd.s32 %v3244, 536870912
        %v3246 = vshrl.u32 %v3245, 30
        %v3247 = vshll.u32 %v3246, 30
        %v3248 = vsub.s32 %v3244, %v3247
        %vm3249 = vcmp.lt.s32.totalorder %v3248, 0
        %v3250 = vsub.s32 0, %v3248
        %v3251 = vsel %vm3249, %v3250, %v3248
        %v3252 = vclz %v3251
        %v3253 = vsub.s32 %v3252, 2
        %vm3254 = vcmp.gt.s32.totalorder 0, %v3253
        %v3255 = vsel %vm3254, 0, %v3253
        %v3256 = vsub.s32 32, %v3255
        %v3257 = vshll.u32 %v3248, %v3255
        %v3258 = vshrl.u32 %v3240, %v3256
        %v3259 = vor.u32 %v3257, %v3258
        %v3260 = vsub.s32 4294967266, %v3255
        %v3261 = vadd.s32 %v3260, 127
        %v3262 = vshll.u32 %v3261, 23
        %v3263 = vor.u32 4788187, %v3262
        %v3264 = vand.u32 2147483647, %v3263
        %v3266 = vcvt.s32.f32 %v3259
        %v3267 = vmul.f32 %v3266, %v3264
        %v3268 = vxor.u32 %v3267, 2147483648
        %v3269 = vsel %vm3186, %v3268, %v3267
        %v3270 = vsub.s32 4, %v3246
        %v3271 = vsel %vm3186, %v3270, %v3246
        %v3272 = vsel %vm3185, %v371, %v3269
        %v3273 = vsel %vm3185, 0, %v3271
        %v3274 = vcosq.f32.pop %v3272
        %v3275 = vsinq.f32.pop %v3272
        %vm3276 = vweird.f32 %v371
        %v3277 = vadd.s32 %v3273, 3
        %v3278 = vand.u32 %v3277, 3
        %vm3279 = vcmp.lt.s32.totalorder %v3278, 2
        %vm3280 = vcmp.eq.s32.totalorder %v3278, 0
        %v3281 = vxor.u32 %v3275, 2147483648
        %v3282 = vsel %vm3280, %v3274, %v3281
        %vm3283 = vcmp.eq.s32.totalorder %v3278, 2
        %v3284 = vxor.u32 %v3274, 2147483648
        %v3285 = vsel %vm3283, %v3284, %v3275
        %v3286 = vsel %vm3279, %v3282, %v3285
        %v3287 = vsel %vm3276, nan, %v3286
        %v3288 = vand.u32 2147483647, %v372
        %vm3289 = vcmp.le.f32.partialorder %v3288, 0.7853982
        %vm3290 = vcmp.lt.s32.totalorder %v372, 0
        %v3291 = vand.u32 %v372, 2139095040
        %v3292 = vshrl.u32 %v3291, 23
        %v3293 = vsub.s32 %v3292, 127
        %v3294 = vand.u32 2147483647, %v372
        %v3295 = vand.u32 %v3294, 8388607
        %v3296 = vor.u32 %v3295, 8388608
        %v3297 = vsub.s32 0, %v3296
        %v3298 = vadd.s32 %v3293, 1
        %vm3299 = vcmp.gt.s32.totalorder %v3298, 0
        %v3300 = vsel %vm3299, %v3298, 0
        %v3301 = vshrl.u32 %v3300, 5
        %v3302 = vand.u32 %v3300, 31
        %v3303 = vsub.s32 32, %v3302
        %v3304 = vshrl.u32 683565275, %v3303
        %v3305 = vshll.u32 683565275, %v3302
        %v3306 = vshrl.u32 2475754826, %v3303
        %v3307 = vor.u32 %v3305, %v3306
        %v3308 = vshll.u32 2475754826, %v3302
        %v3309 = vshrl.u32 2131351028, %v3303
        %v3310 = vor.u32 %v3308, %v3309
        %v3311 = vshll.u32 2131351028, %v3302
        %v3312 = vshrl.u32 2102212464, %v3303
        %v3313 = vor.u32 %v3311, %v3312
        %v3314 = vshll.u32 2102212464, %v3302
        %v3315 = vshrl.u32 920167782, %v3303
        %v3316 = vor.u32 %v3314, %v3315
        %v3317 = vshll.u32 920167782, %v3302
        %v3318 = vshrl.u32 1326507024, %v3303
        %v3319 = vor.u32 %v3317, %v3318
        %vm3320 = vcmp.lt.s32.totalorder %v3301, 1
        %vm3321 = vcmp.lt.s32.totalorder %v3301, 2
        %vm3322 = vcmp.lt.s32.totalorder %v3301, 3
        %vm3323 = vcmp.lt.s32.totalorder %v3301, 4
        %v3324 = vsel %vm3320, %v3304, %v3307
        %v3325 = vsel %vm3323, %v3313, 2102212464
        %v3326 = vsel %vm3322, %v3310, %v3325
        %v3327 = vsel %vm3321, %v3324, %v3326
        %v3328 = vsel %vm3320, %v3307, %v3310
        %v3329 = vsel %vm3323, %v3316, 920167782
        %v3330 = vsel %vm3322, %v3313, %v3329
        %v3331 = vsel %vm3321, %v3328, %v3330
        %v3332 = vsel %vm3320, %v3310, %v3313
        %v3333 = vsel %vm3323, %v3319, 1326507024
        %v3334 = vsel %vm3322, %v3316, %v3333
        %v3335 = vsel %vm3321, %v3332, %v3334
        %v3336 = vshll.u32 %v3296, 8
        %v3337 = vmul.u32.u64.compose %v3336, %v3335
        %v3338 = vextract.low.u32 %v3337
        %v3339 = vextract.high.u32 %v3337
        %v3340 = vmul.u32.u64.compose %v3336, %v3331
        %v3341 = vextract.low.u32 %v3340
        %v3342 = vextract.high.u32 %v3340
        %v3343 = vmul.u32 %v3336, %v3327
        %v3344 = vadd.s32 %v3339, %v3341
        %vm3345 = vc.u32 %v3339, %v3341
        %v3346 = vadd.s32 %v3342, 1
        %v3347 = vsel %vm3345, %v3346, %v3342
        %v3348 = vadd.s32 %v3343, %v3347
        %v3349 = vadd.s32 %v3348, 536870912
        %v3350 = vshrl.u32 %v3349, 30
        %v3351 = vshll.u32 %v3350, 30
        %v3352 = vsub.s32 %v3348, %v3351
        %vm3353 = vcmp.lt.s32.totalorder %v3352, 0
        %v3354 = vsub.s32 0, %v3352
        %v3355 = vsel %vm3353, %v3354, %v3352
        %v3356 = vclz %v3355
        %v3357 = vsub.s32 %v3356, 2
        %vm3358 = vcmp.gt.s32.totalorder 0, %v3357
        %v3359 = vsel %vm3358, 0, %v3357
        %v3360 = vsub.s32 32, %v3359
        %v3361 = vshll.u32 %v3352, %v3359
        %v3362 = vshrl.u32 %v3344, %v3360
        %v3363 = vor.u32 %v3361, %v3362
        %v3364 = vsub.s32 4294967266, %v3359
        %v3365 = vadd.s32 %v3364, 127
        %v3366 = vshll.u32 %v3365, 23
        %v3367 = vor.u32 4788187, %v3366
        %v3368 = vand.u32 2147483647, %v3367
        %v3370 = vcvt.s32.f32 %v3363
        %v3371 = vmul.f32 %v3370, %v3368
        %v3372 = vxor.u32 %v3371, 2147483648
        %v3373 = vsel %vm3290, %v3372, %v3371
        %v3374 = vsub.s32 4, %v3350
        %v3375 = vsel %vm3290, %v3374, %v3350
        %v3376 = vsel %vm3289, %v372, %v3373
        %v3377 = vsel %vm3289, 0, %v3375
        %v3378 = vcosq.f32.pop %v3376
        %v3379 = vsinq.f32.pop %v3376
        %vm3380 = vweird.f32 %v372
        %v3381 = vadd.s32 %v3377, 3
        %v3382 = vand.u32 %v3381, 3
        %vm3383 = vcmp.lt.s32.totalorder %v3382, 2
        %vm3384 = vcmp.eq.s32.totalorder %v3382, 0
        %v3385 = vxor.u32 %v3379, 2147483648
        %v3386 = vsel %vm3384, %v3378, %v3385
        %vm3387 = vcmp.eq.s32.totalorder %v3382, 2
        %v3388 = vxor.u32 %v3378, 2147483648
        %v3389 = vsel %vm3387, %v3388, %v3379
        %v3390 = vsel %vm3383, %v3386, %v3389
        %v3391 = vsel %vm3380, nan, %v3390
        %v3392 = vand.u32 2147483647, %v373
        %vm3393 = vcmp.le.f32.partialorder %v3392, 0.7853982
        %vm3394 = vcmp.lt.s32.totalorder %v373, 0
        %v3395 = vand.u32 %v373, 2139095040
        %v3396 = vshrl.u32 %v3395, 23
        %v3397 = vsub.s32 %v3396, 127
        %v3398 = vand.u32 2147483647, %v373
        %v3399 = vand.u32 %v3398, 8388607
        %v3400 = vor.u32 %v3399, 8388608
        %v3401 = vsub.s32 0, %v3400
        %v3402 = vadd.s32 %v3397, 1
        %vm3403 = vcmp.gt.s32.totalorder %v3402, 0
        %v3404 = vsel %vm3403, %v3402, 0
        %v3405 = vshrl.u32 %v3404, 5
        %v3406 = vand.u32 %v3404, 31
        %v3407 = vsub.s32 32, %v3406
        %v3408 = vshrl.u32 683565275, %v3407
        %v3409 = vshll.u32 683565275, %v3406
        %v3410 = vshrl.u32 2475754826, %v3407
        %v3411 = vor.u32 %v3409, %v3410
        %v3412 = vshll.u32 2475754826, %v3406
        %v3413 = vshrl.u32 2131351028, %v3407
        %v3414 = vor.u32 %v3412, %v3413
        %v3415 = vshll.u32 2131351028, %v3406
        %v3416 = vshrl.u32 2102212464, %v3407
        %v3417 = vor.u32 %v3415, %v3416
        %v3418 = vshll.u32 2102212464, %v3406
        %v3419 = vshrl.u32 920167782, %v3407
        %v3420 = vor.u32 %v3418, %v3419
        %v3421 = vshll.u32 920167782, %v3406
        %v3422 = vshrl.u32 1326507024, %v3407
        %v3423 = vor.u32 %v3421, %v3422
        %vm3424 = vcmp.lt.s32.totalorder %v3405, 1
        %vm3425 = vcmp.lt.s32.totalorder %v3405, 2
        %vm3426 = vcmp.lt.s32.totalorder %v3405, 3
        %vm3427 = vcmp.lt.s32.totalorder %v3405, 4
        %v3428 = vsel %vm3424, %v3408, %v3411
        %v3429 = vsel %vm3427, %v3417, 2102212464
        %v3430 = vsel %vm3426, %v3414, %v3429
        %v3431 = vsel %vm3425, %v3428, %v3430
        %v3432 = vsel %vm3424, %v3411, %v3414
        %v3433 = vsel %vm3427, %v3420, 920167782
        %v3434 = vsel %vm3426, %v3417, %v3433
        %v3435 = vsel %vm3425, %v3432, %v3434
        %v3436 = vsel %vm3424, %v3414, %v3417
        %v3437 = vsel %vm3427, %v3423, 1326507024
        %v3438 = vsel %vm3426, %v3420, %v3437
        %v3439 = vsel %vm3425, %v3436, %v3438
        %v3440 = vshll.u32 %v3400, 8
        %v3441 = vmul.u32.u64.compose %v3440, %v3439
        %v3442 = vextract.low.u32 %v3441
        %v3443 = vextract.high.u32 %v3441
        %v3444 = vmul.u32.u64.compose %v3440, %v3435
        %v3445 = vextract.low.u32 %v3444
        %v3446 = vextract.high.u32 %v3444
        %v3447 = vmul.u32 %v3440, %v3431
        %v3448 = vadd.s32 %v3443, %v3445
        %vm3449 = vc.u32 %v3443, %v3445
        %v3450 = vadd.s32 %v3446, 1
        %v3451 = vsel %vm3449, %v3450, %v3446
        %v3452 = vadd.s32 %v3447, %v3451
        %v3453 = vadd.s32 %v3452, 536870912
        %v3454 = vshrl.u32 %v3453, 30
        %v3455 = vshll.u32 %v3454, 30
        %v3456 = vsub.s32 %v3452, %v3455
        %vm3457 = vcmp.lt.s32.totalorder %v3456, 0
        %v3458 = vsub.s32 0, %v3456
        %v3459 = vsel %vm3457, %v3458, %v3456
        %v3460 = vclz %v3459
        %v3461 = vsub.s32 %v3460, 2
        %vm3462 = vcmp.gt.s32.totalorder 0, %v3461
        %v3463 = vsel %vm3462, 0, %v3461
        %v3464 = vsub.s32 32, %v3463
        %v3465 = vshll.u32 %v3456, %v3463
        %v3466 = vshrl.u32 %v3448, %v3464
        %v3467 = vor.u32 %v3465, %v3466
        %v3468 = vsub.s32 4294967266, %v3463
        %v3469 = vadd.s32 %v3468, 127
        %v3470 = vshll.u32 %v3469, 23
        %v3471 = vor.u32 4788187, %v3470
        %v3472 = vand.u32 2147483647, %v3471
        %v3474 = vcvt.s32.f32 %v3467
        %v3475 = vmul.f32 %v3474, %v3472
        %v3476 = vxor.u32 %v3475, 2147483648
        %v3477 = vsel %vm3394, %v3476, %v3475
        %v3478 = vsub.s32 4, %v3454
        %v3479 = vsel %vm3394, %v3478, %v3454
        %v3480 = vsel %vm3393, %v373, %v3477
        %v3481 = vsel %vm3393, 0, %v3479
        %v3482 = vcosq.f32.pop %v3480
        %v3483 = vsinq.f32.pop %v3480
        %vm3484 = vweird.f32 %v373
        %v3485 = vadd.s32 %v3481, 3
        %v3486 = vand.u32 %v3485, 3
        %vm3487 = vcmp.lt.s32.totalorder %v3486, 2
        %vm3488 = vcmp.eq.s32.totalorder %v3486, 0
        %v3489 = vxor.u32 %v3483, 2147483648
        %v3490 = vsel %vm3488, %v3482, %v3489
        %vm3491 = vcmp.eq.s32.totalorder %v3486, 2
        %v3492 = vxor.u32 %v3482, 2147483648
        %v3493 = vsel %vm3491, %v3492, %v3483
        %v3494 = vsel %vm3487, %v3490, %v3493
        %v3495 = vsel %vm3484, nan, %v3494
        %v3496 = vand.u32 2147483647, %v374
        %vm3497 = vcmp.le.f32.partialorder %v3496, 0.7853982
        %vm3498 = vcmp.lt.s32.totalorder %v374, 0
        %v3499 = vand.u32 %v374, 2139095040
        %v3500 = vshrl.u32 %v3499, 23
        %v3501 = vsub.s32 %v3500, 127
        %v3502 = vand.u32 2147483647, %v374
        %v3503 = vand.u32 %v3502, 8388607
        %v3504 = vor.u32 %v3503, 8388608
        %v3505 = vsub.s32 0, %v3504
        %v3506 = vadd.s32 %v3501, 1
        %vm3507 = vcmp.gt.s32.totalorder %v3506, 0
        %v3508 = vsel %vm3507, %v3506, 0
        %v3509 = vshrl.u32 %v3508, 5
        %v3510 = vand.u32 %v3508, 31
        %v3511 = vsub.s32 32, %v3510
        %v3512 = vshrl.u32 683565275, %v3511
        %v3513 = vshll.u32 683565275, %v3510
        %v3514 = vshrl.u32 2475754826, %v3511
        %v3515 = vor.u32 %v3513, %v3514
        %v3516 = vshll.u32 2475754826, %v3510
        %v3517 = vshrl.u32 2131351028, %v3511
        %v3518 = vor.u32 %v3516, %v3517
        %v3519 = vshll.u32 2131351028, %v3510
        %v3520 = vshrl.u32 2102212464, %v3511
        %v3521 = vor.u32 %v3519, %v3520
        %v3522 = vshll.u32 2102212464, %v3510
        %v3523 = vshrl.u32 920167782, %v3511
        %v3524 = vor.u32 %v3522, %v3523
        %v3525 = vshll.u32 920167782, %v3510
        %v3526 = vshrl.u32 1326507024, %v3511
        %v3527 = vor.u32 %v3525, %v3526
        %vm3528 = vcmp.lt.s32.totalorder %v3509, 1
        %vm3529 = vcmp.lt.s32.totalorder %v3509, 2
        %vm3530 = vcmp.lt.s32.totalorder %v3509, 3
        %vm3531 = vcmp.lt.s32.totalorder %v3509, 4
        %v3532 = vsel %vm3528, %v3512, %v3515
        %v3533 = vsel %vm3531, %v3521, 2102212464
        %v3534 = vsel %vm3530, %v3518, %v3533
        %v3535 = vsel %vm3529, %v3532, %v3534
        %v3536 = vsel %vm3528, %v3515, %v3518
        %v3537 = vsel %vm3531, %v3524, 920167782
        %v3538 = vsel %vm3530, %v3521, %v3537
        %v3539 = vsel %vm3529, %v3536, %v3538
        %v3540 = vsel %vm3528, %v3518, %v3521
        %v3541 = vsel %vm3531, %v3527, 1326507024
        %v3542 = vsel %vm3530, %v3524, %v3541
        %v3543 = vsel %vm3529, %v3540, %v3542
        %v3544 = vshll.u32 %v3504, 8
        %v3545 = vmul.u32.u64.compose %v3544, %v3543
        %v3546 = vextract.low.u32 %v3545
        %v3547 = vextract.high.u32 %v3545
        %v3548 = vmul.u32.u64.compose %v3544, %v3539
        %v3549 = vextract.low.u32 %v3548
        %v3550 = vextract.high.u32 %v3548
        %v3551 = vmul.u32 %v3544, %v3535
        %v3552 = vadd.s32 %v3547, %v3549
        %vm3553 = vc.u32 %v3547, %v3549
        %v3554 = vadd.s32 %v3550, 1
        %v3555 = vsel %vm3553, %v3554, %v3550
        %v3556 = vadd.s32 %v3551, %v3555
        %v3557 = vadd.s32 %v3556, 536870912
        %v3558 = vshrl.u32 %v3557, 30
        %v3559 = vshll.u32 %v3558, 30
        %v3560 = vsub.s32 %v3556, %v3559
        %vm3561 = vcmp.lt.s32.totalorder %v3560, 0
        %v3562 = vsub.s32 0, %v3560
        %v3563 = vsel %vm3561, %v3562, %v3560
        %v3564 = vclz %v3563
        %v3565 = vsub.s32 %v3564, 2
        %vm3566 = vcmp.gt.s32.totalorder 0, %v3565
        %v3567 = vsel %vm3566, 0, %v3565
        %v3568 = vsub.s32 32, %v3567
        %v3569 = vshll.u32 %v3560, %v3567
        %v3570 = vshrl.u32 %v3552, %v3568
        %v3571 = vor.u32 %v3569, %v3570
        %v3572 = vsub.s32 4294967266, %v3567
        %v3573 = vadd.s32 %v3572, 127
        %v3574 = vshll.u32 %v3573, 23
        %v3575 = vor.u32 4788187, %v3574
        %v3576 = vand.u32 2147483647, %v3575
        %v3578 = vcvt.s32.f32 %v3571
        %v3579 = vmul.f32 %v3578, %v3576
        %v3580 = vxor.u32 %v3579, 2147483648
        %v3581 = vsel %vm3498, %v3580, %v3579
        %v3582 = vsub.s32 4, %v3558
        %v3583 = vsel %vm3498, %v3582, %v3558
        %v3584 = vsel %vm3497, %v374, %v3581
        %v3585 = vsel %vm3497, 0, %v3583
        %v3586 = vcosq.f32.pop %v3584
        %v3587 = vsinq.f32.pop %v3584
        %vm3588 = vweird.f32 %v374
        %v3589 = vadd.s32 %v3585, 3
        %v3590 = vand.u32 %v3589, 3
        %vm3591 = vcmp.lt.s32.totalorder %v3590, 2
        %vm3592 = vcmp.eq.s32.totalorder %v3590, 0
        %v3593 = vxor.u32 %v3587, 2147483648
        %v3594 = vsel %vm3592, %v3586, %v3593
        %vm3595 = vcmp.eq.s32.totalorder %v3590, 2
        %v3596 = vxor.u32 %v3586, 2147483648
        %v3597 = vsel %vm3595, %v3596, %v3587
        %v3598 = vsel %vm3591, %v3594, %v3597
        %v3599 = vsel %vm3588, nan, %v3598
        %v3600 = vand.u32 2147483647, %v375
        %vm3601 = vcmp.le.f32.partialorder %v3600, 0.7853982
        %vm3602 = vcmp.lt.s32.totalorder %v375, 0
        %v3603 = vand.u32 %v375, 2139095040
        %v3604 = vshrl.u32 %v3603, 23
        %v3605 = vsub.s32 %v3604, 127
        %v3606 = vand.u32 2147483647, %v375
        %v3607 = vand.u32 %v3606, 8388607
        %v3608 = vor.u32 %v3607, 8388608
        %v3609 = vsub.s32 0, %v3608
        %v3610 = vadd.s32 %v3605, 1
        %vm3611 = vcmp.gt.s32.totalorder %v3610, 0
        %v3612 = vsel %vm3611, %v3610, 0
        %v3613 = vshrl.u32 %v3612, 5
        %v3614 = vand.u32 %v3612, 31
        %v3615 = vsub.s32 32, %v3614
        %v3616 = vshrl.u32 683565275, %v3615
        %v3617 = vshll.u32 683565275, %v3614
        %v3618 = vshrl.u32 2475754826, %v3615
        %v3619 = vor.u32 %v3617, %v3618
        %v3620 = vshll.u32 2475754826, %v3614
        %v3621 = vshrl.u32 2131351028, %v3615
        %v3622 = vor.u32 %v3620, %v3621
        %v3623 = vshll.u32 2131351028, %v3614
        %v3624 = vshrl.u32 2102212464, %v3615
        %v3625 = vor.u32 %v3623, %v3624
        %v3626 = vshll.u32 2102212464, %v3614
        %v3627 = vshrl.u32 920167782, %v3615
        %v3628 = vor.u32 %v3626, %v3627
        %v3629 = vshll.u32 920167782, %v3614
        %v3630 = vshrl.u32 1326507024, %v3615
        %v3631 = vor.u32 %v3629, %v3630
        %vm3632 = vcmp.lt.s32.totalorder %v3613, 1
        %vm3633 = vcmp.lt.s32.totalorder %v3613, 2
        %vm3634 = vcmp.lt.s32.totalorder %v3613, 3
        %vm3635 = vcmp.lt.s32.totalorder %v3613, 4
        %v3636 = vsel %vm3632, %v3616, %v3619
        %v3637 = vsel %vm3635, %v3625, 2102212464
        %v3638 = vsel %vm3634, %v3622, %v3637
        %v3639 = vsel %vm3633, %v3636, %v3638
        %v3640 = vsel %vm3632, %v3619, %v3622
        %v3641 = vsel %vm3635, %v3628, 920167782
        %v3642 = vsel %vm3634, %v3625, %v3641
        %v3643 = vsel %vm3633, %v3640, %v3642
        %v3644 = vsel %vm3632, %v3622, %v3625
        %v3645 = vsel %vm3635, %v3631, 1326507024
        %v3646 = vsel %vm3634, %v3628, %v3645
        %v3647 = vsel %vm3633, %v3644, %v3646
        %v3648 = vshll.u32 %v3608, 8
        %v3649 = vmul.u32.u64.compose %v3648, %v3647
        %v3650 = vextract.low.u32 %v3649
        %v3651 = vextract.high.u32 %v3649
        %v3652 = vmul.u32.u64.compose %v3648, %v3643
        %v3653 = vextract.low.u32 %v3652
        %v3654 = vextract.high.u32 %v3652
        %v3655 = vmul.u32 %v3648, %v3639
        %v3656 = vadd.s32 %v3651, %v3653
        %vm3657 = vc.u32 %v3651, %v3653
        %v3658 = vadd.s32 %v3654, 1
        %v3659 = vsel %vm3657, %v3658, %v3654
        %v3660 = vadd.s32 %v3655, %v3659
        %v3661 = vadd.s32 %v3660, 536870912
        %v3662 = vshrl.u32 %v3661, 30
        %v3663 = vshll.u32 %v3662, 30
        %v3664 = vsub.s32 %v3660, %v3663
        %vm3665 = vcmp.lt.s32.totalorder %v3664, 0
        %v3666 = vsub.s32 0, %v3664
        %v3667 = vsel %vm3665, %v3666, %v3664
        %v3668 = vclz %v3667
        %v3669 = vsub.s32 %v3668, 2
        %vm3670 = vcmp.gt.s32.totalorder 0, %v3669
        %v3671 = vsel %vm3670, 0, %v3669
        %v3672 = vsub.s32 32, %v3671
        %v3673 = vshll.u32 %v3664, %v3671
        %v3674 = vshrl.u32 %v3656, %v3672
        %v3675 = vor.u32 %v3673, %v3674
        %v3676 = vsub.s32 4294967266, %v3671
        %v3677 = vadd.s32 %v3676, 127
        %v3678 = vshll.u32 %v3677, 23
        %v3679 = vor.u32 4788187, %v3678
        %v3680 = vand.u32 2147483647, %v3679
        %v3682 = vcvt.s32.f32 %v3675
        %v3683 = vmul.f32 %v3682, %v3680
        %v3684 = vxor.u32 %v3683, 2147483648
        %v3685 = vsel %vm3602, %v3684, %v3683
        %v3686 = vsub.s32 4, %v3662
        %v3687 = vsel %vm3602, %v3686, %v3662
        %v3688 = vsel %vm3601, %v375, %v3685
        %v3689 = vsel %vm3601, 0, %v3687
        %v3690 = vcosq.f32.pop %v3688
        %v3691 = vsinq.f32.pop %v3688
        %vm3692 = vweird.f32 %v375
        %v3693 = vadd.s32 %v3689, 3
        %v3694 = vand.u32 %v3693, 3
        %vm3695 = vcmp.lt.s32.totalorder %v3694, 2
        %vm3696 = vcmp.eq.s32.totalorder %v3694, 0
        %v3697 = vxor.u32 %v3691, 2147483648
        %v3698 = vsel %vm3696, %v3690, %v3697
        %vm3699 = vcmp.eq.s32.totalorder %v3694, 2
        %v3700 = vxor.u32 %v3690, 2147483648
        %v3701 = vsel %vm3699, %v3700, %v3691
        %v3702 = vsel %vm3695, %v3698, %v3701
        %v3703 = vsel %vm3692, nan, %v3702
        %3704 = vst [vmem:[%s137 + $0x8] sm:$0xff] %v2143
        %3705 = vst [vmem:[%s137 + $0x18] sm:$0xff] %v2247
        %3706 = vst [vmem:[%s137 + $0x28] sm:$0xff] %v2351
        %3707 = vst [vmem:[%s137 + $0x38] sm:$0xff] %v2455
        %3708 = vst [vmem:[%s137 + $0x48] sm:$0xff] %v2559
        %3709 = vst [vmem:[%s137 + $0x58] sm:$0xff] %v2663
        %3710 = vst [vmem:[%s137 + $0x68] sm:$0xff] %v2767
        %3711 = vst [vmem:[%s137 + $0x78] sm:$0xff] %v2871
        %3712 = vst [vmem:[%s137 + $0x88] sm:$0xff] %v2975
        %3713 = vst [vmem:[%s137 + $0x98] sm:$0xff] %v3079
        %3714 = vst [vmem:[%s137 + $0xa8] sm:$0xff] %v3183
        %3715 = vst [vmem:[%s137 + $0xb8] sm:$0xff] %v3287
        %3716 = vst [vmem:[%s137 + $0xc8] sm:$0xff] %v3391
        %3717 = vst [vmem:[%s137 + $0xd8] sm:$0xff] %v3495
        %3718 = vst [vmem:[%s137 + $0xe8] sm:$0xff] %v3599
        %3719 = vst [vmem:[%s137 + $0xf8] sm:$0xff] %v3703
        %s3720 = sand.u32 %s71, 1
        %s3721 = scalar_lea.sflag [#allocation3], %s3720
        %s3722 = sand.u32 %s71, 1
        %s3723 = smul.addr %s3722, 256
        %s3724 = scalar_lea.vmem [#allocation2], %s3723
        // Predicated region
        $region29: #{tpu_custom_call.1} parent=27 // pred_check
          %p3725 = pneg %p81
        $region30: #{tpu_custom_call.1} parent=27 // pred_check_branch
          %3727 = sbr.rel (%p3725) target = $region32
        $region31: #{tpu_custom_call.1} parent=27 // pred_region
          %s3728 = smul.u32 16, %s16
          %s3730 = ssub.s32 4096, 4096
          %3731 = vsyncadd %s3721, %s3730
          %s3732 = smul.addr %s3728, 2
          %s3733 = smul.addr %s3732, 128
          %s3734 = scalar_lea.hbm %s2, %s3733
          %s3735 = sshll.u32 %s3724, 4
          %s3736 = int_to_ptr.vmem [resolvable:$true] %s3735
          %3741 = dma.vmem_to_hbm [thread:$0]  %s3736, 4096, %s3734, %s3721, 256, 256, 16
        $region32: #{tpu_custom_call.1} parent=27 // pred_fallthru
          _
      $region28: #{tpu_custom_call.1} parent=5 // pred_fallthru
        _
      %p3742 = scmp.le.s32.totalorder 2, %s11
      // Predicated region
      $region33: #{tpu_custom_call.1} parent=5 // pred_check
        %p3743 = pneg %p3742
      $region34: #{tpu_custom_call.1} parent=5 // pred_check_branch
        %3745 = sbr.rel (%p3743) target = $region36
      $region35: #{tpu_custom_call.1} parent=5 // pred_region
        %s3746 = ssub.s32 %s11, 2
        // Predicated region
        $region37: #{tpu_custom_call.1} parent=35 // pred_check
          %p3747 = pneg %p87
        $region38: #{tpu_custom_call.1} parent=35 // pred_check_branch
          %3749 = sbr.rel (%p3747) target = $region40
        $region39: #{tpu_custom_call.1} parent=35 // pred_region
          %s3750 = sand.u32 %s72, 1
          %s3751 = scalar_lea.sflag [#allocation3], %s3750
          %s3752 = sand.u32 %s72, 1
          %s3753 = smul.addr %s3752, 256
          %s3754 = scalar_lea.vmem [#allocation2], %s3753
          %3755 = dma.done %s3751, 4096
        $region40: #{tpu_custom_call.1} parent=35 // pred_fallthru
          _
      $region36: #{tpu_custom_call.1} parent=5 // pred_fallthru
        _
    $region6: #{tpu_custom_call.1} parent=1 // loop_footer
      %s15 = sadd.s32 1, %s11
    $region7: #{tpu_custom_call.1} parent=1 // loop_footer_branch
      %10 = sbr.rel target = $region3
    $region8: #{tpu_custom_call.1} parent=1 // loop_exit
      _
    %3756 = vsyncpa [#allocation3], 1
    %s3757 = scalar_lea.sflag [#allocation3], 1
    %3758 = vsyncpa %s3757, 1

</llo_original>
